<compile_context>
chip_gen: v5e
topology: v5e:2x2
jax: 0.10.0
libtpu: 0.0.40
codegen_flags: <defaults>
</compile_context>

<pallas_src>
import functools

import jax
import jax.numpy as jnp
from jax.experimental import pallas as pl
from jax.experimental.pallas import tpu as pltpu

BN_EPS = 1e-5


def _round_up(x, m):
    return ((x + m - 1) // m) * m


@functools.lru_cache(maxsize=None)
def _vmem_limit():
    """Scoped-VMEM budget derived from the actual TPU generation."""
    try:
        cap = pltpu.get_tpu_info().vmem_capacity_bytes
    except Exception:  # query unavailable -> conservative (v7x-safe) fallback
        cap = 64 * 1024 * 1024
    return int(min(cap * 3 // 4, 100 * 1024 * 1024))


def _compiler_params(semantics):
    return pltpu.CompilerParams(dimension_semantics=semantics,
                                vmem_limit_bytes=_vmem_limit())


# ----------------------------- Pallas kernels ------------------------------

def _conv_bn_stats_kernel(ph_ref, w_ref, y_ref, stats_ref, *, taps, ho, wo):
    """One image x one cout tile: conv as len(taps) accumulated shifted-slab
    matmuls (f32 accumulation), bf16 output, fused BN partial statistics."""
    cin = w_ref.shape[1]
    acc = None
    for t, (r, c) in enumerate(taps):
        a = ph_ref[0, r:r + ho, c:c + wo, :]              # (ho, wo, cin) f32
        a = a.reshape(ho * wo, cin).astype(jnp.bfloat16)
        d = jnp.dot(a, w_ref[t], preferred_element_type=jnp.float32)
        acc = d if acc is None else acc + d
    y_ref[0] = acc.astype(y_ref.dtype)                    # bf16 conv output
    col_sum = jnp.sum(acc, axis=0, keepdims=True)         # (1, TN)
    col_sq = jnp.sum(acc * acc, axis=0, keepdims=True)    # (1, TN)
    stats_ref[0] = jnp.concatenate(
        [col_sum, col_sq, jnp.zeros((6, col_sum.shape[-1]), jnp.float32)],
        axis=0)


def _bn_act_kernel(y_ref, s_ref, b_ref, o_ref, *, relu):
    out = y_ref[...].astype(jnp.float32) * s_ref[...] + b_ref[...]
    if relu:
        out = jnp.maximum(out, 0.0)
    o_ref[...] = out.astype(o_ref.dtype)


def _bn_add_relu_proj_kernel(y_ref, s_ref, b_ref, sc_ref, ss_ref, sb_ref,
                             o_ref):
    out = y_ref[...].astype(jnp.float32) * s_ref[...] + b_ref[...]
    sc = sc_ref[...].astype(jnp.float32) * ss_ref[...] + sb_ref[...]
    o_ref[...] = jnp.maximum(out + sc, 0.0).astype(o_ref.dtype)


def _bn_add_relu_id_kernel(y_ref, s_ref, b_ref, sc_ref, o_ref):
    out = y_ref[...].astype(jnp.float32) * s_ref[...] + b_ref[...]
    o_ref[...] = jnp.maximum(out + sc_ref[...].astype(jnp.float32),
                             0.0).astype(o_ref.dtype)


# ----------------------------- pallas_call glue -----------------------------

def _pick_tn(c_pad):
    if c_pad <= 1024:
        return c_pad
    for tn in (1024, 512, 256, 128):
        if c_pad % tn == 0:
            return tn
    return 128


def _conv_bn_stats(ph, wf, taps, ho, wo):
    """ph: (N, R, Wq, Cin) f32 padded/phased slabs; wf: (T, Cin, C_pad) bf16
    folded weights.  Returns (y (N, ho*wo, C_pad) bf16, mean, var)."""
    n, r, wq, cin = ph.shape
    nt, _, c_pad = wf.shape
    tn = _pick_tn(c_pad)
    # cout tiles on the slow axis -> the weight block stays VMEM-resident
    # while the batch axis varies; both axes are "parallel" (megacore split).
    grid = (c_pad // tn, n)
    y, stats = pl.pallas_call(
        functools.partial(_conv_bn_stats_kernel, taps=taps, ho=ho, wo=wo),
        out_shape=(jax.ShapeDtypeStruct((n, ho * wo, c_pad), jnp.bfloat16),
                   jax.ShapeDtypeStruct((n, 8, c_pad), jnp.float32)),
        grid=grid,
        in_specs=[pl.BlockSpec((1, r, wq, cin), lambda j, i: (i, 0, 0, 0)),
                  pl.BlockSpec((nt, cin, tn), lambda j, i: (0, 0, j))],
        out_specs=(pl.BlockSpec((1, ho * wo, tn), lambda j, i: (i, 0, j)),
                   pl.BlockSpec((1, 8, tn), lambda j, i: (i, 0, j))),
        compiler_params=_compiler_params(("parallel", "parallel")),
    )(ph, wf)
    m = n * ho * wo
    mean = jnp.sum(stats[:, 0, :], axis=0) / m
    var = jnp.maximum(jnp.sum(stats[:, 1, :], axis=0) / m - mean * mean, 0.0)
    return y, mean, var


def _ew_call(kernel, args, kinds, out_dtype):
    """Elementwise pass over (N, M, C) tensors with per-image full-channel
    (lane-dense) blocks; 'b' = (N,M,C) operand, 'v' = (1,C) broadcast vector."""
    n, m, c = args[0].shape
    big = pl.BlockSpec((1, m, c), lambda i: (i, 0, 0))
    vec = pl.BlockSpec((1, c), lambda i: (0, 0))
    return pl.pallas_call(
        kernel,
        out_shape=jax.ShapeDtypeStruct((n, m, c), out_dtype),
        grid=(n,),
        in_specs=[big if k == "b" else vec for k in kinds],
        out_specs=big,
        compiler_params=_compiler_params(("parallel",)),
    )(*args)


def _bn_act(y, scale, shift, *, relu, out_dtype):
    return _ew_call(functools.partial(_bn_act_kernel, relu=relu),
                    (y, scale, shift), "bvv", out_dtype)


def _bn_add_relu_proj(y, scale, shift, sc, sc_scale, sc_shift, out_dtype):
    return _ew_call(_bn_add_relu_proj_kernel,
                    (y, scale, shift, sc, sc_scale, sc_shift), "bvvbvv",
                    out_dtype)


def _bn_add_relu_id(y, scale, shift, sc, out_dtype):
    return _ew_call(_bn_add_relu_id_kernel, (y, scale, shift, sc), "bvvb",
                    out_dtype)


# ------------------------------ JAX-side glue -------------------------------

def _make_phases(x, ksize, stride):
    """Spatially pad (pad = ksize//2) and, for stride > 1, space-to-depth
    decompose x so every conv tap reads a contiguous (Ho, Wo) slab.

    Returns (ph (N, R, Wq, C) f32, taps tuple[(row_off, col_off)], Ho, Wo)
    with taps ordered (dy major, dx minor) to match the folded weights.
    """
    _, h, w, _ = x.shape
    p = ksize // 2
    ho = (h + 2 * p - ksize) // stride + 1
    wo = (w + 2 * p - ksize) // stride + 1
    if ksize == 1:
        return x[:, ::stride, ::stride, :], ((0, 0),), ho, wo
    xp = jnp.pad(x, ((0, 0), (p, p), (p, p), (0, 0)))
    if stride == 1:
        taps = tuple((dy, dx) for dy in range(ksize) for dx in range(ksize))
        return xp, taps, ho, wo
    s = stride
    hp, wp = _round_up(h + 2 * p, s), _round_up(w + 2 * p, s)
    xp = jnp.pad(xp, ((0, 0), (0, hp - (h + 2 * p)),
                      (0, wp - (w + 2 * p)), (0, 0)))
    hq = hp // s
    ph = jnp.concatenate(
        [xp[:, py::s, px::s, :] for py in range(s) for px in range(s)], axis=1)
    taps = tuple(((((dy % s) * s + (dx % s)) * hq + dy // s), dx // s)
                 for dy in range(ksize) for dx in range(ksize))
    return ph, taps, ho, wo


def _fold_conv_w(w, cin_pad, cout_pad):
    """(Cout, Cin, kh, kw) OIHW -> (kh*kw, cin_pad, cout_pad) bf16,
    tap order (dy, dx) matching _make_phases."""
    cout, cin, kh, kw = w.shape
    wt = jnp.transpose(w, (2, 3, 1, 0)).reshape(kh * kw, cin, cout)
    wt = jnp.pad(wt, ((0, 0), (0, cin_pad - cin), (0, cout_pad - cout)))
    return wt.astype(jnp.bfloat16)


def _bn_scale_shift(gamma, beta, mean, var, c_pad):
    g = jnp.pad(gamma.astype(jnp.float32), (0, c_pad - gamma.shape[0]))
    b = jnp.pad(beta.astype(jnp.float32), (0, c_pad - beta.shape[0]))
    inv = jax.lax.rsqrt(var + BN_EPS)
    scale = g * inv
    shift = b - mean * scale
    return scale.reshape(1, c_pad), shift.reshape(1, c_pad)


def basic_block_forward(x_nchw, params, *, stride):
    # TODO(synk): for multi-block networks keep activations NHWC/bf16 between
    # blocks instead of converting NCHW <-> NHWC at every block boundary.
    x = jnp.transpose(x_nchw, (0, 2, 3, 1)).astype(jnp.float32)   # NCHW->NHWC
    n, h, w, cin = x.shape
    cout = params["w1"].shape[0]
    cin8 = _round_up(cin, 8)
    cout8 = _round_up(cout, 8)
    c_pad = _round_up(cout, 128)

    x8 = jnp.pad(x, ((0, 0), (0, 0), (0, 0), (0, cin8 - cin)))

    # ---- conv1 (3x3, stride) -> bn1 (batch stats) -> relu -------------------
    ph1, taps1, ho, wo = _make_phases(x8, 3, stride)
    w1 = _fold_conv_w(params["w1"], cin8, c_pad)
    y1, mean1, var1 = _conv_bn_stats(ph1, w1, taps1, ho, wo)
    s1, b1 = _bn_scale_shift(params["g1"], params["b1"], mean1, var1, c_pad)
    out1 = _bn_act(y1, s1, b1, relu=True, out_dtype=jnp.bfloat16)

    # ---- conv2 (3x3, stride 1) -> bn2 (fused into the final pass) -----------
    out1_img = out1.reshape(n, ho, wo, c_pad)[..., :cout8].astype(jnp.float32)
    ph2, taps2, _, _ = _make_phases(out1_img, 3, 1)
    w2 = _fold_conv_w(params["w2"], cout8, c_pad)
    y2, mean2, var2 = _conv_bn_stats(ph2, w2, taps2, ho, wo)
    s2, b2 = _bn_scale_shift(params["g2"], params["b2"], mean2, var2, c_pad)

    # ---- shortcut: 1x1 projection conv + BN (fused) or identity -------------
    if stride != 1 or cin != cout:
        phs, tapss, _, _ = _make_phases(x8, 1, stride)
        ws = _fold_conv_w(params["ws"], cin8, c_pad)
        ysc, means, varss = _conv_bn_stats(phs, ws, tapss, ho, wo)
        ss, sb = _bn_scale_shift(params["gs"], params["bs"], means, varss,
                                 c_pad)
        out = _bn_add_relu_proj(y2, s2, b2, ysc, ss, sb, jnp.float32)
    else:
        sc = jnp.pad(x, ((0, 0), (0, 0), (0, 0), (0, c_pad - cin)))
        sc = sc.reshape(n, h * w, c_pad).astype(jnp.bfloat16)
        out = _bn_add_relu_id(y2, s2, b2, sc, jnp.float32)

    out = out[:, :, :cout].reshape(n, ho, wo, cout)
    return jnp.transpose(out, (0, 3, 1, 2))                       # NHWC->NCHW


# ------------------------ pure-JAX reference (check) -------------------------

def ref_block(x, params, stride):
    def conv(x_, w, s, pad):
        return jax.lax.conv_general_dilated(
            x_, w, (s, s), ((pad, pad), (pad, pad)),
            dimension_numbers=("NCHW", "OIHW", "NCHW"))

    def bn(y, g, b):
        mean = y.mean(axis=(0, 2, 3), keepdims=True)
        var = ((y - mean) ** 2).mean(axis=(0, 2, 3), keepdims=True)
        return ((y - mean) * jax.lax.rsqrt(var + BN_EPS)
                * g.reshape(1, -1, 1, 1) + b.reshape(1, -1, 1, 1))

    out = jax.nn.relu(bn(conv(x, params["w1"], stride, 1),
                         params["g1"], params["b1"]))
    out = bn(conv(out, params["w2"], 1, 1), params["g2"], params["b2"])
    cin, cout = x.shape[1], params["w1"].shape[0]
    if stride != 1 or cin != cout:
        sc = bn(conv(x, params["ws"], stride, 0), params["gs"], params["bs"])
    else:
        sc = x
    return jax.nn.relu(out + sc)


# --------------------------------- params -----------------------------------

def init_params(key, cin, cout, stride):
    ks = jax.random.split(key, 9)
    params = {
        "w1": 0.1 * jax.random.normal(ks[0], (cout, cin, 3, 3), jnp.float32),
        "g1": 1.0 + 0.1 * jax.random.normal(ks[1], (cout,), jnp.float32),
        "b1": 0.1 * jax.random.normal(ks[2], (cout,), jnp.float32),
        "w2": 0.1 * jax.random.normal(ks[3], (cout, cout, 3, 3), jnp.float32),
        "g2": 1.0 + 0.1 * jax.random.normal(ks[4], (cout,), jnp.float32),
        "b2": 0.1 * jax.random.normal(ks[5], (cout,), jnp.float32),
    }
    if stride != 1 or cin != cout:
        params["ws"] = 0.1 * jax.random.normal(ks[6], (cout, cin, 1, 1),
                                               jnp.float32)
        params["gs"] = 1.0 + 0.05 * jax.random.normal(ks[7], (cout,),
                                                      jnp.float32)
        params["bs"] = 0.05 * jax.random.normal(ks[8], (cout,), jnp.float32)
    return params


if __name__ == "__main__":
    key = jax.random.PRNGKey(0)
    kx, kp1, kp2 = jax.random.split(key, 3)

    fwd = jax.jit(basic_block_forward, static_argnames=("stride",))

    # bf16 MXU operands / bf16 intermediates -> compare against the f32
    # reference with a bf16-level tolerance (intentional, see header).
    TOL = 5e-2

    x = jax.random.normal(kx, (2, 4, 16, 16), jnp.float32)

    # Case 1: projection shortcut (stride=2, 4 -> 8 channels).
    params1 = init_params(kp1, cin=4, cout=8, stride=2)
    out1 = jax.block_until_ready(fwd(x, params1, stride=2))
    ref1 = ref_block(x, params1, 2)
    assert out1.shape == (2, 8, 8, 8), out1.shape
    assert jnp.allclose(out1, ref1, atol=TOL, rtol=TOL), (
        "stride-2 mismatch, max abs err "
        f"{float(jnp.max(jnp.abs(out1 - ref1)))}")

    # Case 2: identity shortcut (stride=1, same channels).
    params2 = init_params(kp2, cin=4, cout=4, stride=1)
    out2 = jax.block_until_ready(fwd(x, params2, stride=1))
    ref2 = ref_block(x, params2, 1)
    assert out2.shape == (2, 4, 16, 16), out2.shape
    assert jnp.allclose(out2, ref2, atol=TOL, rtol=TOL), (
        "stride-1 mismatch, max abs err "
        f"{float(jnp.max(jnp.abs(out2 - ref2)))}")

    print("KERNEL_OK")
</pallas_src>

<mosaic_0001>
module attributes {stable_mosaic.version = 11 : i64} {
  func.func @_conv_bn_stats_kernel(%arg0: i32, %arg1: i32, %arg2: memref<1x8x8x8xf32, #tpu.memory_space<vmem>>, %arg3: memref<1x8x128xbf16, #tpu.memory_space<vmem>>, %arg4: memref<1x64x128xbf16, #tpu.memory_space<vmem>>, %arg5: memref<1x8x128xf32, #tpu.memory_space<vmem>>) attributes {dimension_semantics = [#tpu.dimension_semantics<parallel>, #tpu.dimension_semantics<parallel>], iteration_bounds = array<i64: 1, 2>, scalar_prefetch = 0 : i64, scratch_operands = 0 : i64, tpu.core_type = #tpu.core_type<tc>, window_params = [{transform_indices = @transform_0, window_bounds = array<i64: 1, 8, 8, 8>}, {transform_indices = @transform_1, window_bounds = array<i64: 1, 8, 128>}, {transform_indices = @transform_2, window_bounds = array<i64: 1, 64, 128>}, {transform_indices = @transform_3, window_bounds = array<i64: 1, 8, 128>}]} {
    %c0 = arith.constant 0 : index
    %c0_0 = arith.constant 0 : index
    %c0_1 = arith.constant 0 : index
    %c0_2 = arith.constant 0 : index
    %0 = vector.load %arg2[%c0, %c0_0, %c0_1, %c0_2] : memref<1x8x8x8xf32, #tpu.memory_space<vmem>>, vector<1x8x8x8xf32>
    %1 = vector.shape_cast %0 : vector<1x8x8x8xf32> to vector<8x8x8xf32>
    %2 = vector.shape_cast %1 : vector<8x8x8xf32> to vector<64x8xf32>
    %3 = arith.truncf %2 : vector<64x8xf32> to vector<64x8xbf16>
    %c0_3 = arith.constant 0 : index
    %c0_4 = arith.constant 0 : index
    %c0_5 = arith.constant 0 : index
    %4 = vector.load %arg3[%c0_3, %c0_4, %c0_5] : memref<1x8x128xbf16, #tpu.memory_space<vmem>>, vector<1x8x128xbf16>
    %5 = vector.shape_cast %4 : vector<1x8x128xbf16> to vector<8x128xbf16>
    %cst = arith.constant dense<0.000000e+00> : vector<64x128xf32>
    %6 = tpu.matmul %3, %5, %cst {dimension_numbers = #tpu.dot_dimension_numbers<[1], [0], [0], [1], [0, 0, 1, 1], [], []>} : vector<64x8xbf16>, vector<8x128xbf16>, vector<64x128xf32> -> vector<64x128xf32>
    %7 = arith.truncf %6 : vector<64x128xf32> to vector<64x128xbf16>
    %c0_6 = arith.constant 0 : index
    %c0_7 = arith.constant 0 : index
    %c0_8 = arith.constant 0 : index
    %8 = vector.load %arg4[%c0_6, %c0_7, %c0_8] : memref<1x64x128xbf16, #tpu.memory_space<vmem>>, vector<1x64x128xbf16>
    %9 = vector.shape_cast %8 : vector<1x64x128xbf16> to vector<64x128xbf16>
    %10 = vector.shape_cast %7 : vector<64x128xbf16> to vector<1x64x128xbf16>
    tpu.vector_store %arg4[%c0_6, %c0_7, %c0_8], %10 {strides = array<i32>} : memref<1x64x128xbf16, #tpu.memory_space<vmem>>, vector<1x64x128xbf16>,
    %cst_9 = arith.constant dense<0.000000e+00> : vector<128xf32>
    %11 = vector.multi_reduction <add>, %6, %cst_9 [0] : vector<64x128xf32> to vector<128xf32>
    %12 = vector.shape_cast %11 : vector<128xf32> to vector<1x128xf32>
    %13 = arith.mulf %6, %6 : vector<64x128xf32>
    %cst_10 = arith.constant dense<0.000000e+00> : vector<128xf32>
    %14 = vector.multi_reduction <add>, %13, %cst_10 [0] : vector<64x128xf32> to vector<128xf32>
    %15 = vector.shape_cast %14 : vector<128xf32> to vector<1x128xf32>
    %cst_11 = arith.constant 0.000000e+00 : f32
    %16 = vector.broadcast %cst_11 : f32 to vector<6x128xf32>
    %17 = tpu.concatenate %12, %15, %16 in 0 : vector<1x128xf32>, vector<1x128xf32>, vector<6x128xf32> -> vector<8x128xf32>
    %c0_12 = arith.constant 0 : index
    %c0_13 = arith.constant 0 : index
    %c0_14 = arith.constant 0 : index
    %18 = vector.load %arg5[%c0_12, %c0_13, %c0_14] : memref<1x8x128xf32, #tpu.memory_space<vmem>>, vector<1x8x128xf32>
    %19 = vector.shape_cast %18 : vector<1x8x128xf32> to vector<8x128xf32>
    %20 = vector.shape_cast %17 : vector<8x128xf32> to vector<1x8x128xf32>
    tpu.vector_store %arg5[%c0_12, %c0_13, %c0_14], %20 {strides = array<i32>} : memref<1x8x128xf32, #tpu.memory_space<vmem>>, vector<1x8x128xf32>,
    return
  }
  func.func @transform_0(%arg0: i32, %arg1: i32) -> (i32, i32, i32, i32) {
    %c0_i32 = arith.constant 0 : i32
    %c0_i32_0 = arith.constant 0 : i32
    %c0_i32_1 = arith.constant 0 : i32
    %c0_i32_2 = arith.constant 0 : i32
    return %arg1, %c0_i32, %c0_i32_0, %c0_i32_1 : i32, i32, i32, i32
  }
  func.func @transform_1(%arg0: i32, %arg1: i32) -> (i32, i32, i32) {
    %c0_i32 = arith.constant 0 : i32
    %c0_i32_0 = arith.constant 0 : i32
    %c0_i32_1 = arith.constant 0 : i32
    return %c0_i32, %c0_i32_0, %arg0 : i32, i32, i32
  }
  func.func @transform_2(%arg0: i32, %arg1: i32) -> (i32, i32, i32) {
    %c0_i32 = arith.constant 0 : i32
    %c0_i32_0 = arith.constant 0 : i32
    return %arg1, %c0_i32, %arg0 : i32, i32, i32
  }
  func.func @transform_3(%arg0: i32, %arg1: i32) -> (i32, i32, i32) {
    %c0_i32 = arith.constant 0 : i32
    %c0_i32_0 = arith.constant 0 : i32
    return %arg1, %c0_i32, %arg0 : i32, i32, i32
  }
}

module attributes {stable_mosaic.version = 11 : i64} {
  func.func @_conv_bn_stats_kernel(%arg0: i32, %arg1: i32, %arg2: memref<1x36x9x8xf32, #tpu.memory_space<vmem>>, %arg3: memref<9x8x128xbf16, #tpu.memory_space<vmem>>, %arg4: memref<1x64x128xbf16, #tpu.memory_space<vmem>>, %arg5: memref<1x8x128xf32, #tpu.memory_space<vmem>>) attributes {dimension_semantics = [#tpu.dimension_semantics<parallel>, #tpu.dimension_semantics<parallel>], iteration_bounds = array<i64: 1, 2>, scalar_prefetch = 0 : i64, scratch_operands = 0 : i64, tpu.core_type = #tpu.core_type<tc>, window_params = [{transform_indices = @transform_0, window_bounds = array<i64: 1, 36, 9, 8>}, {transform_indices = @transform_1, window_bounds = array<i64: 9, 8, 128>}, {transform_indices = @transform_2, window_bounds = array<i64: 1, 64, 128>}, {transform_indices = @transform_3, window_bounds = array<i64: 1, 8, 128>}]} {
    %c0 = arith.constant 0 : index
    %c0_0 = arith.constant 0 : index
    %c0_1 = arith.constant 0 : index
    %c0_2 = arith.constant 0 : index
    %0 = vector.load %arg2[%c0, %c0_0, %c0_1, %c0_2] : memref<1x36x9x8xf32, #tpu.memory_space<vmem>>, vector<1x8x8x8xf32>
    %1 = vector.shape_cast %0 : vector<1x8x8x8xf32> to vector<8x8x8xf32>
    %2 = vector.shape_cast %1 : vector<8x8x8xf32> to vector<64x8xf32>
    %3 = arith.truncf %2 : vector<64x8xf32> to vector<64x8xbf16>
    %c0_3 = arith.constant 0 : index
    %c0_4 = arith.constant 0 : index
    %c0_5 = arith.constant 0 : index
    %4 = vector.load %arg3[%c0_3, %c0_4, %c0_5] : memref<9x8x128xbf16, #tpu.memory_space<vmem>>, vector<1x8x128xbf16>
    %5 = vector.shape_cast %4 : vector<1x8x128xbf16> to vector<8x128xbf16>
    %cst = arith.constant dense<0.000000e+00> : vector<64x128xf32>
    %6 = tpu.matmul %3, %5, %cst {dimension_numbers = #tpu.dot_dimension_numbers<[1], [0], [0], [1], [0, 0, 1, 1], [], []>} : vector<64x8xbf16>, vector<8x128xbf16>, vector<64x128xf32> -> vector<64x128xf32>
    %c0_6 = arith.constant 0 : index
    %c9 = arith.constant 9 : index
    %c0_7 = arith.constant 0 : index
    %c0_8 = arith.constant 0 : index
    %7 = vector.load %arg2[%c0_6, %c9, %c0_7, %c0_8] : memref<1x36x9x8xf32, #tpu.memory_space<vmem>>, vector<1x8x8x8xf32>
    %8 = vector.shape_cast %7 : vector<1x8x8x8xf32> to vector<8x8x8xf32>
    %9 = vector.shape_cast %8 : vector<8x8x8xf32> to vector<64x8xf32>
    %10 = arith.truncf %9 : vector<64x8xf32> to vector<64x8xbf16>
    %c1 = arith.constant 1 : index
    %c0_9 = arith.constant 0 : index
    %c0_10 = arith.constant 0 : index
    %11 = vector.load %arg3[%c1, %c0_9, %c0_10] : memref<9x8x128xbf16, #tpu.memory_space<vmem>>, vector<1x8x128xbf16>
    %12 = vector.shape_cast %11 : vector<1x8x128xbf16> to vector<8x128xbf16>
    %cst_11 = arith.constant dense<0.000000e+00> : vector<64x128xf32>
    %13 = tpu.matmul %10, %12, %cst_11 {dimension_numbers = #tpu.dot_dimension_numbers<[1], [0], [0], [1], [0, 0, 1, 1], [], []>} : vector<64x8xbf16>, vector<8x128xbf16>, vector<64x128xf32> -> vector<64x128xf32>
    %14 = arith.addf %6, %13 : vector<64x128xf32>
    %c0_12 = arith.constant 0 : index
    %c0_13 = arith.constant 0 : index
    %c1_14 = arith.constant 1 : index
    %c0_15 = arith.constant 0 : index
    %15 = vector.load %arg2[%c0_12, %c0_13, %c1_14, %c0_15] : memref<1x36x9x8xf32, #tpu.memory_space<vmem>>, vector<1x8x8x8xf32>
    %16 = vector.shape_cast %15 : vector<1x8x8x8xf32> to vector<8x8x8xf32>
    %17 = vector.shape_cast %16 : vector<8x8x8xf32> to vector<64x8xf32>
    %18 = arith.truncf %17 : vector<64x8xf32> to vector<64x8xbf16>
    %c2 = arith.constant 2 : index
    %c0_16 = arith.constant 0 : index
    %c0_17 = arith.constant 0 : index
    %19 = vector.load %arg3[%c2, %c0_16, %c0_17] : memref<9x8x128xbf16, #tpu.memory_space<vmem>>, vector<1x8x128xbf16>
    %20 = vector.shape_cast %19 : vector<1x8x128xbf16> to vector<8x128xbf16>
    %cst_18 = arith.constant dense<0.000000e+00> : vector<64x128xf32>
    %21 = tpu.matmul %18, %20, %cst_18 {dimension_numbers = #tpu.dot_dimension_numbers<[1], [0], [0], [1], [0, 0, 1, 1], [], []>} : vector<64x8xbf16>, vector<8x128xbf16>, vector<64x128xf32> -> vector<64x128xf32>
    %22 = arith.addf %14, %21 : vector<64x128xf32>
    %c0_19 = arith.constant 0 : index
    %c18 = arith.constant 18 : index
    %c0_20 = arith.constant 0 : index
    %c0_21 = arith.constant 0 : index
    %23 = vector.load %arg2[%c0_19, %c18, %c0_20, %c0_21] : memref<1x36x9x8xf32, #tpu.memory_space<vmem>>, vector<1x8x8x8xf32>
    %24 = vector.shape_cast %23 : vector<1x8x8x8xf32> to vector<8x8x8xf32>
    %25 = vector.shape_cast %24 : vector<8x8x8xf32> to vector<64x8xf32>
    %26 = arith.truncf %25 : vector<64x8xf32> to vector<64x8xbf16>
    %c3 = arith.constant 3 : index
    %c0_22 = arith.constant 0 : index
    %c0_23 = arith.constant 0 : index
    %27 = vector.load %arg3[%c3, %c0_22, %c0_23] : memref<9x8x128xbf16, #tpu.memory_space<vmem>>, vector<1x8x128xbf16>
    %28 = vector.shape_cast %27 : vector<1x8x128xbf16> to vector<8x128xbf16>
    %cst_24 = arith.constant dense<0.000000e+00> : vector<64x128xf32>
    %29 = tpu.matmul %26, %28, %cst_24 {dimension_numbers = #tpu.dot_dimension_numbers<[1], [0], [0], [1], [0, 0, 1, 1], [], []>} : vector<64x8xbf16>, vector<8x128xbf16>, vector<64x128xf32> -> vector<64x128xf32>
    %30 = arith.addf %22, %29 : vector<64x128xf32>
    %c0_25 = arith.constant 0 : index
    %c27 = arith.constant 27 : index
    %c0_26 = arith.constant 0 : index
    %c0_27 = arith.constant 0 : index
    %31 = vector.load %arg2[%c0_25, %c27, %c0_26, %c0_27] : memref<1x36x9x8xf32, #tpu.memory_space<vmem>>, vector<1x8x8x8xf32>
    %32 = vector.shape_cast %31 : vector<1x8x8x8xf32> to vector<8x8x8xf32>
    %33 = vector.shape_cast %32 : vector<8x8x8xf32> to vector<64x8xf32>
    %34 = arith.truncf %33 : vector<64x8xf32> to vector<64x8xbf16>
    %c4 = arith.constant 4 : index
    %c0_28 = arith.constant 0 : index
    %c0_29 = arith.constant 0 : index
    %35 = vector.load %arg3[%c4, %c0_28, %c0_29] : memref<9x8x128xbf16, #tpu.memory_space<vmem>>, vector<1x8x128xbf16>
    %36 = vector.shape_cast %35 : vector<1x8x128xbf16> to vector<8x128xbf16>
    %cst_30 = arith.constant dense<0.000000e+00> : vector<64x128xf32>
    %37 = tpu.matmul %34, %36, %cst_30 {dimension_numbers = #tpu.dot_dimension_numbers<[1], [0], [0], [1], [0, 0, 1, 1], [], []>} : vector<64x8xbf16>, vector<8x128xbf16>, vector<64x128xf32> -> vector<64x128xf32>
    %38 = arith.addf %30, %37 : vector<64x128xf32>
    %c0_31 = arith.constant 0 : index
    %c18_32 = arith.constant 18 : index
    %c1_33 = arith.constant 1 : index
    %c0_34 = arith.constant 0 : index
    %39 = vector.load %arg2[%c0_31, %c18_32, %c1_33, %c0_34] : memref<1x36x9x8xf32, #tpu.memory_space<vmem>>, vector<1x8x8x8xf32>
    %40 = vector.shape_cast %39 : vector<1x8x8x8xf32> to vector<8x8x8xf32>
    %41 = vector.shape_cast %40 : vector<8x8x8xf32> to vector<64x8xf32>
    %42 = arith.truncf %41 : vector<64x8xf32> to vector<64x8xbf16>
    %c5 = arith.constant 5 : index
    %c0_35 = arith.constant 0 : index
    %c0_36 = arith.constant 0 : index
    %43 = vector.load %arg3[%c5, %c0_35, %c0_36] : memref<9x8x128xbf16, #tpu.memory_space<vmem>>, vector<1x8x128xbf16>
    %44 = vector.shape_cast %43 : vector<1x8x128xbf16> to vector<8x128xbf16>
    %cst_37 = arith.constant dense<0.000000e+00> : vector<64x128xf32>
    %45 = tpu.matmul %42, %44, %cst_37 {dimension_numbers = #tpu.dot_dimension_numbers<[1], [0], [0], [1], [0, 0, 1, 1], [], []>} : vector<64x8xbf16>, vector<8x128xbf16>, vector<64x128xf32> -> vector<64x128xf32>
    %46 = arith.addf %38, %45 : vector<64x128xf32>
    %c0_38 = arith.constant 0 : index
    %c1_39 = arith.constant 1 : index
    %c0_40 = arith.constant 0 : index
    %c0_41 = arith.constant 0 : index
    %47 = vector.load %arg2[%c0_38, %c1_39, %c0_40, %c0_41] : memref<1x36x9x8xf32, #tpu.memory_space<vmem>>, vector<1x8x8x8xf32>
    %48 = vector.shape_cast %47 : vector<1x8x8x8xf32> to vector<8x8x8xf32>
    %49 = vector.shape_cast %48 : vector<8x8x8xf32> to vector<64x8xf32>
    %50 = arith.truncf %49 : vector<64x8xf32> to vector<64x8xbf16>
    %c6 = arith.constant 6 : index
    %c0_42 = arith.constant 0 : index
    %c0_43 = arith.constant 0 : index
    %51 = vector.load %arg3[%c6, %c0_42, %c0_43] : memref<9x8x128xbf16, #tpu.memory_space<vmem>>, vector<1x8x128xbf16>
    %52 = vector.shape_cast %51 : vector<1x8x128xbf16> to vector<8x128xbf16>
    %cst_44 = arith.constant dense<0.000000e+00> : vector<64x128xf32>
    %53 = tpu.matmul %50, %52, %cst_44 {dimension_numbers = #tpu.dot_dimension_numbers<[1], [0], [0], [1], [0, 0, 1, 1], [], []>} : vector<64x8xbf16>, vector<8x128xbf16>, vector<64x128xf32> -> vector<64x128xf32>
    %54 = arith.addf %46, %53 : vector<64x128xf32>
    %c0_45 = arith.constant 0 : index
    %c10 = arith.constant 10 : index
    %c0_46 = arith.constant 0 : index
    %c0_47 = arith.constant 0 : index
    %55 = vector.load %arg2[%c0_45, %c10, %c0_46, %c0_47] : memref<1x36x9x8xf32, #tpu.memory_space<vmem>>, vector<1x8x8x8xf32>
    %56 = vector.shape_cast %55 : vector<1x8x8x8xf32> to vector<8x8x8xf32>
    %57 = vector.shape_cast %56 : vector<8x8x8xf32> to vector<64x8xf32>
    %58 = arith.truncf %57 : vector<64x8xf32> to vector<64x8xbf16>
    %c7 = arith.constant 7 : index
    %c0_48 = arith.constant 0 : index
    %c0_49 = arith.constant 0 : index
    %59 = vector.load %arg3[%c7, %c0_48, %c0_49] : memref<9x8x128xbf16, #tpu.memory_space<vmem>>, vector<1x8x128xbf16>
    %60 = vector.shape_cast %59 : vector<1x8x128xbf16> to vector<8x128xbf16>
    %cst_50 = arith.constant dense<0.000000e+00> : vector<64x128xf32>
    %61 = tpu.matmul %58, %60, %cst_50 {dimension_numbers = #tpu.dot_dimension_numbers<[1], [0], [0], [1], [0, 0, 1, 1], [], []>} : vector<64x8xbf16>, vector<8x128xbf16>, vector<64x128xf32> -> vector<64x128xf32>
    %62 = arith.addf %54, %61 : vector<64x128xf32>
    %c0_51 = arith.constant 0 : index
    %c1_52 = arith.constant 1 : index
    %c1_53 = arith.constant 1 : index
    %c0_54 = arith.constant 0 : index
    %63 = vector.load %arg2[%c0_51, %c1_52, %c1_53, %c0_54] : memref<1x36x9x8xf32, #tpu.memory_space<vmem>>, vector<1x8x8x8xf32>
    %64 = vector.shape_cast %63 : vector<1x8x8x8xf32> to vector<8x8x8xf32>
    %65 = vector.shape_cast %64 : vector<8x8x8xf32> to vector<64x8xf32>
    %66 = arith.truncf %65 : vector<64x8xf32> to vector<64x8xbf16>
    %c8 = arith.constant 8 : index
    %c0_55 = arith.constant 0 : index
    %c0_56 = arith.constant 0 : index
    %67 = vector.load %arg3[%c8, %c0_55, %c0_56] : memref<9x8x128xbf16, #tpu.memory_space<vmem>>, vector<1x8x128xbf16>
    %68 = vector.shape_cast %67 : vector<1x8x128xbf16> to vector<8x128xbf16>
    %cst_57 = arith.constant dense<0.000000e+00> : vector<64x128xf32>
    %69 = tpu.matmul %66, %68, %cst_57 {dimension_numbers = #tpu.dot_dimension_numbers<[1], [0], [0], [1], [0, 0, 1, 1], [], []>} : vector<64x8xbf16>, vector<8x128xbf16>, vector<64x128xf32> -> vector<64x128xf32>
    %70 = arith.addf %62, %69 : vector<64x128xf32>
    %71 = arith.truncf %70 : vector<64x128xf32> to vector<64x128xbf16>
    %c0_58 = arith.constant 0 : index
    %c0_59 = arith.constant 0 : index
    %c0_60 = arith.constant 0 : index
    %72 = vector.load %arg4[%c0_58, %c0_59, %c0_60] : memref<1x64x128xbf16, #tpu.memory_space<vmem>>, vector<1x64x128xbf16>
    %73 = vector.shape_cast %72 : vector<1x64x128xbf16> to vector<64x128xbf16>
    %74 = vector.shape_cast %71 : vector<64x128xbf16> to vector<1x64x128xbf16>
    tpu.vector_store %arg4[%c0_58, %c0_59, %c0_60], %74 {strides = array<i32>} : memref<1x64x128xbf16, #tpu.memory_space<vmem>>, vector<1x64x128xbf16>,
    %cst_61 = arith.constant dense<0.000000e+00> : vector<128xf32>
    %75 = vector.multi_reduction <add>, %70, %cst_61 [0] : vector<64x128xf32> to vector<128xf32>
    %76 = vector.shape_cast %75 : vector<128xf32> to vector<1x128xf32>
    %77 = arith.mulf %70, %70 : vector<64x128xf32>
    %cst_62 = arith.constant dense<0.000000e+00> : vector<128xf32>
    %78 = vector.multi_reduction <add>, %77, %cst_62 [0] : vector<64x128xf32> to vector<128xf32>
    %79 = vector.shape_cast %78 : vector<128xf32> to vector<1x128xf32>
    %cst_63 = arith.constant 0.000000e+00 : f32
    %80 = vector.broadcast %cst_63 : f32 to vector<6x128xf32>
    %81 = tpu.concatenate %76, %79, %80 in 0 : vector<1x128xf32>, vector<1x128xf32>, vector<6x128xf32> -> vector<8x128xf32>
    %c0_64 = arith.constant 0 : index
    %c0_65 = arith.constant 0 : index
    %c0_66 = arith.constant 0 : index
    %82 = vector.load %arg5[%c0_64, %c0_65, %c0_66] : memref<1x8x128xf32, #tpu.memory_space<vmem>>, vector<1x8x128xf32>
    %83 = vector.shape_cast %82 : vector<1x8x128xf32> to vector<8x128xf32>
    %84 = vector.shape_cast %81 : vector<8x128xf32> to vector<1x8x128xf32>
    tpu.vector_store %arg5[%c0_64, %c0_65, %c0_66], %84 {strides = array<i32>} : memref<1x8x128xf32, #tpu.memory_space<vmem>>, vector<1x8x128xf32>,
    return
  }
  func.func @transform_0(%arg0: i32, %arg1: i32) -> (i32, i32, i32, i32) {
    %c0_i32 = arith.constant 0 : i32
    %c0_i32_0 = arith.constant 0 : i32
    %c0_i32_1 = arith.constant 0 : i32
    %c0_i32_2 = arith.constant 0 : i32
    return %arg1, %c0_i32, %c0_i32_0, %c0_i32_1 : i32, i32, i32, i32
  }
  func.func @transform_1(%arg0: i32, %arg1: i32) -> (i32, i32, i32) {
    %c0_i32 = arith.constant 0 : i32
    %c0_i32_0 = arith.constant 0 : i32
    %c0_i32_1 = arith.constant 0 : i32
    return %c0_i32, %c0_i32_0, %arg0 : i32, i32, i32
  }
  func.func @transform_2(%arg0: i32, %arg1: i32) -> (i32, i32, i32) {
    %c0_i32 = arith.constant 0 : i32
    %c0_i32_0 = arith.constant 0 : i32
    return %arg1, %c0_i32, %arg0 : i32, i32, i32
  }
  func.func @transform_3(%arg0: i32, %arg1: i32) -> (i32, i32, i32) {
    %c0_i32 = arith.constant 0 : i32
    %c0_i32_0 = arith.constant 0 : i32
    return %arg1, %c0_i32, %arg0 : i32, i32, i32
  }
}

module attributes {stable_mosaic.version = 11 : i64} {
  func.func @_bn_act_kernel(%arg0: i32, %arg1: memref<1x64x128xbf16, #tpu.memory_space<vmem>>, %arg2: memref<1x128xf32, #tpu.memory_space<vmem>>, %arg3: memref<1x128xf32, #tpu.memory_space<vmem>>, %arg4: memref<1x64x128xbf16, #tpu.memory_space<vmem>>) attributes {dimension_semantics = [#tpu.dimension_semantics<parallel>], iteration_bounds = array<i64: 2>, scalar_prefetch = 0 : i64, scratch_operands = 0 : i64, tpu.core_type = #tpu.core_type<tc>, window_params = [{transform_indices = @transform_0, window_bounds = array<i64: 1, 64, 128>}, {pipeline_mode = #tpu.pipeline_mode<synchronous>, transform_indices = @transform_1, window_bounds = array<i64: 1, 128>}, {pipeline_mode = #tpu.pipeline_mode<synchronous>, transform_indices = @transform_2, window_bounds = array<i64: 1, 128>}, {transform_indices = @transform_3, window_bounds = array<i64: 1, 64, 128>}]} {
    %c0 = arith.constant 0 : index
    %c0_0 = arith.constant 0 : index
    %c0_1 = arith.constant 0 : index
    %0 = vector.load %arg1[%c0, %c0_0, %c0_1] : memref<1x64x128xbf16, #tpu.memory_space<vmem>>, vector<1x64x128xbf16>
    %1 = arith.extf %0 : vector<1x64x128xbf16> to vector<1x64x128xf32>
    %c0_2 = arith.constant 0 : index
    %c0_3 = arith.constant 0 : index
    %2 = vector.load %arg2[%c0_2, %c0_3] : memref<1x128xf32, #tpu.memory_space<vmem>>, vector<1x128xf32>
    %3 = vector.shape_cast %2 : vector<1x128xf32> to vector<1x1x128xf32>
    %4 = vector.broadcast %3 : vector<1x1x128xf32> to vector<1x64x128xf32>
    %5 = arith.mulf %1, %4 : vector<1x64x128xf32>
    %c0_4 = arith.constant 0 : index
    %c0_5 = arith.constant 0 : index
    %6 = vector.load %arg3[%c0_4, %c0_5] : memref<1x128xf32, #tpu.memory_space<vmem>>, vector<1x128xf32>
    %7 = vector.shape_cast %6 : vector<1x128xf32> to vector<1x1x128xf32>
    %8 = vector.broadcast %7 : vector<1x1x128xf32> to vector<1x64x128xf32>
    %9 = arith.addf %5, %8 : vector<1x64x128xf32>
    %cst = arith.constant 0.000000e+00 : f32
    %10 = vector.broadcast %cst : f32 to vector<1x64x128xf32>
    %11 = arith.maximumf %9, %10 : vector<1x64x128xf32>
    %12 = arith.truncf %11 : vector<1x64x128xf32> to vector<1x64x128xbf16>
    %c0_6 = arith.constant 0 : index
    %c0_7 = arith.constant 0 : index
    %c0_8 = arith.constant 0 : index
    %13 = vector.load %arg4[%c0_6, %c0_7, %c0_8] : memref<1x64x128xbf16, #tpu.memory_space<vmem>>, vector<1x64x128xbf16>
    tpu.vector_store %arg4[%c0_6, %c0_7, %c0_8], %12 {strides = array<i32>} : memref<1x64x128xbf16, #tpu.memory_space<vmem>>, vector<1x64x128xbf16>,
    return
  }
  func.func @transform_0(%arg0: i32) -> (i32, i32, i32) {
    %c0_i32 = arith.constant 0 : i32
    %c0_i32_0 = arith.constant 0 : i32
    %c0_i32_1 = arith.constant 0 : i32
    return %arg0, %c0_i32, %c0_i32_0 : i32, i32, i32
  }
  func.func @transform_1(%arg0: i32) -> (i32, i32) {
    %c0_i32 = arith.constant 0 : i32
    %c0_i32_0 = arith.constant 0 : i32
    %c0_i32_1 = arith.constant 0 : i32
    return %c0_i32, %c0_i32_0 : i32, i32
  }
  func.func @transform_2(%arg0: i32) -> (i32, i32) {
    %c0_i32 = arith.constant 0 : i32
    %c0_i32_0 = arith.constant 0 : i32
    %c0_i32_1 = arith.constant 0 : i32
    return %c0_i32, %c0_i32_0 : i32, i32
  }
  func.func @transform_3(%arg0: i32) -> (i32, i32, i32) {
    %c0_i32 = arith.constant 0 : i32
    %c0_i32_0 = arith.constant 0 : i32
    %c0_i32_1 = arith.constant 0 : i32
    return %arg0, %c0_i32, %c0_i32_0 : i32, i32, i32
  }
}

module attributes {stable_mosaic.version = 11 : i64} {
  func.func @_conv_bn_stats_kernel(%arg0: i32, %arg1: i32, %arg2: memref<1x10x10x8xf32, #tpu.memory_space<vmem>>, %arg3: memref<9x8x128xbf16, #tpu.memory_space<vmem>>, %arg4: memref<1x64x128xbf16, #tpu.memory_space<vmem>>, %arg5: memref<1x8x128xf32, #tpu.memory_space<vmem>>) attributes {dimension_semantics = [#tpu.dimension_semantics<parallel>, #tpu.dimension_semantics<parallel>], iteration_bounds = array<i64: 1, 2>, scalar_prefetch = 0 : i64, scratch_operands = 0 : i64, tpu.core_type = #tpu.core_type<tc>, window_params = [{transform_indices = @transform_0, window_bounds = array<i64: 1, 10, 10, 8>}, {transform_indices = @transform_1, window_bounds = array<i64: 9, 8, 128>}, {transform_indices = @transform_2, window_bounds = array<i64: 1, 64, 128>}, {transform_indices = @transform_3, window_bounds = array<i64: 1, 8, 128>}]} {
    %c0 = arith.constant 0 : index
    %c0_0 = arith.constant 0 : index
    %c0_1 = arith.constant 0 : index
    %c0_2 = arith.constant 0 : index
    %0 = vector.load %arg2[%c0, %c0_0, %c0_1, %c0_2] : memref<1x10x10x8xf32, #tpu.memory_space<vmem>>, vector<1x8x8x8xf32>
    %1 = vector.shape_cast %0 : vector<1x8x8x8xf32> to vector<8x8x8xf32>
    %2 = vector.shape_cast %1 : vector<8x8x8xf32> to vector<64x8xf32>
    %3 = arith.truncf %2 : vector<64x8xf32> to vector<64x8xbf16>
    %c0_3 = arith.constant 0 : index
    %c0_4 = arith.constant 0 : index
    %c0_5 = arith.constant 0 : index
    %4 = vector.load %arg3[%c0_3, %c0_4, %c0_5] : memref<9x8x128xbf16, #tpu.memory_space<vmem>>, vector<1x8x128xbf16>
    %5 = vector.shape_cast %4 : vector<1x8x128xbf16> to vector<8x128xbf16>
    %cst = arith.constant dense<0.000000e+00> : vector<64x128xf32>
    %6 = tpu.matmul %3, %5, %cst {dimension_numbers = #tpu.dot_dimension_numbers<[1], [0], [0], [1], [0, 0, 1, 1], [], []>} : vector<64x8xbf16>, vector<8x128xbf16>, vector<64x128xf32> -> vector<64x128xf32>
    %c0_6 = arith.constant 0 : index
    %c0_7 = arith.constant 0 : index
    %c1 = arith.constant 1 : index
    %c0_8 = arith.constant 0 : index
    %7 = vector.load %arg2[%c0_6, %c0_7, %c1, %c0_8] : memref<1x10x10x8xf32, #tpu.memory_space<vmem>>, vector<1x8x8x8xf32>
    %8 = vector.shape_cast %7 : vector<1x8x8x8xf32> to vector<8x8x8xf32>
    %9 = vector.shape_cast %8 : vector<8x8x8xf32> to vector<64x8xf32>
    %10 = arith.truncf %9 : vector<64x8xf32> to vector<64x8xbf16>
    %c1_9 = arith.constant 1 : index
    %c0_10 = arith.constant 0 : index
    %c0_11 = arith.constant 0 : index
    %11 = vector.load %arg3[%c1_9, %c0_10, %c0_11] : memref<9x8x128xbf16, #tpu.memory_space<vmem>>, vector<1x8x128xbf16>
    %12 = vector.shape_cast %11 : vector<1x8x128xbf16> to vector<8x128xbf16>
    %cst_12 = arith.constant dense<0.000000e+00> : vector<64x128xf32>
    %13 = tpu.matmul %10, %12, %cst_12 {dimension_numbers = #tpu.dot_dimension_numbers<[1], [0], [0], [1], [0, 0, 1, 1], [], []>} : vector<64x8xbf16>, vector<8x128xbf16>, vector<64x128xf32> -> vector<64x128xf32>
    %14 = arith.addf %6, %13 : vector<64x128xf32>
    %c0_13 = arith.constant 0 : index
    %c0_14 = arith.constant 0 : index
    %c2 = arith.constant 2 : index
    %c0_15 = arith.constant 0 : index
    %15 = vector.load %arg2[%c0_13, %c0_14, %c2, %c0_15] : memref<1x10x10x8xf32, #tpu.memory_space<vmem>>, vector<1x8x8x8xf32>
    %16 = vector.shape_cast %15 : vector<1x8x8x8xf32> to vector<8x8x8xf32>
    %17 = vector.shape_cast %16 : vector<8x8x8xf32> to vector<64x8xf32>
    %18 = arith.truncf %17 : vector<64x8xf32> to vector<64x8xbf16>
    %c2_16 = arith.constant 2 : index
    %c0_17 = arith.constant 0 : index
    %c0_18 = arith.constant 0 : index
    %19 = vector.load %arg3[%c2_16, %c0_17, %c0_18] : memref<9x8x128xbf16, #tpu.memory_space<vmem>>, vector<1x8x128xbf16>
    %20 = vector.shape_cast %19 : vector<1x8x128xbf16> to vector<8x128xbf16>
    %cst_19 = arith.constant dense<0.000000e+00> : vector<64x128xf32>
    %21 = tpu.matmul %18, %20, %cst_19 {dimension_numbers = #tpu.dot_dimension_numbers<[1], [0], [0], [1], [0, 0, 1, 1], [], []>} : vector<64x8xbf16>, vector<8x128xbf16>, vector<64x128xf32> -> vector<64x128xf32>
    %22 = arith.addf %14, %21 : vector<64x128xf32>
    %c0_20 = arith.constant 0 : index
    %c1_21 = arith.constant 1 : index
    %c0_22 = arith.constant 0 : index
    %c0_23 = arith.constant 0 : index
    %23 = vector.load %arg2[%c0_20, %c1_21, %c0_22, %c0_23] : memref<1x10x10x8xf32, #tpu.memory_space<vmem>>, vector<1x8x8x8xf32>
    %24 = vector.shape_cast %23 : vector<1x8x8x8xf32> to vector<8x8x8xf32>
    %25 = vector.shape_cast %24 : vector<8x8x8xf32> to vector<64x8xf32>
    %26 = arith.truncf %25 : vector<64x8xf32> to vector<64x8xbf16>
    %c3 = arith.constant 3 : index
    %c0_24 = arith.constant 0 : index
    %c0_25 = arith.constant 0 : index
    %27 = vector.load %arg3[%c3, %c0_24, %c0_25] : memref<9x8x128xbf16, #tpu.memory_space<vmem>>, vector<1x8x128xbf16>
    %28 = vector.shape_cast %27 : vector<1x8x128xbf16> to vector<8x128xbf16>
    %cst_26 = arith.constant dense<0.000000e+00> : vector<64x128xf32>
    %29 = tpu.matmul %26, %28, %cst_26 {dimension_numbers = #tpu.dot_dimension_numbers<[1], [0], [0], [1], [0, 0, 1, 1], [], []>} : vector<64x8xbf16>, vector<8x128xbf16>, vector<64x128xf32> -> vector<64x128xf32>
    %30 = arith.addf %22, %29 : vector<64x128xf32>
    %c0_27 = arith.constant 0 : index
    %c1_28 = arith.constant 1 : index
    %c1_29 = arith.constant 1 : index
    %c0_30 = arith.constant 0 : index
    %31 = vector.load %arg2[%c0_27, %c1_28, %c1_29, %c0_30] : memref<1x10x10x8xf32, #tpu.memory_space<vmem>>, vector<1x8x8x8xf32>
    %32 = vector.shape_cast %31 : vector<1x8x8x8xf32> to vector<8x8x8xf32>
    %33 = vector.shape_cast %32 : vector<8x8x8xf32> to vector<64x8xf32>
    %34 = arith.truncf %33 : vector<64x8xf32> to vector<64x8xbf16>
    %c4 = arith.constant 4 : index
    %c0_31 = arith.constant 0 : index
    %c0_32 = arith.constant 0 : index
    %35 = vector.load %arg3[%c4, %c0_31, %c0_32] : memref<9x8x128xbf16, #tpu.memory_space<vmem>>, vector<1x8x128xbf16>
    %36 = vector.shape_cast %35 : vector<1x8x128xbf16> to vector<8x128xbf16>
    %cst_33 = arith.constant dense<0.000000e+00> : vector<64x128xf32>
    %37 = tpu.matmul %34, %36, %cst_33 {dimension_numbers = #tpu.dot_dimension_numbers<[1], [0], [0], [1], [0, 0, 1, 1], [], []>} : vector<64x8xbf16>, vector<8x128xbf16>, vector<64x128xf32> -> vector<64x128xf32>
    %38 = arith.addf %30, %37 : vector<64x128xf32>
    %c0_34 = arith.constant 0 : index
    %c1_35 = arith.constant 1 : index
    %c2_36 = arith.constant 2 : index
    %c0_37 = arith.constant 0 : index
    %39 = vector.load %arg2[%c0_34, %c1_35, %c2_36, %c0_37] : memref<1x10x10x8xf32, #tpu.memory_space<vmem>>, vector<1x8x8x8xf32>
    %40 = vector.shape_cast %39 : vector<1x8x8x8xf32> to vector<8x8x8xf32>
    %41 = vector.shape_cast %40 : vector<8x8x8xf32> to vector<64x8xf32>
    %42 = arith.truncf %41 : vector<64x8xf32> to vector<64x8xbf16>
    %c5 = arith.constant 5 : index
    %c0_38 = arith.constant 0 : index
    %c0_39 = arith.constant 0 : index
    %43 = vector.load %arg3[%c5, %c0_38, %c0_39] : memref<9x8x128xbf16, #tpu.memory_space<vmem>>, vector<1x8x128xbf16>
    %44 = vector.shape_cast %43 : vector<1x8x128xbf16> to vector<8x128xbf16>
    %cst_40 = arith.constant dense<0.000000e+00> : vector<64x128xf32>
    %45 = tpu.matmul %42, %44, %cst_40 {dimension_numbers = #tpu.dot_dimension_numbers<[1], [0], [0], [1], [0, 0, 1, 1], [], []>} : vector<64x8xbf16>, vector<8x128xbf16>, vector<64x128xf32> -> vector<64x128xf32>
    %46 = arith.addf %38, %45 : vector<64x128xf32>
    %c0_41 = arith.constant 0 : index
    %c2_42 = arith.constant 2 : index
    %c0_43 = arith.constant 0 : index
    %c0_44 = arith.constant 0 : index
    %47 = vector.load %arg2[%c0_41, %c2_42, %c0_43, %c0_44] : memref<1x10x10x8xf32, #tpu.memory_space<vmem>>, vector<1x8x8x8xf32>
    %48 = vector.shape_cast %47 : vector<1x8x8x8xf32> to vector<8x8x8xf32>
    %49 = vector.shape_cast %48 : vector<8x8x8xf32> to vector<64x8xf32>
    %50 = arith.truncf %49 : vector<64x8xf32> to vector<64x8xbf16>
    %c6 = arith.constant 6 : index
    %c0_45 = arith.constant 0 : index
    %c0_46 = arith.constant 0 : index
    %51 = vector.load %arg3[%c6, %c0_45, %c0_46] : memref<9x8x128xbf16, #tpu.memory_space<vmem>>, vector<1x8x128xbf16>
    %52 = vector.shape_cast %51 : vector<1x8x128xbf16> to vector<8x128xbf16>
    %cst_47 = arith.constant dense<0.000000e+00> : vector<64x128xf32>
    %53 = tpu.matmul %50, %52, %cst_47 {dimension_numbers = #tpu.dot_dimension_numbers<[1], [0], [0], [1], [0, 0, 1, 1], [], []>} : vector<64x8xbf16>, vector<8x128xbf16>, vector<64x128xf32> -> vector<64x128xf32>
    %54 = arith.addf %46, %53 : vector<64x128xf32>
    %c0_48 = arith.constant 0 : index
    %c2_49 = arith.constant 2 : index
    %c1_50 = arith.constant 1 : index
    %c0_51 = arith.constant 0 : index
    %55 = vector.load %arg2[%c0_48, %c2_49, %c1_50, %c0_51] : memref<1x10x10x8xf32, #tpu.memory_space<vmem>>, vector<1x8x8x8xf32>
    %56 = vector.shape_cast %55 : vector<1x8x8x8xf32> to vector<8x8x8xf32>
    %57 = vector.shape_cast %56 : vector<8x8x8xf32> to vector<64x8xf32>
    %58 = arith.truncf %57 : vector<64x8xf32> to vector<64x8xbf16>
    %c7 = arith.constant 7 : index
    %c0_52 = arith.constant 0 : index
    %c0_53 = arith.constant 0 : index
    %59 = vector.load %arg3[%c7, %c0_52, %c0_53] : memref<9x8x128xbf16, #tpu.memory_space<vmem>>, vector<1x8x128xbf16>
    %60 = vector.shape_cast %59 : vector<1x8x128xbf16> to vector<8x128xbf16>
    %cst_54 = arith.constant dense<0.000000e+00> : vector<64x128xf32>
    %61 = tpu.matmul %58, %60, %cst_54 {dimension_numbers = #tpu.dot_dimension_numbers<[1], [0], [0], [1], [0, 0, 1, 1], [], []>} : vector<64x8xbf16>, vector<8x128xbf16>, vector<64x128xf32> -> vector<64x128xf32>
    %62 = arith.addf %54, %61 : vector<64x128xf32>
    %c0_55 = arith.constant 0 : index
    %c2_56 = arith.constant 2 : index
    %c2_57 = arith.constant 2 : index
    %c0_58 = arith.constant 0 : index
    %63 = vector.load %arg2[%c0_55, %c2_56, %c2_57, %c0_58] : memref<1x10x10x8xf32, #tpu.memory_space<vmem>>, vector<1x8x8x8xf32>
    %64 = vector.shape_cast %63 : vector<1x8x8x8xf32> to vector<8x8x8xf32>
    %65 = vector.shape_cast %64 : vector<8x8x8xf32> to vector<64x8xf32>
    %66 = arith.truncf %65 : vector<64x8xf32> to vector<64x8xbf16>
    %c8 = arith.constant 8 : index
    %c0_59 = arith.constant 0 : index
    %c0_60 = arith.constant 0 : index
    %67 = vector.load %arg3[%c8, %c0_59, %c0_60] : memref<9x8x128xbf16, #tpu.memory_space<vmem>>, vector<1x8x128xbf16>
    %68 = vector.shape_cast %67 : vector<1x8x128xbf16> to vector<8x128xbf16>
    %cst_61 = arith.constant dense<0.000000e+00> : vector<64x128xf32>
    %69 = tpu.matmul %66, %68, %cst_61 {dimension_numbers = #tpu.dot_dimension_numbers<[1], [0], [0], [1], [0, 0, 1, 1], [], []>} : vector<64x8xbf16>, vector<8x128xbf16>, vector<64x128xf32> -> vector<64x128xf32>
    %70 = arith.addf %62, %69 : vector<64x128xf32>
    %71 = arith.truncf %70 : vector<64x128xf32> to vector<64x128xbf16>
    %c0_62 = arith.constant 0 : index
    %c0_63 = arith.constant 0 : index
    %c0_64 = arith.constant 0 : index
    %72 = vector.load %arg4[%c0_62, %c0_63, %c0_64] : memref<1x64x128xbf16, #tpu.memory_space<vmem>>, vector<1x64x128xbf16>
    %73 = vector.shape_cast %72 : vector<1x64x128xbf16> to vector<64x128xbf16>
    %74 = vector.shape_cast %71 : vector<64x128xbf16> to vector<1x64x128xbf16>
    tpu.vector_store %arg4[%c0_62, %c0_63, %c0_64], %74 {strides = array<i32>} : memref<1x64x128xbf16, #tpu.memory_space<vmem>>, vector<1x64x128xbf16>,
    %cst_65 = arith.constant dense<0.000000e+00> : vector<128xf32>
    %75 = vector.multi_reduction <add>, %70, %cst_65 [0] : vector<64x128xf32> to vector<128xf32>
    %76 = vector.shape_cast %75 : vector<128xf32> to vector<1x128xf32>
    %77 = arith.mulf %70, %70 : vector<64x128xf32>
    %cst_66 = arith.constant dense<0.000000e+00> : vector<128xf32>
    %78 = vector.multi_reduction <add>, %77, %cst_66 [0] : vector<64x128xf32> to vector<128xf32>
    %79 = vector.shape_cast %78 : vector<128xf32> to vector<1x128xf32>
    %cst_67 = arith.constant 0.000000e+00 : f32
    %80 = vector.broadcast %cst_67 : f32 to vector<6x128xf32>
    %81 = tpu.concatenate %76, %79, %80 in 0 : vector<1x128xf32>, vector<1x128xf32>, vector<6x128xf32> -> vector<8x128xf32>
    %c0_68 = arith.constant 0 : index
    %c0_69 = arith.constant 0 : index
    %c0_70 = arith.constant 0 : index
    %82 = vector.load %arg5[%c0_68, %c0_69, %c0_70] : memref<1x8x128xf32, #tpu.memory_space<vmem>>, vector<1x8x128xf32>
    %83 = vector.shape_cast %82 : vector<1x8x128xf32> to vector<8x128xf32>
    %84 = vector.shape_cast %81 : vector<8x128xf32> to vector<1x8x128xf32>
    tpu.vector_store %arg5[%c0_68, %c0_69, %c0_70], %84 {strides = array<i32>} : memref<1x8x128xf32, #tpu.memory_space<vmem>>, vector<1x8x128xf32>,
    return
  }
  func.func @transform_0(%arg0: i32, %arg1: i32) -> (i32, i32, i32, i32) {
    %c0_i32 = arith.constant 0 : i32
    %c0_i32_0 = arith.constant 0 : i32
    %c0_i32_1 = arith.constant 0 : i32
    %c0_i32_2 = arith.constant 0 : i32
    return %arg1, %c0_i32, %c0_i32_0, %c0_i32_1 : i32, i32, i32, i32
  }
  func.func @transform_1(%arg0: i32, %arg1: i32) -> (i32, i32, i32) {
    %c0_i32 = arith.constant 0 : i32
    %c0_i32_0 = arith.constant 0 : i32
    %c0_i32_1 = arith.constant 0 : i32
    return %c0_i32, %c0_i32_0, %arg0 : i32, i32, i32
  }
  func.func @transform_2(%arg0: i32, %arg1: i32) -> (i32, i32, i32) {
    %c0_i32 = arith.constant 0 : i32
    %c0_i32_0 = arith.constant 0 : i32
    return %arg1, %c0_i32, %arg0 : i32, i32, i32
  }
  func.func @transform_3(%arg0: i32, %arg1: i32) -> (i32, i32, i32) {
    %c0_i32 = arith.constant 0 : i32
    %c0_i32_0 = arith.constant 0 : i32
    return %arg1, %c0_i32, %arg0 : i32, i32, i32
  }
}

module attributes {stable_mosaic.version = 11 : i64} {
  func.func @_bn_add_relu_proj_kernel(%arg0: i32, %arg1: memref<1x64x128xbf16, #tpu.memory_space<vmem>>, %arg2: memref<1x128xf32, #tpu.memory_space<vmem>>, %arg3: memref<1x128xf32, #tpu.memory_space<vmem>>, %arg4: memref<1x64x128xbf16, #tpu.memory_space<vmem>>, %arg5: memref<1x128xf32, #tpu.memory_space<vmem>>, %arg6: memref<1x128xf32, #tpu.memory_space<vmem>>, %arg7: memref<1x64x128xf32, #tpu.memory_space<vmem>>) attributes {dimension_semantics = [#tpu.dimension_semantics<parallel>], iteration_bounds = array<i64: 2>, scalar_prefetch = 0 : i64, scratch_operands = 0 : i64, tpu.core_type = #tpu.core_type<tc>, window_params = [{transform_indices = @transform_0, window_bounds = array<i64: 1, 64, 128>}, {pipeline_mode = #tpu.pipeline_mode<synchronous>, transform_indices = @transform_1, window_bounds = array<i64: 1, 128>}, {pipeline_mode = #tpu.pipeline_mode<synchronous>, transform_indices = @transform_2, window_bounds = array<i64: 1, 128>}, {transform_indices = @transform_3, window_bounds = array<i64: 1, 64, 128>}, {pipeline_mode = #tpu.pipeline_mode<synchronous>, transform_indices = @transform_4, window_bounds = array<i64: 1, 128>}, {pipeline_mode = #tpu.pipeline_mode<synchronous>, transform_indices = @transform_5, window_bounds = array<i64: 1, 128>}, {transform_indices = @transform_6, window_bounds = array<i64: 1, 64, 128>}]} {
    %c0 = arith.constant 0 : index
    %c0_0 = arith.constant 0 : index
    %c0_1 = arith.constant 0 : index
    %0 = vector.load %arg1[%c0, %c0_0, %c0_1] : memref<1x64x128xbf16, #tpu.memory_space<vmem>>, vector<1x64x128xbf16>
    %1 = arith.extf %0 : vector<1x64x128xbf16> to vector<1x64x128xf32>
    %c0_2 = arith.constant 0 : index
    %c0_3 = arith.constant 0 : index
    %2 = vector.load %arg2[%c0_2, %c0_3] : memref<1x128xf32, #tpu.memory_space<vmem>>, vector<1x128xf32>
    %3 = vector.shape_cast %2 : vector<1x128xf32> to vector<1x1x128xf32>
    %4 = vector.broadcast %3 : vector<1x1x128xf32> to vector<1x64x128xf32>
    %5 = arith.mulf %1, %4 : vector<1x64x128xf32>
    %c0_4 = arith.constant 0 : index
    %c0_5 = arith.constant 0 : index
    %6 = vector.load %arg3[%c0_4, %c0_5] : memref<1x128xf32, #tpu.memory_space<vmem>>, vector<1x128xf32>
    %7 = vector.shape_cast %6 : vector<1x128xf32> to vector<1x1x128xf32>
    %8 = vector.broadcast %7 : vector<1x1x128xf32> to vector<1x64x128xf32>
    %9 = arith.addf %5, %8 : vector<1x64x128xf32>
    %c0_6 = arith.constant 0 : index
    %c0_7 = arith.constant 0 : index
    %c0_8 = arith.constant 0 : index
    %10 = vector.load %arg4[%c0_6, %c0_7, %c0_8] : memref<1x64x128xbf16, #tpu.memory_space<vmem>>, vector<1x64x128xbf16>
    %11 = arith.extf %10 : vector<1x64x128xbf16> to vector<1x64x128xf32>
    %c0_9 = arith.constant 0 : index
    %c0_10 = arith.constant 0 : index
    %12 = vector.load %arg5[%c0_9, %c0_10] : memref<1x128xf32, #tpu.memory_space<vmem>>, vector<1x128xf32>
    %13 = vector.shape_cast %12 : vector<1x128xf32> to vector<1x1x128xf32>
    %14 = vector.broadcast %13 : vector<1x1x128xf32> to vector<1x64x128xf32>
    %15 = arith.mulf %11, %14 : vector<1x64x128xf32>
    %c0_11 = arith.constant 0 : index
    %c0_12 = arith.constant 0 : index
    %16 = vector.load %arg6[%c0_11, %c0_12] : memref<1x128xf32, #tpu.memory_space<vmem>>, vector<1x128xf32>
    %17 = vector.shape_cast %16 : vector<1x128xf32> to vector<1x1x128xf32>
    %18 = vector.broadcast %17 : vector<1x1x128xf32> to vector<1x64x128xf32>
    %19 = arith.addf %15, %18 : vector<1x64x128xf32>
    %20 = arith.addf %9, %19 : vector<1x64x128xf32>
    %cst = arith.constant 0.000000e+00 : f32
    %21 = vector.broadcast %cst : f32 to vector<1x64x128xf32>
    %22 = arith.maximumf %20, %21 : vector<1x64x128xf32>
    %c0_13 = arith.constant 0 : index
    %c0_14 = arith.constant 0 : index
    %c0_15 = arith.constant 0 : index
    %23 = vector.load %arg7[%c0_13, %c0_14, %c0_15] : memref<1x64x128xf32, #tpu.memory_space<vmem>>, vector<1x64x128xf32>
    tpu.vector_store %arg7[%c0_13, %c0_14, %c0_15], %22 {strides = array<i32>} : memref<1x64x128xf32, #tpu.memory_space<vmem>>, vector<1x64x128xf32>,
    return
  }
  func.func @transform_0(%arg0: i32) -> (i32, i32, i32) {
    %c0_i32 = arith.constant 0 : i32
    %c0_i32_0 = arith.constant 0 : i32
    %c0_i32_1 = arith.constant 0 : i32
    return %arg0, %c0_i32, %c0_i32_0 : i32, i32, i32
  }
  func.func @transform_1(%arg0: i32) -> (i32, i32) {
    %c0_i32 = arith.constant 0 : i32
    %c0_i32_0 = arith.constant 0 : i32
    %c0_i32_1 = arith.constant 0 : i32
    return %c0_i32, %c0_i32_0 : i32, i32
  }
  func.func @transform_2(%arg0: i32) -> (i32, i32) {
    %c0_i32 = arith.constant 0 : i32
    %c0_i32_0 = arith.constant 0 : i32
    %c0_i32_1 = arith.constant 0 : i32
    return %c0_i32, %c0_i32_0 : i32, i32
  }
  func.func @transform_3(%arg0: i32) -> (i32, i32, i32) {
    %c0_i32 = arith.constant 0 : i32
    %c0_i32_0 = arith.constant 0 : i32
    %c0_i32_1 = arith.constant 0 : i32
    return %arg0, %c0_i32, %c0_i32_0 : i32, i32, i32
  }
  func.func @transform_4(%arg0: i32) -> (i32, i32) {
    %c0_i32 = arith.constant 0 : i32
    %c0_i32_0 = arith.constant 0 : i32
    %c0_i32_1 = arith.constant 0 : i32
    return %c0_i32, %c0_i32_0 : i32, i32
  }
  func.func @transform_5(%arg0: i32) -> (i32, i32) {
    %c0_i32 = arith.constant 0 : i32
    %c0_i32_0 = arith.constant 0 : i32
    %c0_i32_1 = arith.constant 0 : i32
    return %c0_i32, %c0_i32_0 : i32, i32
  }
  func.func @transform_6(%arg0: i32) -> (i32, i32, i32) {
    %c0_i32 = arith.constant 0 : i32
    %c0_i32_0 = arith.constant 0 : i32
    %c0_i32_1 = arith.constant 0 : i32
    return %arg0, %c0_i32, %c0_i32_0 : i32, i32, i32
  }
}

</mosaic_0001>

<llo_original>
// kernel: basic_block_forward.8
$region0: #{basic_block_forward.8}
  #allocation0 [shape = 'u32[]', space=smem, size = 0x4, offset = 0x4, fixed_abs, tag = 'smem constant byte address 0x4 - core index']
  #allocation1 [shape = 'u32[72,128]{1,0:T(1,128)}', space=vmem, size = 0x9000, scoped, tag = 'internal scratch']
  %s0 = inlined_call_operand.vmem [shape: f32[2,8,8,8], index: 0, kind: input, shape index: {}]
  %s1 = inlined_call_operand.vmem [shape: bf16[1,8,128], index: 1, kind: input, shape index: {}]
  %s2 = inlined_call_operand.vmem [shape: bf16[2,64,128], index: 2, kind: output, shape index: {0}]
  %s3 = inlined_call_operand.vmem [shape: f32[2,8,128], index: 3, kind: output, shape index: {1}]
  %4 = xla_tuple %s2, %s3
  %s5 = sld [smem:[#allocation0]]
  $region49: #{basic_block_forward.8} parent=0
    _
  %s7 = ssub.s32 1, %s5
  %s8 = scalar_select 0, %s7, %s5
  loop: start=0, step=1, limit=4
  $region2: #{basic_block_forward.8} parent=0 // loop_pre_header
    _
  $region3: #{basic_block_forward.8} parent=0 // loop_header
    %s10 = sphi 0, %s14
    %p11 = scmp.ge.s32.totalorder %s10, 4
    %s17 = sphi 0, %s29
    %s18 = sphi 0, %s25
    %s19 = sphi 0, %s17
    %s20 = sphi 0, %s18
    %s21 = sphi 0, %s19
    %s22 = sphi 0, %s20
    %s32 = sphi 0, %s34
    %s35 = sphi 0, %s32
    %s36 = sphi 0, %s35
    %s52 = sphi 0, %s36
    %s58 = sphi 0, %s60
    %s61 = sphi 0, %s58
    %s62 = sphi 0, %s61
    %s78 = sphi 0, %s62
    %s86 = sphi 0, %s88
    %s89 = sphi 0, %s86
    %s90 = sphi 0, %s89
    %s106 = sphi 0, %s90
    %s114 = sphi 0, %s116
    %s117 = sphi 0, %s114
    %s118 = sphi 0, %s117
    %s134 = sphi 0, %s118
  $region4: #{basic_block_forward.8} parent=0 // loop_header_branch
    %13 = sbr.rel (%p11) target = $region8
  $region5: #{basic_block_forward.8} parent=0 // loop_body
    %s15 = ssub.s32 %s10, 1
    %s16 = ssub.s32 %s10, 2
    %s23 = sadd.s32 1, %s18
    %p24 = scmp.ge.s32.totalorder %s23, 2
    %s25 = scalar_select %p24, 0, %s23
    %s26 = sadd.s32 1, %s17
    %s27 = scalar_select %p24, %s26, %s17
    %p28 = scmp.ge.s32.totalorder %s27, 1
    %s29 = scalar_select %p28, 0, %s27
    %s30 = ssub.s32 %s18, %s25
    %p31 = scmp.eq.s32.totalorder %s30, 0
    %s33 = sadd.s32 %s32, 1
    %s34 = scalar_select %p31, %s32, %s33
    %p37 = pneg %p31
    %p38 = scmp.eq.s32.totalorder %s10, 1
    %p39 = por %p37, %p38
    %p40 = scmp.ne.s32.totalorder %s32, %s35
    %p41 = scmp.eq.s32.totalorder %s10, 0
    %p42 = por %p40, %p41
    %p43 = scmp.ne.s32.totalorder %s32, %s35
    %p44 = scmp.eq.s32.totalorder %s15, 1
    %p45 = por %p43, %p44
    %p46 = scmp.ne.s32.totalorder %s35, %s36
    %p47 = scmp.eq.s32.totalorder %s15, 0
    %p48 = por %p46, %p47
    %p49 = scmp.ne.s32.totalorder %s35, %s36
    %p50 = scmp.eq.s32.totalorder %s16, 1
    %p51 = por %p49, %p50
    %p53 = scmp.ne.s32.totalorder %s36, %s52
    %p54 = scmp.eq.s32.totalorder %s16, 0
    %p55 = por %p53, %p54
    %s56 = ssub.s32 %s17, %s29
    %p57 = scmp.eq.s32.totalorder %s56, 0
    %s59 = sadd.s32 %s58, 1
    %s60 = scalar_select %p57, %s58, %s59
    %p63 = pneg %p57
    %p64 = scmp.eq.s32.totalorder %s10, 1
    %p65 = por %p63, %p64
    %p66 = scmp.ne.s32.totalorder %s58, %s61
    %p67 = scmp.eq.s32.totalorder %s10, 0
    %p68 = por %p66, %p67
    %p69 = scmp.ne.s32.totalorder %s58, %s61
    %p70 = scmp.eq.s32.totalorder %s15, 1
    %p71 = por %p69, %p70
    %p72 = scmp.ne.s32.totalorder %s61, %s62
    %p73 = scmp.eq.s32.totalorder %s15, 0
    %p74 = por %p72, %p73
    %p75 = scmp.ne.s32.totalorder %s61, %s62
    %p76 = scmp.eq.s32.totalorder %s16, 1
    %p77 = por %p75, %p76
    %p79 = scmp.ne.s32.totalorder %s62, %s78
    %p80 = scmp.eq.s32.totalorder %s16, 0
    %p81 = por %p79, %p80
    %s82 = ssub.s32 %s18, %s25
    %s83 = ssub.s32 %s17, %s29
    %s84 = sor.u32 %s82, %s83
    %p85 = scmp.eq.s32.totalorder %s84, 0
    %s87 = sadd.s32 %s86, 1
    %s88 = scalar_select %p85, %s86, %s87
    %p91 = pneg %p85
    %p92 = scmp.eq.s32.totalorder %s10, 1
    %p93 = por %p91, %p92
    %p94 = scmp.ne.s32.totalorder %s86, %s89
    %p95 = scmp.eq.s32.totalorder %s10, 0
    %p96 = por %p94, %p95
    %p97 = scmp.ne.s32.totalorder %s86, %s89
    %p98 = scmp.eq.s32.totalorder %s15, 1
    %p99 = por %p97, %p98
    %p100 = scmp.ne.s32.totalorder %s89, %s90
    %p101 = scmp.eq.s32.totalorder %s15, 0
    %p102 = por %p100, %p101
    %p103 = scmp.ne.s32.totalorder %s89, %s90
    %p104 = scmp.eq.s32.totalorder %s16, 1
    %p105 = por %p103, %p104
    %p107 = scmp.ne.s32.totalorder %s90, %s106
    %p108 = scmp.eq.s32.totalorder %s16, 0
    %p109 = por %p107, %p108
    %s110 = ssub.s32 %s18, %s25
    %s111 = ssub.s32 %s17, %s29
    %s112 = sor.u32 %s110, %s111
    %p113 = scmp.eq.s32.totalorder %s112, 0
    %s115 = sadd.s32 %s114, 1
    %s116 = scalar_select %p113, %s114, %s115
    %p119 = pneg %p113
    %p120 = scmp.eq.s32.totalorder %s10, 1
    %p121 = por %p119, %p120
    %p122 = scmp.ne.s32.totalorder %s114, %s117
    %p123 = scmp.eq.s32.totalorder %s10, 0
    %p124 = por %p122, %p123
    %p125 = scmp.ne.s32.totalorder %s114, %s117
    %p126 = scmp.eq.s32.totalorder %s15, 1
    %p127 = por %p125, %p126
    %p128 = scmp.ne.s32.totalorder %s117, %s118
    %p129 = scmp.eq.s32.totalorder %s15, 0
    %p130 = por %p128, %p129
    %p131 = scmp.ne.s32.totalorder %s117, %s118
    %p132 = scmp.eq.s32.totalorder %s16, 1
    %p133 = por %p131, %p132
    %p135 = scmp.ne.s32.totalorder %s118, %s134
    %p136 = scmp.eq.s32.totalorder %s16, 0
    %p137 = por %p135, %p136
    %p138 = scmp.le.s32.totalorder 1, %s10
    %p139 = scmp.lt.s32.totalorder %s10, 3
    %p140 = pnand %p138, %p139
    %p141 = pneg %p140
    // Predicated region
    $region9: #{basic_block_forward.8} parent=5 // pred_check
      _
    $region10: #{basic_block_forward.8} parent=5 // pred_check_branch
      %143 = sbr.rel (%p140) target = $region12
    $region11: #{basic_block_forward.8} parent=5 // pred_region
      %s144 = ssub.s32 %s10, 1
      // Predicated region
      $region13: #{basic_block_forward.8} parent=11 // pred_check
        %p145 = pneg %p74
      $region14: #{basic_block_forward.8} parent=11 // pred_check_branch
        %147 = sbr.rel (%p145) target = $region16
      $region15: #{basic_block_forward.8} parent=11 // pred_region
        %p148 = scmp.lt.s32.totalorder %s19, 0
        %s149 = scalar_select %p148, %s19, 0
        %s150 = smul.addr %s149, 4
        %s151 = scalar_lea.vmem %s1, %s150
      $region16: #{basic_block_forward.8} parent=11 // pred_fallthru
        _
    $region12: #{basic_block_forward.8} parent=5 // pred_fallthru
      _
    %p152 = scmp.lt.s32.totalorder %s10, 2
    // Predicated region
    $region17: #{basic_block_forward.8} parent=5 // pred_check
      %p153 = pneg %p152
    $region18: #{basic_block_forward.8} parent=5 // pred_check_branch
      %155 = sbr.rel (%p153) target = $region20
    $region19: #{basic_block_forward.8} parent=5 // pred_region
      // Predicated region
      $region21: #{basic_block_forward.8} parent=19 // pred_check
        %p156 = pneg %p42
      $region22: #{basic_block_forward.8} parent=19 // pred_check_branch
        %158 = sbr.rel (%p156) target = $region24
      $region23: #{basic_block_forward.8} parent=19 // pred_region
        %p159 = scmp.lt.s32.totalorder %s18, 1
        %s160 = scalar_select %p159, %s18, 1
        %s161 = smul.addr %s160, 8
        %s162 = smul.addr %s161, 8
        %s163 = scalar_lea.vmem %s0, %s162
      $region24: #{basic_block_forward.8} parent=19 // pred_fallthru
        _
    $region20: #{basic_block_forward.8} parent=5 // pred_fallthru
      _
    %p164 = scmp.le.s32.totalorder 1, %s10
    %p165 = scmp.lt.s32.totalorder %s10, 3
    %p166 = pnand %p164, %p165
    %p167 = pneg %p166
    // Predicated region
    $region25: #{basic_block_forward.8} parent=5 // pred_check
      _
    $region26: #{basic_block_forward.8} parent=5 // pred_check_branch
      %169 = sbr.rel (%p166) target = $region28
    $region27: #{basic_block_forward.8} parent=5 // pred_region
      %s170 = ssub.s32 %s10, 1
      %p171 = scmp.lt.s32.totalorder %s20, 1
      %s172 = scalar_select %p171, %s20, 1
      %s173 = smul.addr %s172, 8
      %s174 = smul.addr %s173, 8
      %s175 = scalar_lea.vmem %s0, %s174
      %p176 = pneg %p48
      %p177 = pneg %p45
      %p178 = scmp.lt.s32.totalorder %s19, 0
      %s179 = scalar_select %p178, %s19, 0
      %s180 = smul.addr %s179, 4
      %s181 = scalar_lea.vmem %s1, %s180
      %p182 = pneg %p74
      %p183 = pneg %p71
      %p184 = pneg %p102
      %p185 = pneg %p99
      %p186 = scmp.lt.s32.totalorder %s20, 1
      %s187 = scalar_select %p186, %s20, 1
      %p188 = scmp.lt.s32.totalorder %s19, 0
      %s189 = scalar_select %p188, %s19, 0
      %s190 = smul.addr %s187, 8
      %s191 = sadd.s32 %s189, %s190
      %s192 = smul.addr %s191, 4
      %s193 = scalar_lea.vmem %s2, %s192
      %p194 = pneg %p130
      %p195 = pneg %p127
      %p196 = scmp.lt.s32.totalorder %s20, 1
      %s197 = scalar_select %p196, %s20, 1
      %p198 = scmp.lt.s32.totalorder %s19, 0
      %s199 = scalar_select %p198, %s19, 0
      %s200 = sadd.s32 %s199, %s197
      %s201 = smul.addr %s200, 8
      %s202 = scalar_lea.vmem %s3, %s201
      %p203 = scmp.lt.s32.totalorder %s20, 1
      %s204 = scalar_select %p203, %s20, 1
      %s205 = smul.addr %s204, 8
      %s206 = smul.addr %s205, 8
      %s207 = scalar_lea.vmem %s0, %s206
      %p208 = scmp.lt.s32.totalorder %s19, 0
      %s209 = scalar_select %p208, %s19, 0
      %s210 = smul.addr %s209, 4
      %s211 = scalar_lea.vmem %s1, %s210
      %p212 = scmp.lt.s32.totalorder %s20, 1
      %s213 = scalar_select %p212, %s20, 1
      %p214 = scmp.lt.s32.totalorder %s19, 0
      %s215 = scalar_select %p214, %s19, 0
      %s216 = smul.addr %s213, 8
      %s217 = sadd.s32 %s215, %s216
      %s218 = smul.addr %s217, 4
      %s219 = scalar_lea.vmem %s2, %s218
      %p220 = scmp.lt.s32.totalorder %s20, 1
      %s221 = scalar_select %p220, %s20, 1
      %p222 = scmp.lt.s32.totalorder %s19, 0
      %s223 = scalar_select %p222, %s19, 0
      %s224 = sadd.s32 %s223, %s221
      %s225 = smul.addr %s224, 8
      %s226 = scalar_lea.vmem %s3, %s225
      %v228 = vld [vmem:[%s207] sm:$0xff]
      %v229 = vld [vmem:[%s207 + $0x8] sm:$0xff]
      %v230 = vld [vmem:[%s207 + $0x10] sm:$0xff]
      %v231 = vld [vmem:[%s207 + $0x18] sm:$0xff]
      %v232 = vld [vmem:[%s207 + $0x20] sm:$0xff]
      %v233 = vld [vmem:[%s207 + $0x28] sm:$0xff]
      %v234 = vld [vmem:[%s207 + $0x30] sm:$0xff]
      %v235 = vld [vmem:[%s207 + $0x38] sm:$0xff]
      %v236 = vpack.c.bf16 %v229, %v228
      %v237 = vpack.c.bf16 %v231, %v230
      %v238 = vpack.c.bf16 %v233, %v232
      %v239 = vpack.c.bf16 %v235, %v234
      %v240 = vld [vmem:[%s211] sm:$0xf]
      %vm241 = vcmask 64512
      %v243 = vsel %vm241, %v236, 0
      %v246 = vsel %vm241, %v237, 0
      %v249 = vsel %vm241, %v238, 0
      %v252 = vsel %vm241, %v239, 0
      %vm254 = vcmask 1043456
      %v256 = vsel %vm254, %v240, 0
      %258 = vmatpush.bf16.msra.mxu0 0
      %259 = vmatpush.bf16.msra.mxu0 0
      %260 = vmatpush.bf16.msra.mxu0 0
      %261 = vmatpush.bf16.msra.mxu0 0
      %262 = vmatpush.bf16.msra.mxu0 0
      %263 = vmatpush.bf16.msra.mxu0 0
      %264 = vmatpush.bf16.msra.mxu0 0
      %265 = vmatpush.bf16.msra.mxu0 %v256
      %266 = vmatmul.bf16.gmra.mxu0 %v243
      %v267 = vpop.f32.mrf.mxu0
      %v268 = vadd.f32 0.0, %v267
      %v269 = vpop.f32.mrf.mxu0
      %v270 = vadd.f32 0.0, %v269
      %271 = vmatmul.bf16.gmra.mxu0 %v246
      %v272 = vpop.f32.mrf.mxu0
      %v273 = vadd.f32 0.0, %v272
      %v274 = vpop.f32.mrf.mxu0
      %v275 = vadd.f32 0.0, %v274
      %276 = vmatmul.bf16.gmra.mxu0 %v249
      %v277 = vpop.f32.mrf.mxu0
      %v278 = vadd.f32 0.0, %v277
      %v279 = vpop.f32.mrf.mxu0
      %v280 = vadd.f32 0.0, %v279
      %281 = vmatmul.bf16.gmra.mxu0 %v252
      %v282 = vpop.f32.mrf.mxu0
      %v283 = vadd.f32 0.0, %v282
      %v284 = vpop.f32.mrf.mxu0
      %v285 = vadd.f32 0.0, %v284
      %286 = vdwg.mxu0
      %v287 = vpack.c.bf16 %v268, %v268
      %v288 = vpack.c.bf16 %v270, %v270
      %v289 = vpack.c.bf16 %v273, %v273
      %v290 = vpack.c.bf16 %v275, %v275
      %v291 = vpack.c.bf16 %v278, %v278
      %v292 = vpack.c.bf16 %v280, %v280
      %v293 = vpack.c.bf16 %v283, %v283
      %v294 = vpack.c.bf16 %v285, %v285
      %295 = vst [vmem:[%s219] sm:$0xf] %v287
      %296 = vst [vmem:[%s219 + $0x4] sm:$0xf] %v288
      %297 = vst [vmem:[%s219 + $0x8] sm:$0xf] %v289
      %298 = vst [vmem:[%s219 + $0xc] sm:$0xf] %v290
      %299 = vst [vmem:[%s219 + $0x10] sm:$0xf] %v291
      %300 = vst [vmem:[%s219 + $0x14] sm:$0xf] %v292
      %301 = vst [vmem:[%s219 + $0x18] sm:$0xf] %v293
      %302 = vst [vmem:[%s219 + $0x1c] sm:$0xf] %v294
      %v303 = vadd.f32 %v268, %v270
      %v304 = vadd.f32 %v303, %v273
      %v305 = vadd.f32 %v304, %v275
      %v306 = vadd.f32 %v305, %v278
      %v307 = vadd.f32 %v306, %v280
      %v308 = vadd.f32 %v307, %v283
      %v309 = vadd.f32 %v308, %v285
      %v310 = vrot.slane %v309, 4
      %v311 = vadd.f32 %v309, %v310
      %v312 = vrot.slane %v311, 2
      %v313 = vadd.f32 %v311, %v312
      %v314 = vrot.slane %v313, 1
      %v315 = vadd.f32 %v313, %v314
      %v316 = vmul.f32 %v268, %v268
      %v317 = vmul.f32 %v270, %v270
      %v318 = vmul.f32 %v273, %v273
      %v319 = vmul.f32 %v275, %v275
      %v320 = vmul.f32 %v278, %v278
      %v321 = vmul.f32 %v280, %v280
      %v322 = vmul.f32 %v283, %v283
      %v323 = vmul.f32 %v285, %v285
      %v324 = vadd.f32 %v316, %v317
      %v325 = vadd.f32 %v324, %v318
      %v326 = vadd.f32 %v325, %v319
      %v327 = vadd.f32 %v326, %v320
      %v328 = vadd.f32 %v327, %v321
      %v329 = vadd.f32 %v328, %v322
      %v330 = vadd.f32 %v329, %v323
      %v331 = vrot.slane %v330, 4
      %v332 = vadd.f32 %v330, %v331
      %v333 = vrot.slane %v332, 2
      %v334 = vadd.f32 %v332, %v333
      %v335 = vrot.slane %v334, 1
      %v336 = vadd.f32 %v334, %v335
      %vm337 = vcmask 1040384
      %v338 = vsel %vm337, %v315, %v336
      %vm339 = vcmask 1041408
      %v340 = vsel %vm339, %v338, 0.0
      %341 = vst [vmem:[%s226] sm:$0xff] %v340
      %p342 = scmp.lt.s32.totalorder %s20, 1
      %s343 = scalar_select %p342, %s20, 1
      %p344 = scmp.lt.s32.totalorder %s19, 0
      %s345 = scalar_select %p344, %s19, 0
      %s346 = smul.addr %s343, 8
      %s347 = sadd.s32 %s345, %s346
      %s348 = smul.addr %s347, 4
      %s349 = scalar_lea.vmem %s2, %s348
      %p350 = scmp.lt.s32.totalorder %s20, 1
      %s351 = scalar_select %p350, %s20, 1
      %p352 = scmp.lt.s32.totalorder %s19, 0
      %s353 = scalar_select %p352, %s19, 0
      %s354 = sadd.s32 %s353, %s351
      %s355 = smul.addr %s354, 8
      %s356 = scalar_lea.vmem %s3, %s355
      // Predicated region
      $region29: #{basic_block_forward.8} parent=27 // pred_check
        %p357 = pneg %p99
      $region30: #{basic_block_forward.8} parent=27 // pred_check_branch
        %359 = sbr.rel (%p357) target = $region32
      $region31: #{basic_block_forward.8} parent=27 // pred_region
        _
      $region32: #{basic_block_forward.8} parent=27 // pred_fallthru
        _
      // Predicated region
      $region33: #{basic_block_forward.8} parent=27 // pred_check
        %p360 = pneg %p127
      $region34: #{basic_block_forward.8} parent=27 // pred_check_branch
        %362 = sbr.rel (%p360) target = $region36
      $region35: #{basic_block_forward.8} parent=27 // pred_region
        _
      $region36: #{basic_block_forward.8} parent=27 // pred_fallthru
        _
    $region28: #{basic_block_forward.8} parent=5 // pred_fallthru
      _
    %p363 = scmp.le.s32.totalorder 2, %s10
    // Predicated region
    $region37: #{basic_block_forward.8} parent=5 // pred_check
      %p364 = pneg %p363
    $region38: #{basic_block_forward.8} parent=5 // pred_check_branch
      %366 = sbr.rel (%p364) target = $region40
    $region39: #{basic_block_forward.8} parent=5 // pred_region
      %s367 = ssub.s32 %s10, 2
      // Predicated region
      $region41: #{basic_block_forward.8} parent=39 // pred_check
        %p368 = pneg %p105
      $region42: #{basic_block_forward.8} parent=39 // pred_check_branch
        %370 = sbr.rel (%p368) target = $region44
      $region43: #{basic_block_forward.8} parent=39 // pred_region
        %p371 = scmp.lt.s32.totalorder %s22, 1
        %s372 = scalar_select %p371, %s22, 1
        %p373 = scmp.lt.s32.totalorder %s21, 0
        %s374 = scalar_select %p373, %s21, 0
        %s375 = smul.addr %s372, 8
        %s376 = sadd.s32 %s374, %s375
        %s377 = smul.addr %s376, 4
        %s378 = scalar_lea.vmem %s2, %s377
      $region44: #{basic_block_forward.8} parent=39 // pred_fallthru
        _
      // Predicated region
      $region45: #{basic_block_forward.8} parent=39 // pred_check
        %p379 = pneg %p133
      $region46: #{basic_block_forward.8} parent=39 // pred_check_branch
        %381 = sbr.rel (%p379) target = $region48
      $region47: #{basic_block_forward.8} parent=39 // pred_region
        %p382 = scmp.lt.s32.totalorder %s22, 1
        %s383 = scalar_select %p382, %s22, 1
        %p384 = scmp.lt.s32.totalorder %s21, 0
        %s385 = scalar_select %p384, %s21, 0
        %s386 = sadd.s32 %s385, %s383
        %s387 = smul.addr %s386, 8
        %s388 = scalar_lea.vmem %s3, %s387
      $region48: #{basic_block_forward.8} parent=39 // pred_fallthru
        _
    $region40: #{basic_block_forward.8} parent=5 // pred_fallthru
      _
  $region6: #{basic_block_forward.8} parent=0 // loop_footer
    %s14 = sadd.s32 1, %s10
  $region7: #{basic_block_forward.8} parent=0 // loop_footer_branch
    %9 = sbr.rel target = $region3
  $region8: #{basic_block_forward.8} parent=0 // loop_exit
    _

// kernel: basic_block_forward.6
$region0: #{basic_block_forward.6}
  #allocation0 [shape = 'u32[]', space=smem, size = 0x4, offset = 0x4, fixed_abs, tag = 'smem constant byte address 0x4 - core index']
  #allocation1 [shape = 'u32[72,128]{1,0:T(1,128)}', space=vmem, size = 0x9000, scoped, tag = 'internal scratch']
  %s0 = inlined_call_operand.vmem [shape: bf16[2,64,128], index: 0, kind: input, shape index: {}]
  %s1 = inlined_call_operand.vmem [shape: f32[1,128], index: 1, kind: input, shape index: {}]
  %s2 = inlined_call_operand.vmem [shape: f32[1,128], index: 2, kind: input, shape index: {}]
  %s3 = inlined_call_operand.vmem [shape: bf16[2,64,128], index: 3, kind: output, shape index: {}]
  %s4 = sld [smem:[#allocation0]]
  $region45: #{basic_block_forward.6} parent=0
    _
  %s6 = ssub.s32 1, %s4
  %s7 = scalar_select 0, %s6, %s4
  loop: start=0, step=1, limit=4
  $region2: #{basic_block_forward.6} parent=0 // loop_pre_header
    _
  $region3: #{basic_block_forward.6} parent=0 // loop_header
    %s9 = sphi 0, %s13
    %p10 = scmp.ge.s32.totalorder %s9, 4
    %s19 = sphi 0, %s21
    %s22 = sphi 0, %s19
    %s23 = sphi 0, %s22
    %s39 = sphi 0, %s23
    %s43 = sphi 0, %s43
    %s45 = sphi 0, %s43
    %s46 = sphi 0, %s45
    %s60 = sphi 0, %s46
    %s64 = sphi 0, %s64
    %s66 = sphi 0, %s64
    %s67 = sphi 0, %s66
    %s81 = sphi 0, %s67
    %s87 = sphi 0, %s89
    %s90 = sphi 0, %s87
    %s91 = sphi 0, %s90
    %s107 = sphi 0, %s91
  $region4: #{basic_block_forward.6} parent=0 // loop_header_branch
    %12 = sbr.rel (%p10) target = $region8
  $region5: #{basic_block_forward.6} parent=0 // loop_body
    %s14 = ssub.s32 %s9, 1
    %s15 = ssub.s32 %s9, 2
    %s16 = sadd.s32 %s9, 1
    %s17 = ssub.s32 %s9, %s16
    %p18 = scmp.eq.s32.totalorder %s17, 0
    %s20 = sadd.s32 %s19, 1
    %s21 = scalar_select %p18, %s19, %s20
    %p24 = pneg %p18
    %p25 = scmp.eq.s32.totalorder %s9, 1
    %p26 = por %p24, %p25
    %p27 = scmp.ne.s32.totalorder %s19, %s22
    %p28 = scmp.eq.s32.totalorder %s9, 0
    %p29 = por %p27, %p28
    %p30 = scmp.ne.s32.totalorder %s19, %s22
    %p31 = scmp.eq.s32.totalorder %s14, 1
    %p32 = por %p30, %p31
    %p33 = scmp.ne.s32.totalorder %s22, %s23
    %p34 = scmp.eq.s32.totalorder %s14, 0
    %p35 = por %p33, %p34
    %p36 = scmp.ne.s32.totalorder %s22, %s23
    %p37 = scmp.eq.s32.totalorder %s15, 1
    %p38 = por %p36, %p37
    %p40 = scmp.ne.s32.totalorder %s23, %s39
    %p41 = scmp.eq.s32.totalorder %s15, 0
    %p42 = por %p40, %p41
    %s44 = sadd.s32 %s43, 1
    %p47 = scmp.eq.s32.totalorder %s9, 1
    %p48 = scmp.ne.s32.totalorder %s43, %s45
    %p49 = scmp.eq.s32.totalorder %s9, 0
    %p50 = por %p48, %p49
    %p51 = scmp.ne.s32.totalorder %s43, %s45
    %p52 = scmp.eq.s32.totalorder %s14, 1
    %p53 = por %p51, %p52
    %p54 = scmp.ne.s32.totalorder %s45, %s46
    %p55 = scmp.eq.s32.totalorder %s14, 0
    %p56 = por %p54, %p55
    %p57 = scmp.ne.s32.totalorder %s45, %s46
    %p58 = scmp.eq.s32.totalorder %s15, 1
    %p59 = por %p57, %p58
    %p61 = scmp.ne.s32.totalorder %s46, %s60
    %p62 = scmp.eq.s32.totalorder %s15, 0
    %p63 = por %p61, %p62
    %s65 = sadd.s32 %s64, 1
    %p68 = scmp.eq.s32.totalorder %s9, 1
    %p69 = scmp.ne.s32.totalorder %s64, %s66
    %p70 = scmp.eq.s32.totalorder %s9, 0
    %p71 = por %p69, %p70
    %p72 = scmp.ne.s32.totalorder %s64, %s66
    %p73 = scmp.eq.s32.totalorder %s14, 1
    %p74 = por %p72, %p73
    %p75 = scmp.ne.s32.totalorder %s66, %s67
    %p76 = scmp.eq.s32.totalorder %s14, 0
    %p77 = por %p75, %p76
    %p78 = scmp.ne.s32.totalorder %s66, %s67
    %p79 = scmp.eq.s32.totalorder %s15, 1
    %p80 = por %p78, %p79
    %p82 = scmp.ne.s32.totalorder %s67, %s81
    %p83 = scmp.eq.s32.totalorder %s15, 0
    %p84 = por %p82, %p83
    %s85 = ssub.s32 %s9, %s16
    %p86 = scmp.eq.s32.totalorder %s85, 0
    %s88 = sadd.s32 %s87, 1
    %s89 = scalar_select %p86, %s87, %s88
    %p92 = pneg %p86
    %p93 = scmp.eq.s32.totalorder %s9, 1
    %p94 = por %p92, %p93
    %p95 = scmp.ne.s32.totalorder %s87, %s90
    %p96 = scmp.eq.s32.totalorder %s9, 0
    %p97 = por %p95, %p96
    %p98 = scmp.ne.s32.totalorder %s87, %s90
    %p99 = scmp.eq.s32.totalorder %s14, 1
    %p100 = por %p98, %p99
    %p101 = scmp.ne.s32.totalorder %s90, %s91
    %p102 = scmp.eq.s32.totalorder %s14, 0
    %p103 = por %p101, %p102
    %p104 = scmp.ne.s32.totalorder %s90, %s91
    %p105 = scmp.eq.s32.totalorder %s15, 1
    %p106 = por %p104, %p105
    %p108 = scmp.ne.s32.totalorder %s91, %s107
    %p109 = scmp.eq.s32.totalorder %s15, 0
    %p110 = por %p108, %p109
    %p111 = scmp.le.s32.totalorder 1, %s9
    %p112 = scmp.lt.s32.totalorder %s9, 3
    %p113 = pnand %p111, %p112
    %p114 = pneg %p113
    // Predicated region
    $region9: #{basic_block_forward.6} parent=5 // pred_check
      _
    $region10: #{basic_block_forward.6} parent=5 // pred_check_branch
      %116 = sbr.rel (%p113) target = $region12
    $region11: #{basic_block_forward.6} parent=5 // pred_region
      %s117 = ssub.s32 %s9, 1
      // Predicated region
      $region13: #{basic_block_forward.6} parent=11 // pred_check
        %p118 = pneg %p56
      $region14: #{basic_block_forward.6} parent=11 // pred_check_branch
        %120 = sbr.rel (%p118) target = $region16
      $region15: #{basic_block_forward.6} parent=11 // pred_region
        _
      $region16: #{basic_block_forward.6} parent=11 // pred_fallthru
        _
      // Predicated region
      $region17: #{basic_block_forward.6} parent=11 // pred_check
        %p121 = pneg %p77
      $region18: #{basic_block_forward.6} parent=11 // pred_check_branch
        %123 = sbr.rel (%p121) target = $region20
      $region19: #{basic_block_forward.6} parent=11 // pred_region
        _
      $region20: #{basic_block_forward.6} parent=11 // pred_fallthru
        _
    $region12: #{basic_block_forward.6} parent=5 // pred_fallthru
      _
    %p124 = scmp.lt.s32.totalorder %s9, 2
    // Predicated region
    $region21: #{basic_block_forward.6} parent=5 // pred_check
      %p125 = pneg %p124
    $region22: #{basic_block_forward.6} parent=5 // pred_check_branch
      %127 = sbr.rel (%p125) target = $region24
    $region23: #{basic_block_forward.6} parent=5 // pred_region
      // Predicated region
      $region25: #{basic_block_forward.6} parent=23 // pred_check
        %p128 = pneg %p29
      $region26: #{basic_block_forward.6} parent=23 // pred_check_branch
        %130 = sbr.rel (%p128) target = $region28
      $region27: #{basic_block_forward.6} parent=23 // pred_region
        %p131 = scmp.lt.s32.totalorder %s9, 1
        %s132 = scalar_select %p131, %s9, 1
        %s133 = smul.addr %s132, 8
        %s134 = smul.addr %s133, 4
        %s135 = scalar_lea.vmem %s0, %s134
      $region28: #{basic_block_forward.6} parent=23 // pred_fallthru
        _
    $region24: #{basic_block_forward.6} parent=5 // pred_fallthru
      _
    %p136 = scmp.le.s32.totalorder 1, %s9
    %p137 = scmp.lt.s32.totalorder %s9, 3
    %p138 = pnand %p136, %p137
    %p139 = pneg %p138
    // Predicated region
    $region29: #{basic_block_forward.6} parent=5 // pred_check
      _
    $region30: #{basic_block_forward.6} parent=5 // pred_check_branch
      %141 = sbr.rel (%p138) target = $region32
    $region31: #{basic_block_forward.6} parent=5 // pred_region
      %s142 = ssub.s32 %s9, 1
      %p143 = scmp.lt.s32.totalorder %s14, 1
      %s144 = scalar_select %p143, %s14, 1
      %s145 = smul.addr %s144, 8
      %s146 = smul.addr %s145, 4
      %s147 = scalar_lea.vmem %s0, %s146
      %p148 = pneg %p35
      %p149 = pneg %p32
      %p150 = pneg %p56
      %p151 = pneg %p53
      %p152 = pneg %p77
      %p153 = pneg %p74
      %p154 = pneg %p103
      %p155 = pneg %p100
      %p156 = scmp.lt.s32.totalorder %s14, 1
      %s157 = scalar_select %p156, %s14, 1
      %s158 = smul.addr %s157, 8
      %s159 = smul.addr %s158, 4
      %s160 = scalar_lea.vmem %s3, %s159
      %p161 = scmp.lt.s32.totalorder %s14, 1
      %s162 = scalar_select %p161, %s14, 1
      %s163 = smul.addr %s162, 8
      %s164 = smul.addr %s163, 4
      %s165 = scalar_lea.vmem %s0, %s164
      %p166 = scmp.lt.s32.totalorder %s14, 1
      %s167 = scalar_select %p166, %s14, 1
      %s168 = smul.addr %s167, 8
      %s169 = smul.addr %s168, 4
      %s170 = scalar_lea.vmem %s3, %s169
      %v171 = vld [vmem:[%s165] sm:$0xf]
      %v172 = vld [vmem:[%s165 + $0x4] sm:$0xf]
      %v173 = vld [vmem:[%s165 + $0x8] sm:$0xf]
      %v174 = vld [vmem:[%s165 + $0xc] sm:$0xf]
      %v175 = vld [vmem:[%s165 + $0x10] sm:$0xf]
      %v176 = vld [vmem:[%s165 + $0x14] sm:$0xf]
      %v177 = vld [vmem:[%s165 + $0x18] sm:$0xf]
      %v178 = vld [vmem:[%s165 + $0x1c] sm:$0xf]
      %v179 = vunpack.c.l.bf16 %v171
      %v180 = vunpack.c.l.bf16 %v172
      %v181 = vunpack.c.l.bf16 %v173
      %v182 = vunpack.c.l.bf16 %v174
      %v183 = vunpack.c.l.bf16 %v175
      %v184 = vunpack.c.l.bf16 %v176
      %v185 = vunpack.c.l.bf16 %v177
      %v186 = vunpack.c.l.bf16 %v178
      %v187 = vld [vmem:[%s1] sm:$0x1]
      %v189 = vperm.slane %v187, 0
      %v191 = vmul.f32 %v179, %v189
      %v192 = vmul.f32 %v180, %v189
      %v193 = vmul.f32 %v181, %v189
      %v194 = vmul.f32 %v182, %v189
      %v195 = vmul.f32 %v183, %v189
      %v196 = vmul.f32 %v184, %v189
      %v197 = vmul.f32 %v185, %v189
      %v198 = vmul.f32 %v186, %v189
      %v199 = vld [vmem:[%s2] sm:$0x1]
      %v201 = vperm.slane %v199, 0
      %v203 = vadd.f32 %v191, %v201
      %v204 = vadd.f32 %v192, %v201
      %v205 = vadd.f32 %v193, %v201
      %v206 = vadd.f32 %v194, %v201
      %v207 = vadd.f32 %v195, %v201
      %v208 = vadd.f32 %v196, %v201
      %v209 = vadd.f32 %v197, %v201
      %v210 = vadd.f32 %v198, %v201
      %v211 = vmax.f32 %v203, 0.0
      %v212 = vmax.f32 %v204, 0.0
      %v213 = vmax.f32 %v205, 0.0
      %v214 = vmax.f32 %v206, 0.0
      %v215 = vmax.f32 %v207, 0.0
      %v216 = vmax.f32 %v208, 0.0
      %v217 = vmax.f32 %v209, 0.0
      %v218 = vmax.f32 %v210, 0.0
      %v219 = vpack.c.bf16 %v211, %v211
      %v220 = vpack.c.bf16 %v212, %v212
      %v221 = vpack.c.bf16 %v213, %v213
      %v222 = vpack.c.bf16 %v214, %v214
      %v223 = vpack.c.bf16 %v215, %v215
      %v224 = vpack.c.bf16 %v216, %v216
      %v225 = vpack.c.bf16 %v217, %v217
      %v226 = vpack.c.bf16 %v218, %v218
      %227 = vst [vmem:[%s170] sm:$0xf] %v219
      %228 = vst [vmem:[%s170 + $0x4] sm:$0xf] %v220
      %229 = vst [vmem:[%s170 + $0x8] sm:$0xf] %v221
      %230 = vst [vmem:[%s170 + $0xc] sm:$0xf] %v222
      %231 = vst [vmem:[%s170 + $0x10] sm:$0xf] %v223
      %232 = vst [vmem:[%s170 + $0x14] sm:$0xf] %v224
      %233 = vst [vmem:[%s170 + $0x18] sm:$0xf] %v225
      %234 = vst [vmem:[%s170 + $0x1c] sm:$0xf] %v226
      %p235 = scmp.lt.s32.totalorder %s14, 1
      %s236 = scalar_select %p235, %s14, 1
      %s237 = smul.addr %s236, 8
      %s238 = smul.addr %s237, 4
      %s239 = scalar_lea.vmem %s3, %s238
      // Predicated region
      $region33: #{basic_block_forward.6} parent=31 // pred_check
        %p240 = pneg %p100
      $region34: #{basic_block_forward.6} parent=31 // pred_check_branch
        %242 = sbr.rel (%p240) target = $region36
      $region35: #{basic_block_forward.6} parent=31 // pred_region
        _
      $region36: #{basic_block_forward.6} parent=31 // pred_fallthru
        _
    $region32: #{basic_block_forward.6} parent=5 // pred_fallthru
      _
    %p243 = scmp.le.s32.totalorder 2, %s9
    // Predicated region
    $region37: #{basic_block_forward.6} parent=5 // pred_check
      %p244 = pneg %p243
    $region38: #{basic_block_forward.6} parent=5 // pred_check_branch
      %246 = sbr.rel (%p244) target = $region40
    $region39: #{basic_block_forward.6} parent=5 // pred_region
      %s247 = ssub.s32 %s9, 2
      // Predicated region
      $region41: #{basic_block_forward.6} parent=39 // pred_check
        %p248 = pneg %p106
      $region42: #{basic_block_forward.6} parent=39 // pred_check_branch
        %250 = sbr.rel (%p248) target = $region44
      $region43: #{basic_block_forward.6} parent=39 // pred_region
        %p251 = scmp.lt.s32.totalorder %s15, 1
        %s252 = scalar_select %p251, %s15, 1
        %s253 = smul.addr %s252, 8
        %s254 = smul.addr %s253, 4
        %s255 = scalar_lea.vmem %s3, %s254
      $region44: #{basic_block_forward.6} parent=39 // pred_fallthru
        _
    $region40: #{basic_block_forward.6} parent=5 // pred_fallthru
      _
  $region6: #{basic_block_forward.6} parent=0 // loop_footer
    %s13 = sadd.s32 1, %s9
  $region7: #{basic_block_forward.6} parent=0 // loop_footer_branch
    %8 = sbr.rel target = $region3
  $region8: #{basic_block_forward.6} parent=0 // loop_exit
    _

// kernel: basic_block_forward.5
$region0: #{basic_block_forward.5}
  #allocation0 [shape = 'u32[]', space=smem, size = 0x4, offset = 0x4, fixed_abs, tag = 'smem constant byte address 0x4 - core index']
  #allocation1 [shape = 'u32[72,128]{1,0:T(1,128)}', space=vmem, size = 0x9000, scoped, tag = 'internal scratch']
  %s0 = inlined_call_operand.vmem [shape: f32[2,36,9,8], index: 0, kind: input, shape index: {}]
  %s1 = inlined_call_operand.vmem [shape: bf16[9,8,128], index: 1, kind: input, shape index: {}]
  %s2 = inlined_call_operand.vmem [shape: bf16[2,64,128], index: 2, kind: output, shape index: {0}]
  %s3 = inlined_call_operand.vmem [shape: f32[2,8,128], index: 3, kind: output, shape index: {1}]
  %4 = xla_tuple %s2, %s3
  %s5 = sld [smem:[#allocation0]]
  $region49: #{basic_block_forward.5} parent=0
    _
  %s7 = ssub.s32 1, %s5
  %s8 = scalar_select 0, %s7, %s5
  loop: start=0, step=1, limit=4
  $region2: #{basic_block_forward.5} parent=0 // loop_pre_header
    _
  $region3: #{basic_block_forward.5} parent=0 // loop_header
    %s10 = sphi 0, %s14
    %p11 = scmp.ge.s32.totalorder %s10, 4
    %s17 = sphi 0, %s29
    %s18 = sphi 0, %s25
    %s19 = sphi 0, %s17
    %s20 = sphi 0, %s18
    %s21 = sphi 0, %s19
    %s22 = sphi 0, %s20
    %s32 = sphi 0, %s34
    %s35 = sphi 0, %s32
    %s36 = sphi 0, %s35
    %s52 = sphi 0, %s36
    %s58 = sphi 0, %s60
    %s61 = sphi 0, %s58
    %s62 = sphi 0, %s61
    %s78 = sphi 0, %s62
    %s86 = sphi 0, %s88
    %s89 = sphi 0, %s86
    %s90 = sphi 0, %s89
    %s106 = sphi 0, %s90
    %s114 = sphi 0, %s116
    %s117 = sphi 0, %s114
    %s118 = sphi 0, %s117
    %s134 = sphi 0, %s118
  $region4: #{basic_block_forward.5} parent=0 // loop_header_branch
    %13 = sbr.rel (%p11) target = $region8
  $region5: #{basic_block_forward.5} parent=0 // loop_body
    %s15 = ssub.s32 %s10, 1
    %s16 = ssub.s32 %s10, 2
    %s23 = sadd.s32 1, %s18
    %p24 = scmp.ge.s32.totalorder %s23, 2
    %s25 = scalar_select %p24, 0, %s23
    %s26 = sadd.s32 1, %s17
    %s27 = scalar_select %p24, %s26, %s17
    %p28 = scmp.ge.s32.totalorder %s27, 1
    %s29 = scalar_select %p28, 0, %s27
    %s30 = ssub.s32 %s18, %s25
    %p31 = scmp.eq.s32.totalorder %s30, 0
    %s33 = sadd.s32 %s32, 1
    %s34 = scalar_select %p31, %s32, %s33
    %p37 = pneg %p31
    %p38 = scmp.eq.s32.totalorder %s10, 1
    %p39 = por %p37, %p38
    %p40 = scmp.ne.s32.totalorder %s32, %s35
    %p41 = scmp.eq.s32.totalorder %s10, 0
    %p42 = por %p40, %p41
    %p43 = scmp.ne.s32.totalorder %s32, %s35
    %p44 = scmp.eq.s32.totalorder %s15, 1
    %p45 = por %p43, %p44
    %p46 = scmp.ne.s32.totalorder %s35, %s36
    %p47 = scmp.eq.s32.totalorder %s15, 0
    %p48 = por %p46, %p47
    %p49 = scmp.ne.s32.totalorder %s35, %s36
    %p50 = scmp.eq.s32.totalorder %s16, 1
    %p51 = por %p49, %p50
    %p53 = scmp.ne.s32.totalorder %s36, %s52
    %p54 = scmp.eq.s32.totalorder %s16, 0
    %p55 = por %p53, %p54
    %s56 = ssub.s32 %s17, %s29
    %p57 = scmp.eq.s32.totalorder %s56, 0
    %s59 = sadd.s32 %s58, 1
    %s60 = scalar_select %p57, %s58, %s59
    %p63 = pneg %p57
    %p64 = scmp.eq.s32.totalorder %s10, 1
    %p65 = por %p63, %p64
    %p66 = scmp.ne.s32.totalorder %s58, %s61
    %p67 = scmp.eq.s32.totalorder %s10, 0
    %p68 = por %p66, %p67
    %p69 = scmp.ne.s32.totalorder %s58, %s61
    %p70 = scmp.eq.s32.totalorder %s15, 1
    %p71 = por %p69, %p70
    %p72 = scmp.ne.s32.totalorder %s61, %s62
    %p73 = scmp.eq.s32.totalorder %s15, 0
    %p74 = por %p72, %p73
    %p75 = scmp.ne.s32.totalorder %s61, %s62
    %p76 = scmp.eq.s32.totalorder %s16, 1
    %p77 = por %p75, %p76
    %p79 = scmp.ne.s32.totalorder %s62, %s78
    %p80 = scmp.eq.s32.totalorder %s16, 0
    %p81 = por %p79, %p80
    %s82 = ssub.s32 %s18, %s25
    %s83 = ssub.s32 %s17, %s29
    %s84 = sor.u32 %s82, %s83
    %p85 = scmp.eq.s32.totalorder %s84, 0
    %s87 = sadd.s32 %s86, 1
    %s88 = scalar_select %p85, %s86, %s87
    %p91 = pneg %p85
    %p92 = scmp.eq.s32.totalorder %s10, 1
    %p93 = por %p91, %p92
    %p94 = scmp.ne.s32.totalorder %s86, %s89
    %p95 = scmp.eq.s32.totalorder %s10, 0
    %p96 = por %p94, %p95
    %p97 = scmp.ne.s32.totalorder %s86, %s89
    %p98 = scmp.eq.s32.totalorder %s15, 1
    %p99 = por %p97, %p98
    %p100 = scmp.ne.s32.totalorder %s89, %s90
    %p101 = scmp.eq.s32.totalorder %s15, 0
    %p102 = por %p100, %p101
    %p103 = scmp.ne.s32.totalorder %s89, %s90
    %p104 = scmp.eq.s32.totalorder %s16, 1
    %p105 = por %p103, %p104
    %p107 = scmp.ne.s32.totalorder %s90, %s106
    %p108 = scmp.eq.s32.totalorder %s16, 0
    %p109 = por %p107, %p108
    %s110 = ssub.s32 %s18, %s25
    %s111 = ssub.s32 %s17, %s29
    %s112 = sor.u32 %s110, %s111
    %p113 = scmp.eq.s32.totalorder %s112, 0
    %s115 = sadd.s32 %s114, 1
    %s116 = scalar_select %p113, %s114, %s115
    %p119 = pneg %p113
    %p120 = scmp.eq.s32.totalorder %s10, 1
    %p121 = por %p119, %p120
    %p122 = scmp.ne.s32.totalorder %s114, %s117
    %p123 = scmp.eq.s32.totalorder %s10, 0
    %p124 = por %p122, %p123
    %p125 = scmp.ne.s32.totalorder %s114, %s117
    %p126 = scmp.eq.s32.totalorder %s15, 1
    %p127 = por %p125, %p126
    %p128 = scmp.ne.s32.totalorder %s117, %s118
    %p129 = scmp.eq.s32.totalorder %s15, 0
    %p130 = por %p128, %p129
    %p131 = scmp.ne.s32.totalorder %s117, %s118
    %p132 = scmp.eq.s32.totalorder %s16, 1
    %p133 = por %p131, %p132
    %p135 = scmp.ne.s32.totalorder %s118, %s134
    %p136 = scmp.eq.s32.totalorder %s16, 0
    %p137 = por %p135, %p136
    %p138 = scmp.le.s32.totalorder 1, %s10
    %p139 = scmp.lt.s32.totalorder %s10, 3
    %p140 = pnand %p138, %p139
    %p141 = pneg %p140
    // Predicated region
    $region9: #{basic_block_forward.5} parent=5 // pred_check
      _
    $region10: #{basic_block_forward.5} parent=5 // pred_check_branch
      %143 = sbr.rel (%p140) target = $region12
    $region11: #{basic_block_forward.5} parent=5 // pred_region
      %s144 = ssub.s32 %s10, 1
      // Predicated region
      $region13: #{basic_block_forward.5} parent=11 // pred_check
        %p145 = pneg %p74
      $region14: #{basic_block_forward.5} parent=11 // pred_check_branch
        %147 = sbr.rel (%p145) target = $region16
      $region15: #{basic_block_forward.5} parent=11 // pred_region
        %p148 = scmp.lt.s32.totalorder %s19, 0
        %s149 = scalar_select %p148, %s19, 0
        %s150 = smul.addr %s149, 4
        %s151 = scalar_lea.vmem %s1, %s150
      $region16: #{basic_block_forward.5} parent=11 // pred_fallthru
        _
    $region12: #{basic_block_forward.5} parent=5 // pred_fallthru
      _
    %p152 = scmp.lt.s32.totalorder %s10, 2
    // Predicated region
    $region17: #{basic_block_forward.5} parent=5 // pred_check
      %p153 = pneg %p152
    $region18: #{basic_block_forward.5} parent=5 // pred_check_branch
      %155 = sbr.rel (%p153) target = $region20
    $region19: #{basic_block_forward.5} parent=5 // pred_region
      // Predicated region
      $region21: #{basic_block_forward.5} parent=19 // pred_check
        %p156 = pneg %p42
      $region22: #{basic_block_forward.5} parent=19 // pred_check_branch
        %158 = sbr.rel (%p156) target = $region24
      $region23: #{basic_block_forward.5} parent=19 // pred_region
        %p159 = scmp.lt.s32.totalorder %s18, 1
        %s160 = scalar_select %p159, %s18, 1
        %s161 = smul.addr %s160, 72
        %s162 = smul.addr %s161, 8
        %s163 = scalar_lea.vmem %s0, %s162
      $region24: #{basic_block_forward.5} parent=19 // pred_fallthru
        _
    $region20: #{basic_block_forward.5} parent=5 // pred_fallthru
      _
    %p164 = scmp.le.s32.totalorder 1, %s10
    %p165 = scmp.lt.s32.totalorder %s10, 3
    %p166 = pnand %p164, %p165
    %p167 = pneg %p166
    // Predicated region
    $region25: #{basic_block_forward.5} parent=5 // pred_check
      _
    $region26: #{basic_block_forward.5} parent=5 // pred_check_branch
      %169 = sbr.rel (%p166) target = $region28
    $region27: #{basic_block_forward.5} parent=5 // pred_region
      %s170 = ssub.s32 %s10, 1
      %p171 = scmp.lt.s32.totalorder %s20, 1
      %s172 = scalar_select %p171, %s20, 1
      %s173 = smul.addr %s172, 72
      %s174 = smul.addr %s173, 8
      %s175 = scalar_lea.vmem %s0, %s174
      %p176 = pneg %p48
      %p177 = pneg %p45
      %p178 = scmp.lt.s32.totalorder %s19, 0
      %s179 = scalar_select %p178, %s19, 0
      %s180 = smul.addr %s179, 4
      %s181 = scalar_lea.vmem %s1, %s180
      %p182 = pneg %p74
      %p183 = pneg %p71
      %p184 = pneg %p102
      %p185 = pneg %p99
      %p186 = scmp.lt.s32.totalorder %s20, 1
      %s187 = scalar_select %p186, %s20, 1
      %p188 = scmp.lt.s32.totalorder %s19, 0
      %s189 = scalar_select %p188, %s19, 0
      %s190 = smul.addr %s187, 8
      %s191 = sadd.s32 %s189, %s190
      %s192 = smul.addr %s191, 4
      %s193 = scalar_lea.vmem %s2, %s192
      %p194 = pneg %p130
      %p195 = pneg %p127
      %p196 = scmp.lt.s32.totalorder %s20, 1
      %s197 = scalar_select %p196, %s20, 1
      %p198 = scmp.lt.s32.totalorder %s19, 0
      %s199 = scalar_select %p198, %s19, 0
      %s200 = sadd.s32 %s199, %s197
      %s201 = smul.addr %s200, 8
      %s202 = scalar_lea.vmem %s3, %s201
      %p203 = scmp.lt.s32.totalorder %s20, 1
      %s204 = scalar_select %p203, %s20, 1
      %s205 = smul.addr %s204, 72
      %s206 = smul.addr %s205, 8
      %s207 = scalar_lea.vmem %s0, %s206
      %p208 = scmp.lt.s32.totalorder %s19, 0
      %s209 = scalar_select %p208, %s19, 0
      %s210 = smul.addr %s209, 4
      %s211 = scalar_lea.vmem %s1, %s210
      %p212 = scmp.lt.s32.totalorder %s20, 1
      %s213 = scalar_select %p212, %s20, 1
      %p214 = scmp.lt.s32.totalorder %s19, 0
      %s215 = scalar_select %p214, %s19, 0
      %s216 = smul.addr %s213, 8
      %s217 = sadd.s32 %s215, %s216
      %s218 = smul.addr %s217, 4
      %s219 = scalar_lea.vmem %s2, %s218
      %p220 = scmp.lt.s32.totalorder %s20, 1
      %s221 = scalar_select %p220, %s20, 1
      %p222 = scmp.lt.s32.totalorder %s19, 0
      %s223 = scalar_select %p222, %s19, 0
      %s224 = sadd.s32 %s223, %s221
      %s225 = smul.addr %s224, 8
      %s226 = scalar_lea.vmem %s3, %s225
      %v228 = vld [vmem:[%s207] sm:$0xff]
      %v229 = vld [vmem:[%s207 + $0x10] sm:$0xff]
      %v230 = vld [vmem:[%s207 + $0x20] sm:$0xff]
      %v231 = vld [vmem:[%s207 + $0x30] sm:$0xff]
      %v232 = vld [vmem:[%s207 + $0x40] sm:$0xff]
      %v233 = vld [vmem:[%s207 + $0x50] sm:$0xff]
      %v234 = vld [vmem:[%s207 + $0x60] sm:$0xff]
      %v235 = vld [vmem:[%s207 + $0x70] sm:$0xff]
      %v236 = vpack.c.bf16 %v229, %v228
      %v237 = vpack.c.bf16 %v231, %v230
      %v238 = vpack.c.bf16 %v233, %v232
      %v239 = vpack.c.bf16 %v235, %v234
      %v240 = vld [vmem:[%s211] sm:$0xf]
      %s241 = scalar_lea.vmem %s207, 144
      %v242 = vld [vmem:[%s241] sm:$0xff]
      %v243 = vld [vmem:[%s241 + $0x10] sm:$0xff]
      %v244 = vld [vmem:[%s241 + $0x20] sm:$0xff]
      %v245 = vld [vmem:[%s241 + $0x30] sm:$0xff]
      %v246 = vld [vmem:[%s241 + $0x40] sm:$0xff]
      %v247 = vld [vmem:[%s241 + $0x50] sm:$0xff]
      %v248 = vld [vmem:[%s241 + $0x60] sm:$0xff]
      %v249 = vld [vmem:[%s241 + $0x70] sm:$0xff]
      %v250 = vpack.c.bf16 %v243, %v242
      %v251 = vpack.c.bf16 %v245, %v244
      %v252 = vpack.c.bf16 %v247, %v246
      %v253 = vpack.c.bf16 %v249, %v248
      %s254 = scalar_lea.vmem %s211, 4
      %v255 = vld [vmem:[%s254] sm:$0xf]
      %vm256 = vcmask 64512
      %v258 = vsel %vm256, %v250, 0
      %v261 = vsel %vm256, %v251, 0
      %v264 = vsel %vm256, %v252, 0
      %v267 = vsel %vm256, %v253, 0
      %vm269 = vcmask 1043456
      %v271 = vsel %vm269, %v255, 0
      %273 = vmatpush.bf16.msra.mxu0 0
      %274 = vmatpush.bf16.msra.mxu0 0
      %275 = vmatpush.bf16.msra.mxu0 0
      %276 = vmatpush.bf16.msra.mxu0 0
      %277 = vmatpush.bf16.msra.mxu0 0
      %278 = vmatpush.bf16.msra.mxu0 0
      %279 = vmatpush.bf16.msra.mxu0 0
      %280 = vmatpush.bf16.msra.mxu0 %v271
      %281 = vmatmul.bf16.gmra.mxu0 %v258
      %v282 = vpop.f32.mrf.mxu0
      %v283 = vadd.f32 0.0, %v282
      %v284 = vpop.f32.mrf.mxu0
      %v285 = vadd.f32 0.0, %v284
      %286 = vmatmul.bf16.gmra.mxu0 %v261
      %v287 = vpop.f32.mrf.mxu0
      %v288 = vadd.f32 0.0, %v287
      %v289 = vpop.f32.mrf.mxu0
      %v290 = vadd.f32 0.0, %v289
      %291 = vmatmul.bf16.gmra.mxu0 %v264
      %v292 = vpop.f32.mrf.mxu0
      %v293 = vadd.f32 0.0, %v292
      %v294 = vpop.f32.mrf.mxu0
      %v295 = vadd.f32 0.0, %v294
      %296 = vmatmul.bf16.gmra.mxu0 %v267
      %v297 = vpop.f32.mrf.mxu0
      %v298 = vadd.f32 0.0, %v297
      %v299 = vpop.f32.mrf.mxu0
      %v300 = vadd.f32 0.0, %v299
      %301 = vdwg.mxu0
      %v303 = vsel %vm256, %v236, 0
      %v306 = vsel %vm256, %v237, 0
      %v309 = vsel %vm256, %v238, 0
      %v312 = vsel %vm256, %v239, 0
      %v315 = vsel %vm269, %v240, 0
      %317 = vmatpush.bf16.msra.mxu0 0
      %318 = vmatpush.bf16.msra.mxu0 0
      %319 = vmatpush.bf16.msra.mxu0 0
      %320 = vmatpush.bf16.msra.mxu0 0
      %321 = vmatpush.bf16.msra.mxu0 0
      %322 = vmatpush.bf16.msra.mxu0 0
      %323 = vmatpush.bf16.msra.mxu0 0
      %324 = vmatpush.bf16.msra.mxu0 %v315
      %325 = vmatmul.bf16.gmra.mxu0 %v303
      %v326 = vpop.f32.mrf.mxu0
      %v327 = vadd.f32 %v283, %v326
      %v328 = vpop.f32.mrf.mxu0
      %v329 = vadd.f32 %v285, %v328
      %330 = vmatmul.bf16.gmra.mxu0 %v306
      %v331 = vpop.f32.mrf.mxu0
      %v332 = vadd.f32 %v288, %v331
      %v333 = vpop.f32.mrf.mxu0
      %v334 = vadd.f32 %v290, %v333
      %335 = vmatmul.bf16.gmra.mxu0 %v309
      %v336 = vpop.f32.mrf.mxu0
      %v337 = vadd.f32 %v293, %v336
      %v338 = vpop.f32.mrf.mxu0
      %v339 = vadd.f32 %v295, %v338
      %340 = vmatmul.bf16.gmra.mxu0 %v312
      %v341 = vpop.f32.mrf.mxu0
      %v342 = vadd.f32 %v298, %v341
      %v343 = vpop.f32.mrf.mxu0
      %v344 = vadd.f32 %v300, %v343
      %345 = vdwg.mxu0
      %v346 = vld [vmem:[%s207 + $0x1] sm:$0xff]
      %v347 = vld [vmem:[%s207 + $0x11] sm:$0xff]
      %v348 = vld [vmem:[%s207 + $0x21] sm:$0xff]
      %v349 = vld [vmem:[%s207 + $0x31] sm:$0xff]
      %v350 = vld [vmem:[%s207 + $0x41] sm:$0xff]
      %v351 = vld [vmem:[%s207 + $0x51] sm:$0xff]
      %v352 = vld [vmem:[%s207 + $0x61] sm:$0xff]
      %v353 = vld [vmem:[%s207 + $0x71] sm:$0xff]
      %v354 = vpack.c.bf16 %v347, %v346
      %v355 = vpack.c.bf16 %v349, %v348
      %v356 = vpack.c.bf16 %v351, %v350
      %v357 = vpack.c.bf16 %v353, %v352
      %s358 = scalar_lea.vmem %s211, 8
      %v359 = vld [vmem:[%s358] sm:$0xf]
      %v361 = vsel %vm256, %v354, 0
      %v364 = vsel %vm256, %v355, 0
      %v367 = vsel %vm256, %v356, 0
      %v370 = vsel %vm256, %v357, 0
      %v373 = vsel %vm269, %v359, 0
      %375 = vmatpush.bf16.msra.mxu0 0
      %376 = vmatpush.bf16.msra.mxu0 0
      %377 = vmatpush.bf16.msra.mxu0 0
      %378 = vmatpush.bf16.msra.mxu0 0
      %379 = vmatpush.bf16.msra.mxu0 0
      %380 = vmatpush.bf16.msra.mxu0 0
      %381 = vmatpush.bf16.msra.mxu0 0
      %382 = vmatpush.bf16.msra.mxu0 %v373
      %383 = vmatmul.bf16.gmra.mxu0 %v361
      %v384 = vpop.f32.mrf.mxu0
      %v385 = vadd.f32 0.0, %v384
      %v386 = vpop.f32.mrf.mxu0
      %v387 = vadd.f32 0.0, %v386
      %388 = vmatmul.bf16.gmra.mxu0 %v364
      %v389 = vpop.f32.mrf.mxu0
      %v390 = vadd.f32 0.0, %v389
      %v391 = vpop.f32.mrf.mxu0
      %v392 = vadd.f32 0.0, %v391
      %393 = vmatmul.bf16.gmra.mxu0 %v367
      %v394 = vpop.f32.mrf.mxu0
      %v395 = vadd.f32 0.0, %v394
      %v396 = vpop.f32.mrf.mxu0
      %v397 = vadd.f32 0.0, %v396
      %398 = vmatmul.bf16.gmra.mxu0 %v370
      %v399 = vpop.f32.mrf.mxu0
      %v400 = vadd.f32 0.0, %v399
      %v401 = vpop.f32.mrf.mxu0
      %v402 = vadd.f32 0.0, %v401
      %403 = vdwg.mxu0
      %v404 = vadd.f32 %v327, %v385
      %v405 = vadd.f32 %v329, %v387
      %v406 = vadd.f32 %v332, %v390
      %v407 = vadd.f32 %v334, %v392
      %v408 = vadd.f32 %v337, %v395
      %v409 = vadd.f32 %v339, %v397
      %v410 = vadd.f32 %v342, %v400
      %v411 = vadd.f32 %v344, %v402
      %s412 = scalar_lea.vmem %s207, 288
      %v413 = vld [vmem:[%s412] sm:$0xff]
      %v414 = vld [vmem:[%s412 + $0x10] sm:$0xff]
      %v415 = vld [vmem:[%s412 + $0x20] sm:$0xff]
      %v416 = vld [vmem:[%s412 + $0x30] sm:$0xff]
      %v417 = vld [vmem:[%s412 + $0x40] sm:$0xff]
      %v418 = vld [vmem:[%s412 + $0x50] sm:$0xff]
      %v419 = vld [vmem:[%s412 + $0x60] sm:$0xff]
      %v420 = vld [vmem:[%s412 + $0x70] sm:$0xff]
      %v421 = vpack.c.bf16 %v414, %v413
      %v422 = vpack.c.bf16 %v416, %v415
      %v423 = vpack.c.bf16 %v418, %v417
      %v424 = vpack.c.bf16 %v420, %v419
      %s425 = scalar_lea.vmem %s211, 12
      %v426 = vld [vmem:[%s425] sm:$0xf]
      %v428 = vsel %vm256, %v421, 0
      %v431 = vsel %vm256, %v422, 0
      %v434 = vsel %vm256, %v423, 0
      %v437 = vsel %vm256, %v424, 0
      %v440 = vsel %vm269, %v426, 0
      %442 = vmatpush.bf16.msra.mxu0 0
      %443 = vmatpush.bf16.msra.mxu0 0
      %444 = vmatpush.bf16.msra.mxu0 0
      %445 = vmatpush.bf16.msra.mxu0 0
      %446 = vmatpush.bf16.msra.mxu0 0
      %447 = vmatpush.bf16.msra.mxu0 0
      %448 = vmatpush.bf16.msra.mxu0 0
      %449 = vmatpush.bf16.msra.mxu0 %v440
      %450 = vmatmul.bf16.gmra.mxu0 %v428
      %v451 = vpop.f32.mrf.mxu0
      %v452 = vadd.f32 0.0, %v451
      %v453 = vpop.f32.mrf.mxu0
      %v454 = vadd.f32 0.0, %v453
      %455 = vmatmul.bf16.gmra.mxu0 %v431
      %v456 = vpop.f32.mrf.mxu0
      %v457 = vadd.f32 0.0, %v456
      %v458 = vpop.f32.mrf.mxu0
      %v459 = vadd.f32 0.0, %v458
      %460 = vmatmul.bf16.gmra.mxu0 %v434
      %v461 = vpop.f32.mrf.mxu0
      %v462 = vadd.f32 0.0, %v461
      %v463 = vpop.f32.mrf.mxu0
      %v464 = vadd.f32 0.0, %v463
      %465 = vmatmul.bf16.gmra.mxu0 %v437
      %v466 = vpop.f32.mrf.mxu0
      %v467 = vadd.f32 0.0, %v466
      %v468 = vpop.f32.mrf.mxu0
      %v469 = vadd.f32 0.0, %v468
      %470 = vdwg.mxu0
      %v471 = vadd.f32 %v404, %v452
      %v472 = vadd.f32 %v405, %v454
      %v473 = vadd.f32 %v406, %v457
      %v474 = vadd.f32 %v407, %v459
      %v475 = vadd.f32 %v408, %v462
      %v476 = vadd.f32 %v409, %v464
      %v477 = vadd.f32 %v410, %v467
      %v478 = vadd.f32 %v411, %v469
      %s479 = scalar_lea.vmem %s207, 432
      %v480 = vld [vmem:[%s479] sm:$0xff]
      %v481 = vld [vmem:[%s479 + $0x10] sm:$0xff]
      %v482 = vld [vmem:[%s479 + $0x20] sm:$0xff]
      %v483 = vld [vmem:[%s479 + $0x30] sm:$0xff]
      %v484 = vld [vmem:[%s479 + $0x40] sm:$0xff]
      %v485 = vld [vmem:[%s479 + $0x50] sm:$0xff]
      %v486 = vld [vmem:[%s479 + $0x60] sm:$0xff]
      %v487 = vld [vmem:[%s479 + $0x70] sm:$0xff]
      %v488 = vpack.c.bf16 %v481, %v480
      %v489 = vpack.c.bf16 %v483, %v482
      %v490 = vpack.c.bf16 %v485, %v484
      %v491 = vpack.c.bf16 %v487, %v486
      %s492 = scalar_lea.vmem %s211, 16
      %v493 = vld [vmem:[%s492] sm:$0xf]
      %v495 = vsel %vm256, %v488, 0
      %v498 = vsel %vm256, %v489, 0
      %v501 = vsel %vm256, %v490, 0
      %v504 = vsel %vm256, %v491, 0
      %v507 = vsel %vm269, %v493, 0
      %509 = vmatpush.bf16.msra.mxu0 0
      %510 = vmatpush.bf16.msra.mxu0 0
      %511 = vmatpush.bf16.msra.mxu0 0
      %512 = vmatpush.bf16.msra.mxu0 0
      %513 = vmatpush.bf16.msra.mxu0 0
      %514 = vmatpush.bf16.msra.mxu0 0
      %515 = vmatpush.bf16.msra.mxu0 0
      %516 = vmatpush.bf16.msra.mxu0 %v507
      %517 = vmatmul.bf16.gmra.mxu0 %v495
      %v518 = vpop.f32.mrf.mxu0
      %v519 = vadd.f32 0.0, %v518
      %v520 = vpop.f32.mrf.mxu0
      %v521 = vadd.f32 0.0, %v520
      %522 = vmatmul.bf16.gmra.mxu0 %v498
      %v523 = vpop.f32.mrf.mxu0
      %v524 = vadd.f32 0.0, %v523
      %v525 = vpop.f32.mrf.mxu0
      %v526 = vadd.f32 0.0, %v525
      %527 = vmatmul.bf16.gmra.mxu0 %v501
      %v528 = vpop.f32.mrf.mxu0
      %v529 = vadd.f32 0.0, %v528
      %v530 = vpop.f32.mrf.mxu0
      %v531 = vadd.f32 0.0, %v530
      %532 = vmatmul.bf16.gmra.mxu0 %v504
      %v533 = vpop.f32.mrf.mxu0
      %v534 = vadd.f32 0.0, %v533
      %v535 = vpop.f32.mrf.mxu0
      %v536 = vadd.f32 0.0, %v535
      %537 = vdwg.mxu0
      %v538 = vadd.f32 %v471, %v519
      %v539 = vadd.f32 %v472, %v521
      %v540 = vadd.f32 %v473, %v524
      %v541 = vadd.f32 %v474, %v526
      %v542 = vadd.f32 %v475, %v529
      %v543 = vadd.f32 %v476, %v531
      %v544 = vadd.f32 %v477, %v534
      %v545 = vadd.f32 %v478, %v536
      %v546 = vld [vmem:[%s412 + $0x1] sm:$0xff]
      %v547 = vld [vmem:[%s412 + $0x11] sm:$0xff]
      %v548 = vld [vmem:[%s412 + $0x21] sm:$0xff]
      %v549 = vld [vmem:[%s412 + $0x31] sm:$0xff]
      %v550 = vld [vmem:[%s412 + $0x41] sm:$0xff]
      %v551 = vld [vmem:[%s412 + $0x51] sm:$0xff]
      %v552 = vld [vmem:[%s412 + $0x61] sm:$0xff]
      %v553 = vld [vmem:[%s412 + $0x71] sm:$0xff]
      %v554 = vpack.c.bf16 %v547, %v546
      %v555 = vpack.c.bf16 %v549, %v548
      %v556 = vpack.c.bf16 %v551, %v550
      %v557 = vpack.c.bf16 %v553, %v552
      %s558 = scalar_lea.vmem %s211, 20
      %v559 = vld [vmem:[%s558] sm:$0xf]
      %v561 = vsel %vm256, %v554, 0
      %v564 = vsel %vm256, %v555, 0
      %v567 = vsel %vm256, %v556, 0
      %v570 = vsel %vm256, %v557, 0
      %v573 = vsel %vm269, %v559, 0
      %575 = vmatpush.bf16.msra.mxu0 0
      %576 = vmatpush.bf16.msra.mxu0 0
      %577 = vmatpush.bf16.msra.mxu0 0
      %578 = vmatpush.bf16.msra.mxu0 0
      %579 = vmatpush.bf16.msra.mxu0 0
      %580 = vmatpush.bf16.msra.mxu0 0
      %581 = vmatpush.bf16.msra.mxu0 0
      %582 = vmatpush.bf16.msra.mxu0 %v573
      %583 = vmatmul.bf16.gmra.mxu0 %v561
      %v584 = vpop.f32.mrf.mxu0
      %v585 = vadd.f32 0.0, %v584
      %v586 = vpop.f32.mrf.mxu0
      %v587 = vadd.f32 0.0, %v586
      %588 = vmatmul.bf16.gmra.mxu0 %v564
      %v589 = vpop.f32.mrf.mxu0
      %v590 = vadd.f32 0.0, %v589
      %v591 = vpop.f32.mrf.mxu0
      %v592 = vadd.f32 0.0, %v591
      %593 = vmatmul.bf16.gmra.mxu0 %v567
      %v594 = vpop.f32.mrf.mxu0
      %v595 = vadd.f32 0.0, %v594
      %v596 = vpop.f32.mrf.mxu0
      %v597 = vadd.f32 0.0, %v596
      %598 = vmatmul.bf16.gmra.mxu0 %v570
      %v599 = vpop.f32.mrf.mxu0
      %v600 = vadd.f32 0.0, %v599
      %v601 = vpop.f32.mrf.mxu0
      %v602 = vadd.f32 0.0, %v601
      %603 = vdwg.mxu0
      %v604 = vadd.f32 %v538, %v585
      %v605 = vadd.f32 %v539, %v587
      %v606 = vadd.f32 %v540, %v590
      %v607 = vadd.f32 %v541, %v592
      %v608 = vadd.f32 %v542, %v595
      %v609 = vadd.f32 %v543, %v597
      %v610 = vadd.f32 %v544, %v600
      %v611 = vadd.f32 %v545, %v602
      %s612 = scalar_lea.vmem %s207, 16
      %v613 = vld [vmem:[%s612] sm:$0xff]
      %v614 = vld [vmem:[%s612 + $0x10] sm:$0xff]
      %v615 = vld [vmem:[%s612 + $0x20] sm:$0xff]
      %v616 = vld [vmem:[%s612 + $0x30] sm:$0xff]
      %v617 = vld [vmem:[%s612 + $0x40] sm:$0xff]
      %v618 = vld [vmem:[%s612 + $0x50] sm:$0xff]
      %v619 = vld [vmem:[%s612 + $0x60] sm:$0xff]
      %v620 = vld [vmem:[%s612 + $0x70] sm:$0xff]
      %v621 = vpack.c.bf16 %v614, %v613
      %v622 = vpack.c.bf16 %v616, %v615
      %v623 = vpack.c.bf16 %v618, %v617
      %v624 = vpack.c.bf16 %v620, %v619
      %s625 = scalar_lea.vmem %s211, 24
      %v626 = vld [vmem:[%s625] sm:$0xf]
      %v628 = vsel %vm256, %v621, 0
      %v631 = vsel %vm256, %v622, 0
      %v634 = vsel %vm256, %v623, 0
      %v637 = vsel %vm256, %v624, 0
      %v640 = vsel %vm269, %v626, 0
      %642 = vmatpush.bf16.msra.mxu0 0
      %643 = vmatpush.bf16.msra.mxu0 0
      %644 = vmatpush.bf16.msra.mxu0 0
      %645 = vmatpush.bf16.msra.mxu0 0
      %646 = vmatpush.bf16.msra.mxu0 0
      %647 = vmatpush.bf16.msra.mxu0 0
      %648 = vmatpush.bf16.msra.mxu0 0
      %649 = vmatpush.bf16.msra.mxu0 %v640
      %650 = vmatmul.bf16.gmra.mxu0 %v628
      %v651 = vpop.f32.mrf.mxu0
      %v652 = vadd.f32 0.0, %v651
      %v653 = vpop.f32.mrf.mxu0
      %v654 = vadd.f32 0.0, %v653
      %655 = vmatmul.bf16.gmra.mxu0 %v631
      %v656 = vpop.f32.mrf.mxu0
      %v657 = vadd.f32 0.0, %v656
      %v658 = vpop.f32.mrf.mxu0
      %v659 = vadd.f32 0.0, %v658
      %660 = vmatmul.bf16.gmra.mxu0 %v634
      %v661 = vpop.f32.mrf.mxu0
      %v662 = vadd.f32 0.0, %v661
      %v663 = vpop.f32.mrf.mxu0
      %v664 = vadd.f32 0.0, %v663
      %665 = vmatmul.bf16.gmra.mxu0 %v637
      %v666 = vpop.f32.mrf.mxu0
      %v667 = vadd.f32 0.0, %v666
      %v668 = vpop.f32.mrf.mxu0
      %v669 = vadd.f32 0.0, %v668
      %670 = vdwg.mxu0
      %v671 = vadd.f32 %v604, %v652
      %v672 = vadd.f32 %v605, %v654
      %v673 = vadd.f32 %v606, %v657
      %v674 = vadd.f32 %v607, %v659
      %v675 = vadd.f32 %v608, %v662
      %v676 = vadd.f32 %v609, %v664
      %v677 = vadd.f32 %v610, %v667
      %v678 = vadd.f32 %v611, %v669
      %s679 = scalar_lea.vmem %s207, 160
      %v680 = vld [vmem:[%s679] sm:$0xff]
      %v681 = vld [vmem:[%s679 + $0x10] sm:$0xff]
      %v682 = vld [vmem:[%s679 + $0x20] sm:$0xff]
      %v683 = vld [vmem:[%s679 + $0x30] sm:$0xff]
      %v684 = vld [vmem:[%s679 + $0x40] sm:$0xff]
      %v685 = vld [vmem:[%s679 + $0x50] sm:$0xff]
      %v686 = vld [vmem:[%s679 + $0x60] sm:$0xff]
      %v687 = vld [vmem:[%s679 + $0x70] sm:$0xff]
      %v688 = vpack.c.bf16 %v681, %v680
      %v689 = vpack.c.bf16 %v683, %v682
      %v690 = vpack.c.bf16 %v685, %v684
      %v691 = vpack.c.bf16 %v687, %v686
      %s692 = scalar_lea.vmem %s211, 28
      %v693 = vld [vmem:[%s692] sm:$0xf]
      %v695 = vsel %vm256, %v688, 0
      %v698 = vsel %vm256, %v689, 0
      %v701 = vsel %vm256, %v690, 0
      %v704 = vsel %vm256, %v691, 0
      %v707 = vsel %vm269, %v693, 0
      %709 = vmatpush.bf16.msra.mxu0 0
      %710 = vmatpush.bf16.msra.mxu0 0
      %711 = vmatpush.bf16.msra.mxu0 0
      %712 = vmatpush.bf16.msra.mxu0 0
      %713 = vmatpush.bf16.msra.mxu0 0
      %714 = vmatpush.bf16.msra.mxu0 0
      %715 = vmatpush.bf16.msra.mxu0 0
      %716 = vmatpush.bf16.msra.mxu0 %v707
      %717 = vmatmul.bf16.gmra.mxu0 %v695
      %v718 = vpop.f32.mrf.mxu0
      %v719 = vadd.f32 0.0, %v718
      %v720 = vpop.f32.mrf.mxu0
      %v721 = vadd.f32 0.0, %v720
      %722 = vmatmul.bf16.gmra.mxu0 %v698
      %v723 = vpop.f32.mrf.mxu0
      %v724 = vadd.f32 0.0, %v723
      %v725 = vpop.f32.mrf.mxu0
      %v726 = vadd.f32 0.0, %v725
      %727 = vmatmul.bf16.gmra.mxu0 %v701
      %v728 = vpop.f32.mrf.mxu0
      %v729 = vadd.f32 0.0, %v728
      %v730 = vpop.f32.mrf.mxu0
      %v731 = vadd.f32 0.0, %v730
      %732 = vmatmul.bf16.gmra.mxu0 %v704
      %v733 = vpop.f32.mrf.mxu0
      %v734 = vadd.f32 0.0, %v733
      %v735 = vpop.f32.mrf.mxu0
      %v736 = vadd.f32 0.0, %v735
      %737 = vdwg.mxu0
      %v738 = vadd.f32 %v671, %v719
      %v739 = vadd.f32 %v672, %v721
      %v740 = vadd.f32 %v673, %v724
      %v741 = vadd.f32 %v674, %v726
      %v742 = vadd.f32 %v675, %v729
      %v743 = vadd.f32 %v676, %v731
      %v744 = vadd.f32 %v677, %v734
      %v745 = vadd.f32 %v678, %v736
      %v746 = vld [vmem:[%s612 + $0x1] sm:$0xff]
      %v747 = vld [vmem:[%s612 + $0x11] sm:$0xff]
      %v748 = vld [vmem:[%s612 + $0x21] sm:$0xff]
      %v749 = vld [vmem:[%s612 + $0x31] sm:$0xff]
      %v750 = vld [vmem:[%s612 + $0x41] sm:$0xff]
      %v751 = vld [vmem:[%s612 + $0x51] sm:$0xff]
      %v752 = vld [vmem:[%s612 + $0x61] sm:$0xff]
      %v753 = vld [vmem:[%s612 + $0x71] sm:$0xff]
      %v754 = vpack.c.bf16 %v747, %v746
      %v755 = vpack.c.bf16 %v749, %v748
      %v756 = vpack.c.bf16 %v751, %v750
      %v757 = vpack.c.bf16 %v753, %v752
      %s758 = scalar_lea.vmem %s211, 32
      %v759 = vld [vmem:[%s758] sm:$0xf]
      %v761 = vsel %vm256, %v754, 0
      %v764 = vsel %vm256, %v755, 0
      %v767 = vsel %vm256, %v756, 0
      %v770 = vsel %vm256, %v757, 0
      %v773 = vsel %vm269, %v759, 0
      %775 = vmatpush.bf16.msra.mxu0 0
      %776 = vmatpush.bf16.msra.mxu0 0
      %777 = vmatpush.bf16.msra.mxu0 0
      %778 = vmatpush.bf16.msra.mxu0 0
      %779 = vmatpush.bf16.msra.mxu0 0
      %780 = vmatpush.bf16.msra.mxu0 0
      %781 = vmatpush.bf16.msra.mxu0 0
      %782 = vmatpush.bf16.msra.mxu0 %v773
      %783 = vmatmul.bf16.gmra.mxu0 %v761
      %v784 = vpop.f32.mrf.mxu0
      %v785 = vadd.f32 0.0, %v784
      %v786 = vpop.f32.mrf.mxu0
      %v787 = vadd.f32 0.0, %v786
      %788 = vmatmul.bf16.gmra.mxu0 %v764
      %v789 = vpop.f32.mrf.mxu0
      %v790 = vadd.f32 0.0, %v789
      %v791 = vpop.f32.mrf.mxu0
      %v792 = vadd.f32 0.0, %v791
      %793 = vmatmul.bf16.gmra.mxu0 %v767
      %v794 = vpop.f32.mrf.mxu0
      %v795 = vadd.f32 0.0, %v794
      %v796 = vpop.f32.mrf.mxu0
      %v797 = vadd.f32 0.0, %v796
      %798 = vmatmul.bf16.gmra.mxu0 %v770
      %v799 = vpop.f32.mrf.mxu0
      %v800 = vadd.f32 0.0, %v799
      %v801 = vpop.f32.mrf.mxu0
      %v802 = vadd.f32 0.0, %v801
      %803 = vdwg.mxu0
      %v804 = vadd.f32 %v738, %v785
      %v805 = vadd.f32 %v739, %v787
      %v806 = vadd.f32 %v740, %v790
      %v807 = vadd.f32 %v741, %v792
      %v808 = vadd.f32 %v742, %v795
      %v809 = vadd.f32 %v743, %v797
      %v810 = vadd.f32 %v744, %v800
      %v811 = vadd.f32 %v745, %v802
      %v812 = vpack.c.bf16 %v804, %v804
      %v813 = vpack.c.bf16 %v805, %v805
      %v814 = vpack.c.bf16 %v806, %v806
      %v815 = vpack.c.bf16 %v807, %v807
      %v816 = vpack.c.bf16 %v808, %v808
      %v817 = vpack.c.bf16 %v809, %v809
      %v818 = vpack.c.bf16 %v810, %v810
      %v819 = vpack.c.bf16 %v811, %v811
      %820 = vst [vmem:[%s219] sm:$0xf] %v812
      %821 = vst [vmem:[%s219 + $0x4] sm:$0xf] %v813
      %822 = vst [vmem:[%s219 + $0x8] sm:$0xf] %v814
      %823 = vst [vmem:[%s219 + $0xc] sm:$0xf] %v815
      %824 = vst [vmem:[%s219 + $0x10] sm:$0xf] %v816
      %825 = vst [vmem:[%s219 + $0x14] sm:$0xf] %v817
      %826 = vst [vmem:[%s219 + $0x18] sm:$0xf] %v818
      %827 = vst [vmem:[%s219 + $0x1c] sm:$0xf] %v819
      %v828 = vadd.f32 %v804, %v805
      %v829 = vadd.f32 %v828, %v806
      %v830 = vadd.f32 %v829, %v807
      %v831 = vadd.f32 %v830, %v808
      %v832 = vadd.f32 %v831, %v809
      %v833 = vadd.f32 %v832, %v810
      %v834 = vadd.f32 %v833, %v811
      %v835 = vrot.slane %v834, 4
      %v836 = vadd.f32 %v834, %v835
      %v837 = vrot.slane %v836, 2
      %v838 = vadd.f32 %v836, %v837
      %v839 = vrot.slane %v838, 1
      %v840 = vadd.f32 %v838, %v839
      %v841 = vmul.f32 %v804, %v804
      %v842 = vmul.f32 %v805, %v805
      %v843 = vmul.f32 %v806, %v806
      %v844 = vmul.f32 %v807, %v807
      %v845 = vmul.f32 %v808, %v808
      %v846 = vmul.f32 %v809, %v809
      %v847 = vmul.f32 %v810, %v810
      %v848 = vmul.f32 %v811, %v811
      %v849 = vadd.f32 %v841, %v842
      %v850 = vadd.f32 %v849, %v843
      %v851 = vadd.f32 %v850, %v844
      %v852 = vadd.f32 %v851, %v845
      %v853 = vadd.f32 %v852, %v846
      %v854 = vadd.f32 %v853, %v847
      %v855 = vadd.f32 %v854, %v848
      %v856 = vrot.slane %v855, 4
      %v857 = vadd.f32 %v855, %v856
      %v858 = vrot.slane %v857, 2
      %v859 = vadd.f32 %v857, %v858
      %v860 = vrot.slane %v859, 1
      %v861 = vadd.f32 %v859, %v860
      %vm862 = vcmask 1040384
      %v863 = vsel %vm862, %v840, %v861
      %vm864 = vcmask 1041408
      %v865 = vsel %vm864, %v863, 0.0
      %866 = vst [vmem:[%s226] sm:$0xff] %v865
      %p867 = scmp.lt.s32.totalorder %s20, 1
      %s868 = scalar_select %p867, %s20, 1
      %p869 = scmp.lt.s32.totalorder %s19, 0
      %s870 = scalar_select %p869, %s19, 0
      %s871 = smul.addr %s868, 8
      %s872 = sadd.s32 %s870, %s871
      %s873 = smul.addr %s872, 4
      %s874 = scalar_lea.vmem %s2, %s873
      %p875 = scmp.lt.s32.totalorder %s20, 1
      %s876 = scalar_select %p875, %s20, 1
      %p877 = scmp.lt.s32.totalorder %s19, 0
      %s878 = scalar_select %p877, %s19, 0
      %s879 = sadd.s32 %s878, %s876
      %s880 = smul.addr %s879, 8
      %s881 = scalar_lea.vmem %s3, %s880
      // Predicated region
      $region29: #{basic_block_forward.5} parent=27 // pred_check
        %p882 = pneg %p99
      $region30: #{basic_block_forward.5} parent=27 // pred_check_branch
        %884 = sbr.rel (%p882) target = $region32
      $region31: #{basic_block_forward.5} parent=27 // pred_region
        _
      $region32: #{basic_block_forward.5} parent=27 // pred_fallthru
        _
      // Predicated region
      $region33: #{basic_block_forward.5} parent=27 // pred_check
        %p885 = pneg %p127
      $region34: #{basic_block_forward.5} parent=27 // pred_check_branch
        %887 = sbr.rel (%p885) target = $region36
      $region35: #{basic_block_forward.5} parent=27 // pred_region
        _
      $region36: #{basic_block_forward.5} parent=27 // pred_fallthru
        _
    $region28: #{basic_block_forward.5} parent=5 // pred_fallthru
      _
    %p888 = scmp.le.s32.totalorder 2, %s10
    // Predicated region
    $region37: #{basic_block_forward.5} parent=5 // pred_check
      %p889 = pneg %p888
    $region38: #{basic_block_forward.5} parent=5 // pred_check_branch
      %891 = sbr.rel (%p889) target = $region40
    $region39: #{basic_block_forward.5} parent=5 // pred_region
      %s892 = ssub.s32 %s10, 2
      // Predicated region
      $region41: #{basic_block_forward.5} parent=39 // pred_check
        %p893 = pneg %p105
      $region42: #{basic_block_forward.5} parent=39 // pred_check_branch
        %895 = sbr.rel (%p893) target = $region44
      $region43: #{basic_block_forward.5} parent=39 // pred_region
        %p896 = scmp.lt.s32.totalorder %s22, 1
        %s897 = scalar_select %p896, %s22, 1
        %p898 = scmp.lt.s32.totalorder %s21, 0
        %s899 = scalar_select %p898, %s21, 0
        %s900 = smul.addr %s897, 8
        %s901 = sadd.s32 %s899, %s900
        %s902 = smul.addr %s901, 4
        %s903 = scalar_lea.vmem %s2, %s902
      $region44: #{basic_block_forward.5} parent=39 // pred_fallthru
        _
      // Predicated region
      $region45: #{basic_block_forward.5} parent=39 // pred_check
        %p904 = pneg %p133
      $region46: #{basic_block_forward.5} parent=39 // pred_check_branch
        %906 = sbr.rel (%p904) target = $region48
      $region47: #{basic_block_forward.5} parent=39 // pred_region
        %p907 = scmp.lt.s32.totalorder %s22, 1
        %s908 = scalar_select %p907, %s22, 1
        %p909 = scmp.lt.s32.totalorder %s21, 0
        %s910 = scalar_select %p909, %s21, 0
        %s911 = sadd.s32 %s910, %s908
        %s912 = smul.addr %s911, 8
        %s913 = scalar_lea.vmem %s3, %s912
      $region48: #{basic_block_forward.5} parent=39 // pred_fallthru
        _
    $region40: #{basic_block_forward.5} parent=5 // pred_fallthru
      _
  $region6: #{basic_block_forward.5} parent=0 // loop_footer
    %s14 = sadd.s32 1, %s10
  $region7: #{basic_block_forward.5} parent=0 // loop_footer_branch
    %9 = sbr.rel target = $region3
  $region8: #{basic_block_forward.5} parent=0 // loop_exit
    _

// kernel: basic_block_forward.9
$region0: #{basic_block_forward.9}
  #allocation0 [shape = 'u32[]', space=smem, size = 0x4, offset = 0x4, fixed_abs, tag = 'smem constant byte address 0x4 - core index']
  #allocation1 [shape = 'u32[72,128]{1,0:T(1,128)}', space=vmem, size = 0x9000, scoped, tag = 'internal scratch']
  %s0 = inlined_call_operand.vmem [shape: bf16[2,64,128], index: 0, kind: input, shape index: {}]
  %s1 = inlined_call_operand.vmem [shape: f32[1,128], index: 1, kind: input, shape index: {}]
  %s2 = inlined_call_operand.vmem [shape: f32[1,128], index: 2, kind: input, shape index: {}]
  %s3 = inlined_call_operand.vmem [shape: bf16[2,64,128], index: 3, kind: input, shape index: {}]
  %s4 = inlined_call_operand.vmem [shape: f32[1,128], index: 4, kind: input, shape index: {}]
  %s5 = inlined_call_operand.vmem [shape: f32[1,128], index: 5, kind: input, shape index: {}]
  %s6 = inlined_call_operand.vmem [shape: f32[2,64,128], index: 6, kind: output, shape index: {}]
  %s7 = sld [smem:[#allocation0]]
  $region57: #{basic_block_forward.9} parent=0
    _
  %s9 = ssub.s32 1, %s7
  %s10 = scalar_select 0, %s9, %s7
  loop: start=0, step=1, limit=4
  $region2: #{basic_block_forward.9} parent=0 // loop_pre_header
    _
  $region3: #{basic_block_forward.9} parent=0 // loop_header
    %s12 = sphi 0, %s16
    %p13 = scmp.ge.s32.totalorder %s12, 4
    %s22 = sphi 0, %s24
    %s25 = sphi 0, %s22
    %s26 = sphi 0, %s25
    %s42 = sphi 0, %s26
    %s46 = sphi 0, %s46
    %s48 = sphi 0, %s46
    %s49 = sphi 0, %s48
    %s63 = sphi 0, %s49
    %s67 = sphi 0, %s67
    %s69 = sphi 0, %s67
    %s70 = sphi 0, %s69
    %s84 = sphi 0, %s70
    %s90 = sphi 0, %s92
    %s93 = sphi 0, %s90
    %s94 = sphi 0, %s93
    %s110 = sphi 0, %s94
    %s114 = sphi 0, %s114
    %s116 = sphi 0, %s114
    %s117 = sphi 0, %s116
    %s131 = sphi 0, %s117
    %s135 = sphi 0, %s135
    %s137 = sphi 0, %s135
    %s138 = sphi 0, %s137
    %s152 = sphi 0, %s138
    %s158 = sphi 0, %s160
    %s161 = sphi 0, %s158
    %s162 = sphi 0, %s161
    %s178 = sphi 0, %s162
  $region4: #{basic_block_forward.9} parent=0 // loop_header_branch
    %15 = sbr.rel (%p13) target = $region8
  $region5: #{basic_block_forward.9} parent=0 // loop_body
    %s17 = ssub.s32 %s12, 1
    %s18 = ssub.s32 %s12, 2
    %s19 = sadd.s32 %s12, 1
    %s20 = ssub.s32 %s12, %s19
    %p21 = scmp.eq.s32.totalorder %s20, 0
    %s23 = sadd.s32 %s22, 1
    %s24 = scalar_select %p21, %s22, %s23
    %p27 = pneg %p21
    %p28 = scmp.eq.s32.totalorder %s12, 1
    %p29 = por %p27, %p28
    %p30 = scmp.ne.s32.totalorder %s22, %s25
    %p31 = scmp.eq.s32.totalorder %s12, 0
    %p32 = por %p30, %p31
    %p33 = scmp.ne.s32.totalorder %s22, %s25
    %p34 = scmp.eq.s32.totalorder %s17, 1
    %p35 = por %p33, %p34
    %p36 = scmp.ne.s32.totalorder %s25, %s26
    %p37 = scmp.eq.s32.totalorder %s17, 0
    %p38 = por %p36, %p37
    %p39 = scmp.ne.s32.totalorder %s25, %s26
    %p40 = scmp.eq.s32.totalorder %s18, 1
    %p41 = por %p39, %p40
    %p43 = scmp.ne.s32.totalorder %s26, %s42
    %p44 = scmp.eq.s32.totalorder %s18, 0
    %p45 = por %p43, %p44
    %s47 = sadd.s32 %s46, 1
    %p50 = scmp.eq.s32.totalorder %s12, 1
    %p51 = scmp.ne.s32.totalorder %s46, %s48
    %p52 = scmp.eq.s32.totalorder %s12, 0
    %p53 = por %p51, %p52
    %p54 = scmp.ne.s32.totalorder %s46, %s48
    %p55 = scmp.eq.s32.totalorder %s17, 1
    %p56 = por %p54, %p55
    %p57 = scmp.ne.s32.totalorder %s48, %s49
    %p58 = scmp.eq.s32.totalorder %s17, 0
    %p59 = por %p57, %p58
    %p60 = scmp.ne.s32.totalorder %s48, %s49
    %p61 = scmp.eq.s32.totalorder %s18, 1
    %p62 = por %p60, %p61
    %p64 = scmp.ne.s32.totalorder %s49, %s63
    %p65 = scmp.eq.s32.totalorder %s18, 0
    %p66 = por %p64, %p65
    %s68 = sadd.s32 %s67, 1
    %p71 = scmp.eq.s32.totalorder %s12, 1
    %p72 = scmp.ne.s32.totalorder %s67, %s69
    %p73 = scmp.eq.s32.totalorder %s12, 0
    %p74 = por %p72, %p73
    %p75 = scmp.ne.s32.totalorder %s67, %s69
    %p76 = scmp.eq.s32.totalorder %s17, 1
    %p77 = por %p75, %p76
    %p78 = scmp.ne.s32.totalorder %s69, %s70
    %p79 = scmp.eq.s32.totalorder %s17, 0
    %p80 = por %p78, %p79
    %p81 = scmp.ne.s32.totalorder %s69, %s70
    %p82 = scmp.eq.s32.totalorder %s18, 1
    %p83 = por %p81, %p82
    %p85 = scmp.ne.s32.totalorder %s70, %s84
    %p86 = scmp.eq.s32.totalorder %s18, 0
    %p87 = por %p85, %p86
    %s88 = ssub.s32 %s12, %s19
    %p89 = scmp.eq.s32.totalorder %s88, 0
    %s91 = sadd.s32 %s90, 1
    %s92 = scalar_select %p89, %s90, %s91
    %p95 = pneg %p89
    %p96 = scmp.eq.s32.totalorder %s12, 1
    %p97 = por %p95, %p96
    %p98 = scmp.ne.s32.totalorder %s90, %s93
    %p99 = scmp.eq.s32.totalorder %s12, 0
    %p100 = por %p98, %p99
    %p101 = scmp.ne.s32.totalorder %s90, %s93
    %p102 = scmp.eq.s32.totalorder %s17, 1
    %p103 = por %p101, %p102
    %p104 = scmp.ne.s32.totalorder %s93, %s94
    %p105 = scmp.eq.s32.totalorder %s17, 0
    %p106 = por %p104, %p105
    %p107 = scmp.ne.s32.totalorder %s93, %s94
    %p108 = scmp.eq.s32.totalorder %s18, 1
    %p109 = por %p107, %p108
    %p111 = scmp.ne.s32.totalorder %s94, %s110
    %p112 = scmp.eq.s32.totalorder %s18, 0
    %p113 = por %p111, %p112
    %s115 = sadd.s32 %s114, 1
    %p118 = scmp.eq.s32.totalorder %s12, 1
    %p119 = scmp.ne.s32.totalorder %s114, %s116
    %p120 = scmp.eq.s32.totalorder %s12, 0
    %p121 = por %p119, %p120
    %p122 = scmp.ne.s32.totalorder %s114, %s116
    %p123 = scmp.eq.s32.totalorder %s17, 1
    %p124 = por %p122, %p123
    %p125 = scmp.ne.s32.totalorder %s116, %s117
    %p126 = scmp.eq.s32.totalorder %s17, 0
    %p127 = por %p125, %p126
    %p128 = scmp.ne.s32.totalorder %s116, %s117
    %p129 = scmp.eq.s32.totalorder %s18, 1
    %p130 = por %p128, %p129
    %p132 = scmp.ne.s32.totalorder %s117, %s131
    %p133 = scmp.eq.s32.totalorder %s18, 0
    %p134 = por %p132, %p133
    %s136 = sadd.s32 %s135, 1
    %p139 = scmp.eq.s32.totalorder %s12, 1
    %p140 = scmp.ne.s32.totalorder %s135, %s137
    %p141 = scmp.eq.s32.totalorder %s12, 0
    %p142 = por %p140, %p141
    %p143 = scmp.ne.s32.totalorder %s135, %s137
    %p144 = scmp.eq.s32.totalorder %s17, 1
    %p145 = por %p143, %p144
    %p146 = scmp.ne.s32.totalorder %s137, %s138
    %p147 = scmp.eq.s32.totalorder %s17, 0
    %p148 = por %p146, %p147
    %p149 = scmp.ne.s32.totalorder %s137, %s138
    %p150 = scmp.eq.s32.totalorder %s18, 1
    %p151 = por %p149, %p150
    %p153 = scmp.ne.s32.totalorder %s138, %s152
    %p154 = scmp.eq.s32.totalorder %s18, 0
    %p155 = por %p153, %p154
    %s156 = ssub.s32 %s12, %s19
    %p157 = scmp.eq.s32.totalorder %s156, 0
    %s159 = sadd.s32 %s158, 1
    %s160 = scalar_select %p157, %s158, %s159
    %p163 = pneg %p157
    %p164 = scmp.eq.s32.totalorder %s12, 1
    %p165 = por %p163, %p164
    %p166 = scmp.ne.s32.totalorder %s158, %s161
    %p167 = scmp.eq.s32.totalorder %s12, 0
    %p168 = por %p166, %p167
    %p169 = scmp.ne.s32.totalorder %s158, %s161
    %p170 = scmp.eq.s32.totalorder %s17, 1
    %p171 = por %p169, %p170
    %p172 = scmp.ne.s32.totalorder %s161, %s162
    %p173 = scmp.eq.s32.totalorder %s17, 0
    %p174 = por %p172, %p173
    %p175 = scmp.ne.s32.totalorder %s161, %s162
    %p176 = scmp.eq.s32.totalorder %s18, 1
    %p177 = por %p175, %p176
    %p179 = scmp.ne.s32.totalorder %s162, %s178
    %p180 = scmp.eq.s32.totalorder %s18, 0
    %p181 = por %p179, %p180
    %p182 = scmp.le.s32.totalorder 1, %s12
    %p183 = scmp.lt.s32.totalorder %s12, 3
    %p184 = pnand %p182, %p183
    %p185 = pneg %p184
    // Predicated region
    $region9: #{basic_block_forward.9} parent=5 // pred_check
      _
    $region10: #{basic_block_forward.9} parent=5 // pred_check_branch
      %187 = sbr.rel (%p184) target = $region12
    $region11: #{basic_block_forward.9} parent=5 // pred_region
      %s188 = ssub.s32 %s12, 1
      // Predicated region
      $region13: #{basic_block_forward.9} parent=11 // pred_check
        %p189 = pneg %p59
      $region14: #{basic_block_forward.9} parent=11 // pred_check_branch
        %191 = sbr.rel (%p189) target = $region16
      $region15: #{basic_block_forward.9} parent=11 // pred_region
        _
      $region16: #{basic_block_forward.9} parent=11 // pred_fallthru
        _
      // Predicated region
      $region17: #{basic_block_forward.9} parent=11 // pred_check
        %p192 = pneg %p80
      $region18: #{basic_block_forward.9} parent=11 // pred_check_branch
        %194 = sbr.rel (%p192) target = $region20
      $region19: #{basic_block_forward.9} parent=11 // pred_region
        _
      $region20: #{basic_block_forward.9} parent=11 // pred_fallthru
        _
      // Predicated region
      $region21: #{basic_block_forward.9} parent=11 // pred_check
        %p195 = pneg %p127
      $region22: #{basic_block_forward.9} parent=11 // pred_check_branch
        %197 = sbr.rel (%p195) target = $region24
      $region23: #{basic_block_forward.9} parent=11 // pred_region
        _
      $region24: #{basic_block_forward.9} parent=11 // pred_fallthru
        _
      // Predicated region
      $region25: #{basic_block_forward.9} parent=11 // pred_check
        %p198 = pneg %p148
      $region26: #{basic_block_forward.9} parent=11 // pred_check_branch
        %200 = sbr.rel (%p198) target = $region28
      $region27: #{basic_block_forward.9} parent=11 // pred_region
        _
      $region28: #{basic_block_forward.9} parent=11 // pred_fallthru
        _
    $region12: #{basic_block_forward.9} parent=5 // pred_fallthru
      _
    %p201 = scmp.lt.s32.totalorder %s12, 2
    // Predicated region
    $region29: #{basic_block_forward.9} parent=5 // pred_check
      %p202 = pneg %p201
    $region30: #{basic_block_forward.9} parent=5 // pred_check_branch
      %204 = sbr.rel (%p202) target = $region32
    $region31: #{basic_block_forward.9} parent=5 // pred_region
      // Predicated region
      $region33: #{basic_block_forward.9} parent=31 // pred_check
        %p205 = pneg %p32
      $region34: #{basic_block_forward.9} parent=31 // pred_check_branch
        %207 = sbr.rel (%p205) target = $region36
      $region35: #{basic_block_forward.9} parent=31 // pred_region
        %p208 = scmp.lt.s32.totalorder %s12, 1
        %s209 = scalar_select %p208, %s12, 1
        %s210 = smul.addr %s209, 8
        %s211 = smul.addr %s210, 4
        %s212 = scalar_lea.vmem %s0, %s211
      $region36: #{basic_block_forward.9} parent=31 // pred_fallthru
        _
      // Predicated region
      $region37: #{basic_block_forward.9} parent=31 // pred_check
        %p213 = pneg %p100
      $region38: #{basic_block_forward.9} parent=31 // pred_check_branch
        %215 = sbr.rel (%p213) target = $region40
      $region39: #{basic_block_forward.9} parent=31 // pred_region
        %p216 = scmp.lt.s32.totalorder %s12, 1
        %s217 = scalar_select %p216, %s12, 1
        %s218 = smul.addr %s217, 8
        %s219 = smul.addr %s218, 4
        %s220 = scalar_lea.vmem %s3, %s219
      $region40: #{basic_block_forward.9} parent=31 // pred_fallthru
        _
    $region32: #{basic_block_forward.9} parent=5 // pred_fallthru
      _
    %p221 = scmp.le.s32.totalorder 1, %s12
    %p222 = scmp.lt.s32.totalorder %s12, 3
    %p223 = pnand %p221, %p222
    %p224 = pneg %p223
    // Predicated region
    $region41: #{basic_block_forward.9} parent=5 // pred_check
      _
    $region42: #{basic_block_forward.9} parent=5 // pred_check_branch
      %226 = sbr.rel (%p223) target = $region44
    $region43: #{basic_block_forward.9} parent=5 // pred_region
      %s227 = ssub.s32 %s12, 1
      %p228 = scmp.lt.s32.totalorder %s17, 1
      %s229 = scalar_select %p228, %s17, 1
      %s230 = smul.addr %s229, 8
      %s231 = smul.addr %s230, 4
      %s232 = scalar_lea.vmem %s0, %s231
      %p233 = pneg %p38
      %p234 = pneg %p35
      %p235 = pneg %p59
      %p236 = pneg %p56
      %p237 = pneg %p80
      %p238 = pneg %p77
      %p239 = scmp.lt.s32.totalorder %s17, 1
      %s240 = scalar_select %p239, %s17, 1
      %s241 = smul.addr %s240, 8
      %s242 = smul.addr %s241, 4
      %s243 = scalar_lea.vmem %s3, %s242
      %p244 = pneg %p106
      %p245 = pneg %p103
      %p246 = pneg %p127
      %p247 = pneg %p124
      %p248 = pneg %p148
      %p249 = pneg %p145
      %p250 = pneg %p174
      %p251 = pneg %p171
      %p252 = scmp.lt.s32.totalorder %s17, 1
      %s253 = scalar_select %p252, %s17, 1
      %s254 = smul.addr %s253, 8
      %s255 = smul.addr %s254, 8
      %s256 = scalar_lea.vmem %s6, %s255
      %p257 = scmp.lt.s32.totalorder %s17, 1
      %s258 = scalar_select %p257, %s17, 1
      %s259 = smul.addr %s258, 8
      %s260 = smul.addr %s259, 4
      %s261 = scalar_lea.vmem %s0, %s260
      %p262 = scmp.lt.s32.totalorder %s17, 1
      %s263 = scalar_select %p262, %s17, 1
      %s264 = smul.addr %s263, 8
      %s265 = smul.addr %s264, 4
      %s266 = scalar_lea.vmem %s3, %s265
      %p267 = scmp.lt.s32.totalorder %s17, 1
      %s268 = scalar_select %p267, %s17, 1
      %s269 = smul.addr %s268, 8
      %s270 = smul.addr %s269, 8
      %s271 = scalar_lea.vmem %s6, %s270
      %v272 = vld [vmem:[%s261] sm:$0xf]
      %v273 = vld [vmem:[%s261 + $0x4] sm:$0xf]
      %v274 = vld [vmem:[%s261 + $0x8] sm:$0xf]
      %v275 = vld [vmem:[%s261 + $0xc] sm:$0xf]
      %v276 = vld [vmem:[%s261 + $0x10] sm:$0xf]
      %v277 = vld [vmem:[%s261 + $0x14] sm:$0xf]
      %v278 = vld [vmem:[%s261 + $0x18] sm:$0xf]
      %v279 = vld [vmem:[%s261 + $0x1c] sm:$0xf]
      %v280 = vunpack.c.l.bf16 %v272
      %v281 = vunpack.c.l.bf16 %v273
      %v282 = vunpack.c.l.bf16 %v274
      %v283 = vunpack.c.l.bf16 %v275
      %v284 = vunpack.c.l.bf16 %v276
      %v285 = vunpack.c.l.bf16 %v277
      %v286 = vunpack.c.l.bf16 %v278
      %v287 = vunpack.c.l.bf16 %v279
      %v288 = vld [vmem:[%s1] sm:$0x1]
      %v290 = vperm.slane %v288, 0
      %v292 = vmul.f32 %v280, %v290
      %v293 = vmul.f32 %v281, %v290
      %v294 = vmul.f32 %v282, %v290
      %v295 = vmul.f32 %v283, %v290
      %v296 = vmul.f32 %v284, %v290
      %v297 = vmul.f32 %v285, %v290
      %v298 = vmul.f32 %v286, %v290
      %v299 = vmul.f32 %v287, %v290
      %v300 = vld [vmem:[%s2] sm:$0x1]
      %v302 = vperm.slane %v300, 0
      %v304 = vadd.f32 %v292, %v302
      %v305 = vadd.f32 %v293, %v302
      %v306 = vadd.f32 %v294, %v302
      %v307 = vadd.f32 %v295, %v302
      %v308 = vadd.f32 %v296, %v302
      %v309 = vadd.f32 %v297, %v302
      %v310 = vadd.f32 %v298, %v302
      %v311 = vadd.f32 %v299, %v302
      %v312 = vld [vmem:[%s266] sm:$0xf]
      %v313 = vld [vmem:[%s266 + $0x4] sm:$0xf]
      %v314 = vld [vmem:[%s266 + $0x8] sm:$0xf]
      %v315 = vld [vmem:[%s266 + $0xc] sm:$0xf]
      %v316 = vld [vmem:[%s266 + $0x10] sm:$0xf]
      %v317 = vld [vmem:[%s266 + $0x14] sm:$0xf]
      %v318 = vld [vmem:[%s266 + $0x18] sm:$0xf]
      %v319 = vld [vmem:[%s266 + $0x1c] sm:$0xf]
      %v320 = vunpack.c.l.bf16 %v312
      %v321 = vunpack.c.l.bf16 %v313
      %v322 = vunpack.c.l.bf16 %v314
      %v323 = vunpack.c.l.bf16 %v315
      %v324 = vunpack.c.l.bf16 %v316
      %v325 = vunpack.c.l.bf16 %v317
      %v326 = vunpack.c.l.bf16 %v318
      %v327 = vunpack.c.l.bf16 %v319
      %v328 = vld [vmem:[%s4] sm:$0x1]
      %v330 = vperm.slane %v328, 0
      %v332 = vmul.f32 %v320, %v330
      %v333 = vmul.f32 %v321, %v330
      %v334 = vmul.f32 %v322, %v330
      %v335 = vmul.f32 %v323, %v330
      %v336 = vmul.f32 %v324, %v330
      %v337 = vmul.f32 %v325, %v330
      %v338 = vmul.f32 %v326, %v330
      %v339 = vmul.f32 %v327, %v330
      %v340 = vld [vmem:[%s5] sm:$0x1]
      %v342 = vperm.slane %v340, 0
      %v344 = vadd.f32 %v332, %v342
      %v345 = vadd.f32 %v333, %v342
      %v346 = vadd.f32 %v334, %v342
      %v347 = vadd.f32 %v335, %v342
      %v348 = vadd.f32 %v336, %v342
      %v349 = vadd.f32 %v337, %v342
      %v350 = vadd.f32 %v338, %v342
      %v351 = vadd.f32 %v339, %v342
      %v352 = vadd.f32 %v304, %v344
      %v353 = vadd.f32 %v305, %v345
      %v354 = vadd.f32 %v306, %v346
      %v355 = vadd.f32 %v307, %v347
      %v356 = vadd.f32 %v308, %v348
      %v357 = vadd.f32 %v309, %v349
      %v358 = vadd.f32 %v310, %v350
      %v359 = vadd.f32 %v311, %v351
      %v360 = vmax.f32 %v352, 0.0
      %v361 = vmax.f32 %v353, 0.0
      %v362 = vmax.f32 %v354, 0.0
      %v363 = vmax.f32 %v355, 0.0
      %v364 = vmax.f32 %v356, 0.0
      %v365 = vmax.f32 %v357, 0.0
      %v366 = vmax.f32 %v358, 0.0
      %v367 = vmax.f32 %v359, 0.0
      %368 = vst [vmem:[%s271] sm:$0xff] %v360
      %369 = vst [vmem:[%s271 + $0x8] sm:$0xff] %v361
      %370 = vst [vmem:[%s271 + $0x10] sm:$0xff] %v362
      %371 = vst [vmem:[%s271 + $0x18] sm:$0xff] %v363
      %372 = vst [vmem:[%s271 + $0x20] sm:$0xff] %v364
      %373 = vst [vmem:[%s271 + $0x28] sm:$0xff] %v365
      %374 = vst [vmem:[%s271 + $0x30] sm:$0xff] %v366
      %375 = vst [vmem:[%s271 + $0x38] sm:$0xff] %v367
      %p376 = scmp.lt.s32.totalorder %s17, 1
      %s377 = scalar_select %p376, %s17, 1
      %s378 = smul.addr %s377, 8
      %s379 = smul.addr %s378, 8
      %s380 = scalar_lea.vmem %s6, %s379
      // Predicated region
      $region45: #{basic_block_forward.9} parent=43 // pred_check
        %p381 = pneg %p171
      $region46: #{basic_block_forward.9} parent=43 // pred_check_branch
        %383 = sbr.rel (%p381) target = $region48
      $region47: #{basic_block_forward.9} parent=43 // pred_region
        _
      $region48: #{basic_block_forward.9} parent=43 // pred_fallthru
        _
    $region44: #{basic_block_forward.9} parent=5 // pred_fallthru
      _
    %p384 = scmp.le.s32.totalorder 2, %s12
    // Predicated region
    $region49: #{basic_block_forward.9} parent=5 // pred_check
      %p385 = pneg %p384
    $region50: #{basic_block_forward.9} parent=5 // pred_check_branch
      %387 = sbr.rel (%p385) target = $region52
    $region51: #{basic_block_forward.9} parent=5 // pred_region
      %s388 = ssub.s32 %s12, 2
      // Predicated region
      $region53: #{basic_block_forward.9} parent=51 // pred_check
        %p389 = pneg %p177
      $region54: #{basic_block_forward.9} parent=51 // pred_check_branch
        %391 = sbr.rel (%p389) target = $region56
      $region55: #{basic_block_forward.9} parent=51 // pred_region
        %p392 = scmp.lt.s32.totalorder %s18, 1
        %s393 = scalar_select %p392, %s18, 1
        %s394 = smul.addr %s393, 8
        %s395 = smul.addr %s394, 8
        %s396 = scalar_lea.vmem %s6, %s395
      $region56: #{basic_block_forward.9} parent=51 // pred_fallthru
        _
    $region52: #{basic_block_forward.9} parent=5 // pred_fallthru
      _
  $region6: #{basic_block_forward.9} parent=0 // loop_footer
    %s16 = sadd.s32 1, %s12
  $region7: #{basic_block_forward.9} parent=0 // loop_footer_branch
    %11 = sbr.rel target = $region3
  $region8: #{basic_block_forward.9} parent=0 // loop_exit
    _

// kernel: basic_block_forward.7
$region0: #{basic_block_forward.7}
  #allocation0 [shape = 'u32[]', space=smem, size = 0x4, offset = 0x4, fixed_abs, tag = 'smem constant byte address 0x4 - core index']
  #allocation1 [shape = 'u32[72,128]{1,0:T(1,128)}', space=vmem, size = 0x9000, scoped, tag = 'internal scratch']
  %s0 = inlined_call_operand.vmem [shape: f32[2,10,10,8], index: 0, kind: input, shape index: {}]
  %s1 = inlined_call_operand.vmem [shape: bf16[9,8,128], index: 1, kind: input, shape index: {}]
  %s2 = inlined_call_operand.vmem [shape: bf16[2,64,128], index: 2, kind: output, shape index: {0}]
  %s3 = inlined_call_operand.vmem [shape: f32[2,8,128], index: 3, kind: output, shape index: {1}]
  %4 = xla_tuple %s2, %s3
  %s5 = sld [smem:[#allocation0]]
  $region49: #{basic_block_forward.7} parent=0
    _
  %s7 = ssub.s32 1, %s5
  %s8 = scalar_select 0, %s7, %s5
  loop: start=0, step=1, limit=4
  $region2: #{basic_block_forward.7} parent=0 // loop_pre_header
    _
  $region3: #{basic_block_forward.7} parent=0 // loop_header
    %s10 = sphi 0, %s14
    %p11 = scmp.ge.s32.totalorder %s10, 4
    %s17 = sphi 0, %s29
    %s18 = sphi 0, %s25
    %s19 = sphi 0, %s17
    %s20 = sphi 0, %s18
    %s21 = sphi 0, %s19
    %s22 = sphi 0, %s20
    %s32 = sphi 0, %s34
    %s35 = sphi 0, %s32
    %s36 = sphi 0, %s35
    %s52 = sphi 0, %s36
    %s58 = sphi 0, %s60
    %s61 = sphi 0, %s58
    %s62 = sphi 0, %s61
    %s78 = sphi 0, %s62
    %s86 = sphi 0, %s88
    %s89 = sphi 0, %s86
    %s90 = sphi 0, %s89
    %s106 = sphi 0, %s90
    %s114 = sphi 0, %s116
    %s117 = sphi 0, %s114
    %s118 = sphi 0, %s117
    %s134 = sphi 0, %s118
  $region4: #{basic_block_forward.7} parent=0 // loop_header_branch
    %13 = sbr.rel (%p11) target = $region8
  $region5: #{basic_block_forward.7} parent=0 // loop_body
    %s15 = ssub.s32 %s10, 1
    %s16 = ssub.s32 %s10, 2
    %s23 = sadd.s32 1, %s18
    %p24 = scmp.ge.s32.totalorder %s23, 2
    %s25 = scalar_select %p24, 0, %s23
    %s26 = sadd.s32 1, %s17
    %s27 = scalar_select %p24, %s26, %s17
    %p28 = scmp.ge.s32.totalorder %s27, 1
    %s29 = scalar_select %p28, 0, %s27
    %s30 = ssub.s32 %s18, %s25
    %p31 = scmp.eq.s32.totalorder %s30, 0
    %s33 = sadd.s32 %s32, 1
    %s34 = scalar_select %p31, %s32, %s33
    %p37 = pneg %p31
    %p38 = scmp.eq.s32.totalorder %s10, 1
    %p39 = por %p37, %p38
    %p40 = scmp.ne.s32.totalorder %s32, %s35
    %p41 = scmp.eq.s32.totalorder %s10, 0
    %p42 = por %p40, %p41
    %p43 = scmp.ne.s32.totalorder %s32, %s35
    %p44 = scmp.eq.s32.totalorder %s15, 1
    %p45 = por %p43, %p44
    %p46 = scmp.ne.s32.totalorder %s35, %s36
    %p47 = scmp.eq.s32.totalorder %s15, 0
    %p48 = por %p46, %p47
    %p49 = scmp.ne.s32.totalorder %s35, %s36
    %p50 = scmp.eq.s32.totalorder %s16, 1
    %p51 = por %p49, %p50
    %p53 = scmp.ne.s32.totalorder %s36, %s52
    %p54 = scmp.eq.s32.totalorder %s16, 0
    %p55 = por %p53, %p54
    %s56 = ssub.s32 %s17, %s29
    %p57 = scmp.eq.s32.totalorder %s56, 0
    %s59 = sadd.s32 %s58, 1
    %s60 = scalar_select %p57, %s58, %s59
    %p63 = pneg %p57
    %p64 = scmp.eq.s32.totalorder %s10, 1
    %p65 = por %p63, %p64
    %p66 = scmp.ne.s32.totalorder %s58, %s61
    %p67 = scmp.eq.s32.totalorder %s10, 0
    %p68 = por %p66, %p67
    %p69 = scmp.ne.s32.totalorder %s58, %s61
    %p70 = scmp.eq.s32.totalorder %s15, 1
    %p71 = por %p69, %p70
    %p72 = scmp.ne.s32.totalorder %s61, %s62
    %p73 = scmp.eq.s32.totalorder %s15, 0
    %p74 = por %p72, %p73
    %p75 = scmp.ne.s32.totalorder %s61, %s62
    %p76 = scmp.eq.s32.totalorder %s16, 1
    %p77 = por %p75, %p76
    %p79 = scmp.ne.s32.totalorder %s62, %s78
    %p80 = scmp.eq.s32.totalorder %s16, 0
    %p81 = por %p79, %p80
    %s82 = ssub.s32 %s18, %s25
    %s83 = ssub.s32 %s17, %s29
    %s84 = sor.u32 %s82, %s83
    %p85 = scmp.eq.s32.totalorder %s84, 0
    %s87 = sadd.s32 %s86, 1
    %s88 = scalar_select %p85, %s86, %s87
    %p91 = pneg %p85
    %p92 = scmp.eq.s32.totalorder %s10, 1
    %p93 = por %p91, %p92
    %p94 = scmp.ne.s32.totalorder %s86, %s89
    %p95 = scmp.eq.s32.totalorder %s10, 0
    %p96 = por %p94, %p95
    %p97 = scmp.ne.s32.totalorder %s86, %s89
    %p98 = scmp.eq.s32.totalorder %s15, 1
    %p99 = por %p97, %p98
    %p100 = scmp.ne.s32.totalorder %s89, %s90
    %p101 = scmp.eq.s32.totalorder %s15, 0
    %p102 = por %p100, %p101
    %p103 = scmp.ne.s32.totalorder %s89, %s90
    %p104 = scmp.eq.s32.totalorder %s16, 1
    %p105 = por %p103, %p104
    %p107 = scmp.ne.s32.totalorder %s90, %s106
    %p108 = scmp.eq.s32.totalorder %s16, 0
    %p109 = por %p107, %p108
    %s110 = ssub.s32 %s18, %s25
    %s111 = ssub.s32 %s17, %s29
    %s112 = sor.u32 %s110, %s111
    %p113 = scmp.eq.s32.totalorder %s112, 0
    %s115 = sadd.s32 %s114, 1
    %s116 = scalar_select %p113, %s114, %s115
    %p119 = pneg %p113
    %p120 = scmp.eq.s32.totalorder %s10, 1
    %p121 = por %p119, %p120
    %p122 = scmp.ne.s32.totalorder %s114, %s117
    %p123 = scmp.eq.s32.totalorder %s10, 0
    %p124 = por %p122, %p123
    %p125 = scmp.ne.s32.totalorder %s114, %s117
    %p126 = scmp.eq.s32.totalorder %s15, 1
    %p127 = por %p125, %p126
    %p128 = scmp.ne.s32.totalorder %s117, %s118
    %p129 = scmp.eq.s32.totalorder %s15, 0
    %p130 = por %p128, %p129
    %p131 = scmp.ne.s32.totalorder %s117, %s118
    %p132 = scmp.eq.s32.totalorder %s16, 1
    %p133 = por %p131, %p132
    %p135 = scmp.ne.s32.totalorder %s118, %s134
    %p136 = scmp.eq.s32.totalorder %s16, 0
    %p137 = por %p135, %p136
    %p138 = scmp.le.s32.totalorder 1, %s10
    %p139 = scmp.lt.s32.totalorder %s10, 3
    %p140 = pnand %p138, %p139
    %p141 = pneg %p140
    // Predicated region
    $region9: #{basic_block_forward.7} parent=5 // pred_check
      _
    $region10: #{basic_block_forward.7} parent=5 // pred_check_branch
      %143 = sbr.rel (%p140) target = $region12
    $region11: #{basic_block_forward.7} parent=5 // pred_region
      %s144 = ssub.s32 %s10, 1
      // Predicated region
      $region13: #{basic_block_forward.7} parent=11 // pred_check
        %p145 = pneg %p74
      $region14: #{basic_block_forward.7} parent=11 // pred_check_branch
        %147 = sbr.rel (%p145) target = $region16
      $region15: #{basic_block_forward.7} parent=11 // pred_region
        %p148 = scmp.lt.s32.totalorder %s19, 0
        %s149 = scalar_select %p148, %s19, 0
        %s150 = smul.addr %s149, 4
        %s151 = scalar_lea.vmem %s1, %s150
      $region16: #{basic_block_forward.7} parent=11 // pred_fallthru
        _
    $region12: #{basic_block_forward.7} parent=5 // pred_fallthru
      _
    %p152 = scmp.lt.s32.totalorder %s10, 2
    // Predicated region
    $region17: #{basic_block_forward.7} parent=5 // pred_check
      %p153 = pneg %p152
    $region18: #{basic_block_forward.7} parent=5 // pred_check_branch
      %155 = sbr.rel (%p153) target = $region20
    $region19: #{basic_block_forward.7} parent=5 // pred_region
      // Predicated region
      $region21: #{basic_block_forward.7} parent=19 // pred_check
        %p156 = pneg %p42
      $region22: #{basic_block_forward.7} parent=19 // pred_check_branch
        %158 = sbr.rel (%p156) target = $region24
      $region23: #{basic_block_forward.7} parent=19 // pred_region
        %p159 = scmp.lt.s32.totalorder %s18, 1
        %s160 = scalar_select %p159, %s18, 1
        %s161 = smul.addr %s160, 20
        %s162 = smul.addr %s161, 8
        %s163 = scalar_lea.vmem %s0, %s162
      $region24: #{basic_block_forward.7} parent=19 // pred_fallthru
        _
    $region20: #{basic_block_forward.7} parent=5 // pred_fallthru
      _
    %p164 = scmp.le.s32.totalorder 1, %s10
    %p165 = scmp.lt.s32.totalorder %s10, 3
    %p166 = pnand %p164, %p165
    %p167 = pneg %p166
    // Predicated region
    $region25: #{basic_block_forward.7} parent=5 // pred_check
      _
    $region26: #{basic_block_forward.7} parent=5 // pred_check_branch
      %169 = sbr.rel (%p166) target = $region28
    $region27: #{basic_block_forward.7} parent=5 // pred_region
      %s170 = ssub.s32 %s10, 1
      %p171 = scmp.lt.s32.totalorder %s20, 1
      %s172 = scalar_select %p171, %s20, 1
      %s173 = smul.addr %s172, 20
      %s174 = smul.addr %s173, 8
      %s175 = scalar_lea.vmem %s0, %s174
      %p176 = pneg %p48
      %p177 = pneg %p45
      %p178 = scmp.lt.s32.totalorder %s19, 0
      %s179 = scalar_select %p178, %s19, 0
      %s180 = smul.addr %s179, 4
      %s181 = scalar_lea.vmem %s1, %s180
      %p182 = pneg %p74
      %p183 = pneg %p71
      %p184 = pneg %p102
      %p185 = pneg %p99
      %p186 = scmp.lt.s32.totalorder %s20, 1
      %s187 = scalar_select %p186, %s20, 1
      %p188 = scmp.lt.s32.totalorder %s19, 0
      %s189 = scalar_select %p188, %s19, 0
      %s190 = smul.addr %s187, 8
      %s191 = sadd.s32 %s189, %s190
      %s192 = smul.addr %s191, 4
      %s193 = scalar_lea.vmem %s2, %s192
      %p194 = pneg %p130
      %p195 = pneg %p127
      %p196 = scmp.lt.s32.totalorder %s20, 1
      %s197 = scalar_select %p196, %s20, 1
      %p198 = scmp.lt.s32.totalorder %s19, 0
      %s199 = scalar_select %p198, %s19, 0
      %s200 = sadd.s32 %s199, %s197
      %s201 = smul.addr %s200, 8
      %s202 = scalar_lea.vmem %s3, %s201
      %p203 = scmp.lt.s32.totalorder %s20, 1
      %s204 = scalar_select %p203, %s20, 1
      %s205 = smul.addr %s204, 20
      %s206 = smul.addr %s205, 8
      %s207 = scalar_lea.vmem %s0, %s206
      %p208 = scmp.lt.s32.totalorder %s19, 0
      %s209 = scalar_select %p208, %s19, 0
      %s210 = smul.addr %s209, 4
      %s211 = scalar_lea.vmem %s1, %s210
      %p212 = scmp.lt.s32.totalorder %s20, 1
      %s213 = scalar_select %p212, %s20, 1
      %p214 = scmp.lt.s32.totalorder %s19, 0
      %s215 = scalar_select %p214, %s19, 0
      %s216 = smul.addr %s213, 8
      %s217 = sadd.s32 %s215, %s216
      %s218 = smul.addr %s217, 4
      %s219 = scalar_lea.vmem %s2, %s218
      %p220 = scmp.lt.s32.totalorder %s20, 1
      %s221 = scalar_select %p220, %s20, 1
      %p222 = scmp.lt.s32.totalorder %s19, 0
      %s223 = scalar_select %p222, %s19, 0
      %s224 = sadd.s32 %s223, %s221
      %s225 = smul.addr %s224, 8
      %s226 = scalar_lea.vmem %s3, %s225
      %v228 = vld [vmem:[%s207] sm:$0xff]
      %v229 = vld [vmem:[%s207 + $0x10] sm:$0xff]
      %v230 = vld [vmem:[%s207 + $0x20] sm:$0xff]
      %v231 = vld [vmem:[%s207 + $0x30] sm:$0xff]
      %v232 = vld [vmem:[%s207 + $0x40] sm:$0xff]
      %v233 = vld [vmem:[%s207 + $0x50] sm:$0xff]
      %v234 = vld [vmem:[%s207 + $0x60] sm:$0xff]
      %v235 = vld [vmem:[%s207 + $0x70] sm:$0xff]
      %v236 = vpack.c.bf16 %v229, %v228
      %v237 = vpack.c.bf16 %v231, %v230
      %v238 = vpack.c.bf16 %v233, %v232
      %v239 = vpack.c.bf16 %v235, %v234
      %v240 = vld [vmem:[%s211] sm:$0xf]
      %v241 = vld [vmem:[%s207 + $0x1] sm:$0xff]
      %v242 = vld [vmem:[%s207 + $0x11] sm:$0xff]
      %v243 = vld [vmem:[%s207 + $0x21] sm:$0xff]
      %v244 = vld [vmem:[%s207 + $0x31] sm:$0xff]
      %v245 = vld [vmem:[%s207 + $0x41] sm:$0xff]
      %v246 = vld [vmem:[%s207 + $0x51] sm:$0xff]
      %v247 = vld [vmem:[%s207 + $0x61] sm:$0xff]
      %v248 = vld [vmem:[%s207 + $0x71] sm:$0xff]
      %v249 = vpack.c.bf16 %v242, %v241
      %v250 = vpack.c.bf16 %v244, %v243
      %v251 = vpack.c.bf16 %v246, %v245
      %v252 = vpack.c.bf16 %v248, %v247
      %s253 = scalar_lea.vmem %s211, 4
      %v254 = vld [vmem:[%s253] sm:$0xf]
      %vm255 = vcmask 64512
      %v257 = vsel %vm255, %v249, 0
      %v260 = vsel %vm255, %v250, 0
      %v263 = vsel %vm255, %v251, 0
      %v266 = vsel %vm255, %v252, 0
      %vm268 = vcmask 1043456
      %v270 = vsel %vm268, %v254, 0
      %272 = vmatpush.bf16.msra.mxu0 0
      %273 = vmatpush.bf16.msra.mxu0 0
      %274 = vmatpush.bf16.msra.mxu0 0
      %275 = vmatpush.bf16.msra.mxu0 0
      %276 = vmatpush.bf16.msra.mxu0 0
      %277 = vmatpush.bf16.msra.mxu0 0
      %278 = vmatpush.bf16.msra.mxu0 0
      %279 = vmatpush.bf16.msra.mxu0 %v270
      %280 = vmatmul.bf16.gmra.mxu0 %v257
      %v281 = vpop.f32.mrf.mxu0
      %v282 = vadd.f32 0.0, %v281
      %v283 = vpop.f32.mrf.mxu0
      %v284 = vadd.f32 0.0, %v283
      %285 = vmatmul.bf16.gmra.mxu0 %v260
      %v286 = vpop.f32.mrf.mxu0
      %v287 = vadd.f32 0.0, %v286
      %v288 = vpop.f32.mrf.mxu0
      %v289 = vadd.f32 0.0, %v288
      %290 = vmatmul.bf16.gmra.mxu0 %v263
      %v291 = vpop.f32.mrf.mxu0
      %v292 = vadd.f32 0.0, %v291
      %v293 = vpop.f32.mrf.mxu0
      %v294 = vadd.f32 0.0, %v293
      %295 = vmatmul.bf16.gmra.mxu0 %v266
      %v296 = vpop.f32.mrf.mxu0
      %v297 = vadd.f32 0.0, %v296
      %v298 = vpop.f32.mrf.mxu0
      %v299 = vadd.f32 0.0, %v298
      %300 = vdwg.mxu0
      %v302 = vsel %vm255, %v236, 0
      %v305 = vsel %vm255, %v237, 0
      %v308 = vsel %vm255, %v238, 0
      %v311 = vsel %vm255, %v239, 0
      %v314 = vsel %vm268, %v240, 0
      %316 = vmatpush.bf16.msra.mxu0 0
      %317 = vmatpush.bf16.msra.mxu0 0
      %318 = vmatpush.bf16.msra.mxu0 0
      %319 = vmatpush.bf16.msra.mxu0 0
      %320 = vmatpush.bf16.msra.mxu0 0
      %321 = vmatpush.bf16.msra.mxu0 0
      %322 = vmatpush.bf16.msra.mxu0 0
      %323 = vmatpush.bf16.msra.mxu0 %v314
      %324 = vmatmul.bf16.gmra.mxu0 %v302
      %v325 = vpop.f32.mrf.mxu0
      %v326 = vadd.f32 %v282, %v325
      %v327 = vpop.f32.mrf.mxu0
      %v328 = vadd.f32 %v284, %v327
      %329 = vmatmul.bf16.gmra.mxu0 %v305
      %v330 = vpop.f32.mrf.mxu0
      %v331 = vadd.f32 %v287, %v330
      %v332 = vpop.f32.mrf.mxu0
      %v333 = vadd.f32 %v289, %v332
      %334 = vmatmul.bf16.gmra.mxu0 %v308
      %v335 = vpop.f32.mrf.mxu0
      %v336 = vadd.f32 %v292, %v335
      %v337 = vpop.f32.mrf.mxu0
      %v338 = vadd.f32 %v294, %v337
      %339 = vmatmul.bf16.gmra.mxu0 %v311
      %v340 = vpop.f32.mrf.mxu0
      %v341 = vadd.f32 %v297, %v340
      %v342 = vpop.f32.mrf.mxu0
      %v343 = vadd.f32 %v299, %v342
      %344 = vdwg.mxu0
      %v345 = vld [vmem:[%s207 + $0x2] sm:$0xff]
      %v346 = vld [vmem:[%s207 + $0x12] sm:$0xff]
      %v347 = vld [vmem:[%s207 + $0x22] sm:$0xff]
      %v348 = vld [vmem:[%s207 + $0x32] sm:$0xff]
      %v349 = vld [vmem:[%s207 + $0x42] sm:$0xff]
      %v350 = vld [vmem:[%s207 + $0x52] sm:$0xff]
      %v351 = vld [vmem:[%s207 + $0x62] sm:$0xff]
      %v352 = vld [vmem:[%s207 + $0x72] sm:$0xff]
      %v353 = vpack.c.bf16 %v346, %v345
      %v354 = vpack.c.bf16 %v348, %v347
      %v355 = vpack.c.bf16 %v350, %v349
      %v356 = vpack.c.bf16 %v352, %v351
      %s357 = scalar_lea.vmem %s211, 8
      %v358 = vld [vmem:[%s357] sm:$0xf]
      %v360 = vsel %vm255, %v353, 0
      %v363 = vsel %vm255, %v354, 0
      %v366 = vsel %vm255, %v355, 0
      %v369 = vsel %vm255, %v356, 0
      %v372 = vsel %vm268, %v358, 0
      %374 = vmatpush.bf16.msra.mxu0 0
      %375 = vmatpush.bf16.msra.mxu0 0
      %376 = vmatpush.bf16.msra.mxu0 0
      %377 = vmatpush.bf16.msra.mxu0 0
      %378 = vmatpush.bf16.msra.mxu0 0
      %379 = vmatpush.bf16.msra.mxu0 0
      %380 = vmatpush.bf16.msra.mxu0 0
      %381 = vmatpush.bf16.msra.mxu0 %v372
      %382 = vmatmul.bf16.gmra.mxu0 %v360
      %v383 = vpop.f32.mrf.mxu0
      %v384 = vadd.f32 0.0, %v383
      %v385 = vpop.f32.mrf.mxu0
      %v386 = vadd.f32 0.0, %v385
      %387 = vmatmul.bf16.gmra.mxu0 %v363
      %v388 = vpop.f32.mrf.mxu0
      %v389 = vadd.f32 0.0, %v388
      %v390 = vpop.f32.mrf.mxu0
      %v391 = vadd.f32 0.0, %v390
      %392 = vmatmul.bf16.gmra.mxu0 %v366
      %v393 = vpop.f32.mrf.mxu0
      %v394 = vadd.f32 0.0, %v393
      %v395 = vpop.f32.mrf.mxu0
      %v396 = vadd.f32 0.0, %v395
      %397 = vmatmul.bf16.gmra.mxu0 %v369
      %v398 = vpop.f32.mrf.mxu0
      %v399 = vadd.f32 0.0, %v398
      %v400 = vpop.f32.mrf.mxu0
      %v401 = vadd.f32 0.0, %v400
      %402 = vdwg.mxu0
      %v403 = vadd.f32 %v326, %v384
      %v404 = vadd.f32 %v328, %v386
      %v405 = vadd.f32 %v331, %v389
      %v406 = vadd.f32 %v333, %v391
      %v407 = vadd.f32 %v336, %v394
      %v408 = vadd.f32 %v338, %v396
      %v409 = vadd.f32 %v341, %v399
      %v410 = vadd.f32 %v343, %v401
      %s411 = scalar_lea.vmem %s207, 16
      %v412 = vld [vmem:[%s411] sm:$0xff]
      %v413 = vld [vmem:[%s411 + $0x10] sm:$0xff]
      %v414 = vld [vmem:[%s411 + $0x20] sm:$0xff]
      %v415 = vld [vmem:[%s411 + $0x30] sm:$0xff]
      %v416 = vld [vmem:[%s411 + $0x40] sm:$0xff]
      %v417 = vld [vmem:[%s411 + $0x50] sm:$0xff]
      %v418 = vld [vmem:[%s411 + $0x60] sm:$0xff]
      %v419 = vld [vmem:[%s411 + $0x70] sm:$0xff]
      %v420 = vpack.c.bf16 %v413, %v412
      %v421 = vpack.c.bf16 %v415, %v414
      %v422 = vpack.c.bf16 %v417, %v416
      %v423 = vpack.c.bf16 %v419, %v418
      %s424 = scalar_lea.vmem %s211, 12
      %v425 = vld [vmem:[%s424] sm:$0xf]
      %v427 = vsel %vm255, %v420, 0
      %v430 = vsel %vm255, %v421, 0
      %v433 = vsel %vm255, %v422, 0
      %v436 = vsel %vm255, %v423, 0
      %v439 = vsel %vm268, %v425, 0
      %441 = vmatpush.bf16.msra.mxu0 0
      %442 = vmatpush.bf16.msra.mxu0 0
      %443 = vmatpush.bf16.msra.mxu0 0
      %444 = vmatpush.bf16.msra.mxu0 0
      %445 = vmatpush.bf16.msra.mxu0 0
      %446 = vmatpush.bf16.msra.mxu0 0
      %447 = vmatpush.bf16.msra.mxu0 0
      %448 = vmatpush.bf16.msra.mxu0 %v439
      %449 = vmatmul.bf16.gmra.mxu0 %v427
      %v450 = vpop.f32.mrf.mxu0
      %v451 = vadd.f32 0.0, %v450
      %v452 = vpop.f32.mrf.mxu0
      %v453 = vadd.f32 0.0, %v452
      %454 = vmatmul.bf16.gmra.mxu0 %v430
      %v455 = vpop.f32.mrf.mxu0
      %v456 = vadd.f32 0.0, %v455
      %v457 = vpop.f32.mrf.mxu0
      %v458 = vadd.f32 0.0, %v457
      %459 = vmatmul.bf16.gmra.mxu0 %v433
      %v460 = vpop.f32.mrf.mxu0
      %v461 = vadd.f32 0.0, %v460
      %v462 = vpop.f32.mrf.mxu0
      %v463 = vadd.f32 0.0, %v462
      %464 = vmatmul.bf16.gmra.mxu0 %v436
      %v465 = vpop.f32.mrf.mxu0
      %v466 = vadd.f32 0.0, %v465
      %v467 = vpop.f32.mrf.mxu0
      %v468 = vadd.f32 0.0, %v467
      %469 = vdwg.mxu0
      %v470 = vadd.f32 %v403, %v451
      %v471 = vadd.f32 %v404, %v453
      %v472 = vadd.f32 %v405, %v456
      %v473 = vadd.f32 %v406, %v458
      %v474 = vadd.f32 %v407, %v461
      %v475 = vadd.f32 %v408, %v463
      %v476 = vadd.f32 %v409, %v466
      %v477 = vadd.f32 %v410, %v468
      %v478 = vld [vmem:[%s411 + $0x1] sm:$0xff]
      %v479 = vld [vmem:[%s411 + $0x11] sm:$0xff]
      %v480 = vld [vmem:[%s411 + $0x21] sm:$0xff]
      %v481 = vld [vmem:[%s411 + $0x31] sm:$0xff]
      %v482 = vld [vmem:[%s411 + $0x41] sm:$0xff]
      %v483 = vld [vmem:[%s411 + $0x51] sm:$0xff]
      %v484 = vld [vmem:[%s411 + $0x61] sm:$0xff]
      %v485 = vld [vmem:[%s411 + $0x71] sm:$0xff]
      %v486 = vpack.c.bf16 %v479, %v478
      %v487 = vpack.c.bf16 %v481, %v480
      %v488 = vpack.c.bf16 %v483, %v482
      %v489 = vpack.c.bf16 %v485, %v484
      %s490 = scalar_lea.vmem %s211, 16
      %v491 = vld [vmem:[%s490] sm:$0xf]
      %v493 = vsel %vm255, %v486, 0
      %v496 = vsel %vm255, %v487, 0
      %v499 = vsel %vm255, %v488, 0
      %v502 = vsel %vm255, %v489, 0
      %v505 = vsel %vm268, %v491, 0
      %507 = vmatpush.bf16.msra.mxu0 0
      %508 = vmatpush.bf16.msra.mxu0 0
      %509 = vmatpush.bf16.msra.mxu0 0
      %510 = vmatpush.bf16.msra.mxu0 0
      %511 = vmatpush.bf16.msra.mxu0 0
      %512 = vmatpush.bf16.msra.mxu0 0
      %513 = vmatpush.bf16.msra.mxu0 0
      %514 = vmatpush.bf16.msra.mxu0 %v505
      %515 = vmatmul.bf16.gmra.mxu0 %v493
      %v516 = vpop.f32.mrf.mxu0
      %v517 = vadd.f32 0.0, %v516
      %v518 = vpop.f32.mrf.mxu0
      %v519 = vadd.f32 0.0, %v518
      %520 = vmatmul.bf16.gmra.mxu0 %v496
      %v521 = vpop.f32.mrf.mxu0
      %v522 = vadd.f32 0.0, %v521
      %v523 = vpop.f32.mrf.mxu0
      %v524 = vadd.f32 0.0, %v523
      %525 = vmatmul.bf16.gmra.mxu0 %v499
      %v526 = vpop.f32.mrf.mxu0
      %v527 = vadd.f32 0.0, %v526
      %v528 = vpop.f32.mrf.mxu0
      %v529 = vadd.f32 0.0, %v528
      %530 = vmatmul.bf16.gmra.mxu0 %v502
      %v531 = vpop.f32.mrf.mxu0
      %v532 = vadd.f32 0.0, %v531
      %v533 = vpop.f32.mrf.mxu0
      %v534 = vadd.f32 0.0, %v533
      %535 = vdwg.mxu0
      %v536 = vadd.f32 %v470, %v517
      %v537 = vadd.f32 %v471, %v519
      %v538 = vadd.f32 %v472, %v522
      %v539 = vadd.f32 %v473, %v524
      %v540 = vadd.f32 %v474, %v527
      %v541 = vadd.f32 %v475, %v529
      %v542 = vadd.f32 %v476, %v532
      %v543 = vadd.f32 %v477, %v534
      %v544 = vld [vmem:[%s411 + $0x2] sm:$0xff]
      %v545 = vld [vmem:[%s411 + $0x12] sm:$0xff]
      %v546 = vld [vmem:[%s411 + $0x22] sm:$0xff]
      %v547 = vld [vmem:[%s411 + $0x32] sm:$0xff]
      %v548 = vld [vmem:[%s411 + $0x42] sm:$0xff]
      %v549 = vld [vmem:[%s411 + $0x52] sm:$0xff]
      %v550 = vld [vmem:[%s411 + $0x62] sm:$0xff]
      %v551 = vld [vmem:[%s411 + $0x72] sm:$0xff]
      %v552 = vpack.c.bf16 %v545, %v544
      %v553 = vpack.c.bf16 %v547, %v546
      %v554 = vpack.c.bf16 %v549, %v548
      %v555 = vpack.c.bf16 %v551, %v550
      %s556 = scalar_lea.vmem %s211, 20
      %v557 = vld [vmem:[%s556] sm:$0xf]
      %v559 = vsel %vm255, %v552, 0
      %v562 = vsel %vm255, %v553, 0
      %v565 = vsel %vm255, %v554, 0
      %v568 = vsel %vm255, %v555, 0
      %v571 = vsel %vm268, %v557, 0
      %573 = vmatpush.bf16.msra.mxu0 0
      %574 = vmatpush.bf16.msra.mxu0 0
      %575 = vmatpush.bf16.msra.mxu0 0
      %576 = vmatpush.bf16.msra.mxu0 0
      %577 = vmatpush.bf16.msra.mxu0 0
      %578 = vmatpush.bf16.msra.mxu0 0
      %579 = vmatpush.bf16.msra.mxu0 0
      %580 = vmatpush.bf16.msra.mxu0 %v571
      %581 = vmatmul.bf16.gmra.mxu0 %v559
      %v582 = vpop.f32.mrf.mxu0
      %v583 = vadd.f32 0.0, %v582
      %v584 = vpop.f32.mrf.mxu0
      %v585 = vadd.f32 0.0, %v584
      %586 = vmatmul.bf16.gmra.mxu0 %v562
      %v587 = vpop.f32.mrf.mxu0
      %v588 = vadd.f32 0.0, %v587
      %v589 = vpop.f32.mrf.mxu0
      %v590 = vadd.f32 0.0, %v589
      %591 = vmatmul.bf16.gmra.mxu0 %v565
      %v592 = vpop.f32.mrf.mxu0
      %v593 = vadd.f32 0.0, %v592
      %v594 = vpop.f32.mrf.mxu0
      %v595 = vadd.f32 0.0, %v594
      %596 = vmatmul.bf16.gmra.mxu0 %v568
      %v597 = vpop.f32.mrf.mxu0
      %v598 = vadd.f32 0.0, %v597
      %v599 = vpop.f32.mrf.mxu0
      %v600 = vadd.f32 0.0, %v599
      %601 = vdwg.mxu0
      %v602 = vadd.f32 %v536, %v583
      %v603 = vadd.f32 %v537, %v585
      %v604 = vadd.f32 %v538, %v588
      %v605 = vadd.f32 %v539, %v590
      %v606 = vadd.f32 %v540, %v593
      %v607 = vadd.f32 %v541, %v595
      %v608 = vadd.f32 %v542, %v598
      %v609 = vadd.f32 %v543, %v600
      %s610 = scalar_lea.vmem %s207, 32
      %v611 = vld [vmem:[%s610] sm:$0xff]
      %v612 = vld [vmem:[%s610 + $0x10] sm:$0xff]
      %v613 = vld [vmem:[%s610 + $0x20] sm:$0xff]
      %v614 = vld [vmem:[%s610 + $0x30] sm:$0xff]
      %v615 = vld [vmem:[%s610 + $0x40] sm:$0xff]
      %v616 = vld [vmem:[%s610 + $0x50] sm:$0xff]
      %v617 = vld [vmem:[%s610 + $0x60] sm:$0xff]
      %v618 = vld [vmem:[%s610 + $0x70] sm:$0xff]
      %v619 = vpack.c.bf16 %v612, %v611
      %v620 = vpack.c.bf16 %v614, %v613
      %v621 = vpack.c.bf16 %v616, %v615
      %v622 = vpack.c.bf16 %v618, %v617
      %s623 = scalar_lea.vmem %s211, 24
      %v624 = vld [vmem:[%s623] sm:$0xf]
      %v626 = vsel %vm255, %v619, 0
      %v629 = vsel %vm255, %v620, 0
      %v632 = vsel %vm255, %v621, 0
      %v635 = vsel %vm255, %v622, 0
      %v638 = vsel %vm268, %v624, 0
      %640 = vmatpush.bf16.msra.mxu0 0
      %641 = vmatpush.bf16.msra.mxu0 0
      %642 = vmatpush.bf16.msra.mxu0 0
      %643 = vmatpush.bf16.msra.mxu0 0
      %644 = vmatpush.bf16.msra.mxu0 0
      %645 = vmatpush.bf16.msra.mxu0 0
      %646 = vmatpush.bf16.msra.mxu0 0
      %647 = vmatpush.bf16.msra.mxu0 %v638
      %648 = vmatmul.bf16.gmra.mxu0 %v626
      %v649 = vpop.f32.mrf.mxu0
      %v650 = vadd.f32 0.0, %v649
      %v651 = vpop.f32.mrf.mxu0
      %v652 = vadd.f32 0.0, %v651
      %653 = vmatmul.bf16.gmra.mxu0 %v629
      %v654 = vpop.f32.mrf.mxu0
      %v655 = vadd.f32 0.0, %v654
      %v656 = vpop.f32.mrf.mxu0
      %v657 = vadd.f32 0.0, %v656
      %658 = vmatmul.bf16.gmra.mxu0 %v632
      %v659 = vpop.f32.mrf.mxu0
      %v660 = vadd.f32 0.0, %v659
      %v661 = vpop.f32.mrf.mxu0
      %v662 = vadd.f32 0.0, %v661
      %663 = vmatmul.bf16.gmra.mxu0 %v635
      %v664 = vpop.f32.mrf.mxu0
      %v665 = vadd.f32 0.0, %v664
      %v666 = vpop.f32.mrf.mxu0
      %v667 = vadd.f32 0.0, %v666
      %668 = vdwg.mxu0
      %v669 = vadd.f32 %v602, %v650
      %v670 = vadd.f32 %v603, %v652
      %v671 = vadd.f32 %v604, %v655
      %v672 = vadd.f32 %v605, %v657
      %v673 = vadd.f32 %v606, %v660
      %v674 = vadd.f32 %v607, %v662
      %v675 = vadd.f32 %v608, %v665
      %v676 = vadd.f32 %v609, %v667
      %v677 = vld [vmem:[%s610 + $0x1] sm:$0xff]
      %v678 = vld [vmem:[%s610 + $0x11] sm:$0xff]
      %v679 = vld [vmem:[%s610 + $0x21] sm:$0xff]
      %v680 = vld [vmem:[%s610 + $0x31] sm:$0xff]
      %v681 = vld [vmem:[%s610 + $0x41] sm:$0xff]
      %v682 = vld [vmem:[%s610 + $0x51] sm:$0xff]
      %v683 = vld [vmem:[%s610 + $0x61] sm:$0xff]
      %v684 = vld [vmem:[%s610 + $0x71] sm:$0xff]
      %v685 = vpack.c.bf16 %v678, %v677
      %v686 = vpack.c.bf16 %v680, %v679
      %v687 = vpack.c.bf16 %v682, %v681
      %v688 = vpack.c.bf16 %v684, %v683
      %s689 = scalar_lea.vmem %s211, 28
      %v690 = vld [vmem:[%s689] sm:$0xf]
      %v692 = vsel %vm255, %v685, 0
      %v695 = vsel %vm255, %v686, 0
      %v698 = vsel %vm255, %v687, 0
      %v701 = vsel %vm255, %v688, 0
      %v704 = vsel %vm268, %v690, 0
      %706 = vmatpush.bf16.msra.mxu0 0
      %707 = vmatpush.bf16.msra.mxu0 0
      %708 = vmatpush.bf16.msra.mxu0 0
      %709 = vmatpush.bf16.msra.mxu0 0
      %710 = vmatpush.bf16.msra.mxu0 0
      %711 = vmatpush.bf16.msra.mxu0 0
      %712 = vmatpush.bf16.msra.mxu0 0
      %713 = vmatpush.bf16.msra.mxu0 %v704
      %714 = vmatmul.bf16.gmra.mxu0 %v692
      %v715 = vpop.f32.mrf.mxu0
      %v716 = vadd.f32 0.0, %v715
      %v717 = vpop.f32.mrf.mxu0
      %v718 = vadd.f32 0.0, %v717
      %719 = vmatmul.bf16.gmra.mxu0 %v695
      %v720 = vpop.f32.mrf.mxu0
      %v721 = vadd.f32 0.0, %v720
      %v722 = vpop.f32.mrf.mxu0
      %v723 = vadd.f32 0.0, %v722
      %724 = vmatmul.bf16.gmra.mxu0 %v698
      %v725 = vpop.f32.mrf.mxu0
      %v726 = vadd.f32 0.0, %v725
      %v727 = vpop.f32.mrf.mxu0
      %v728 = vadd.f32 0.0, %v727
      %729 = vmatmul.bf16.gmra.mxu0 %v701
      %v730 = vpop.f32.mrf.mxu0
      %v731 = vadd.f32 0.0, %v730
      %v732 = vpop.f32.mrf.mxu0
      %v733 = vadd.f32 0.0, %v732
      %734 = vdwg.mxu0
      %v735 = vadd.f32 %v669, %v716
      %v736 = vadd.f32 %v670, %v718
      %v737 = vadd.f32 %v671, %v721
      %v738 = vadd.f32 %v672, %v723
      %v739 = vadd.f32 %v673, %v726
      %v740 = vadd.f32 %v674, %v728
      %v741 = vadd.f32 %v675, %v731
      %v742 = vadd.f32 %v676, %v733
      %v743 = vld [vmem:[%s610 + $0x2] sm:$0xff]
      %v744 = vld [vmem:[%s610 + $0x12] sm:$0xff]
      %v745 = vld [vmem:[%s610 + $0x22] sm:$0xff]
      %v746 = vld [vmem:[%s610 + $0x32] sm:$0xff]
      %v747 = vld [vmem:[%s610 + $0x42] sm:$0xff]
      %v748 = vld [vmem:[%s610 + $0x52] sm:$0xff]
      %v749 = vld [vmem:[%s610 + $0x62] sm:$0xff]
      %v750 = vld [vmem:[%s610 + $0x72] sm:$0xff]
      %v751 = vpack.c.bf16 %v744, %v743
      %v752 = vpack.c.bf16 %v746, %v745
      %v753 = vpack.c.bf16 %v748, %v747
      %v754 = vpack.c.bf16 %v750, %v749
      %s755 = scalar_lea.vmem %s211, 32
      %v756 = vld [vmem:[%s755] sm:$0xf]
      %v758 = vsel %vm255, %v751, 0
      %v761 = vsel %vm255, %v752, 0
      %v764 = vsel %vm255, %v753, 0
      %v767 = vsel %vm255, %v754, 0
      %v770 = vsel %vm268, %v756, 0
      %772 = vmatpush.bf16.msra.mxu0 0
      %773 = vmatpush.bf16.msra.mxu0 0
      %774 = vmatpush.bf16.msra.mxu0 0
      %775 = vmatpush.bf16.msra.mxu0 0
      %776 = vmatpush.bf16.msra.mxu0 0
      %777 = vmatpush.bf16.msra.mxu0 0
      %778 = vmatpush.bf16.msra.mxu0 0
      %779 = vmatpush.bf16.msra.mxu0 %v770
      %780 = vmatmul.bf16.gmra.mxu0 %v758
      %v781 = vpop.f32.mrf.mxu0
      %v782 = vadd.f32 0.0, %v781
      %v783 = vpop.f32.mrf.mxu0
      %v784 = vadd.f32 0.0, %v783
      %785 = vmatmul.bf16.gmra.mxu0 %v761
      %v786 = vpop.f32.mrf.mxu0
      %v787 = vadd.f32 0.0, %v786
      %v788 = vpop.f32.mrf.mxu0
      %v789 = vadd.f32 0.0, %v788
      %790 = vmatmul.bf16.gmra.mxu0 %v764
      %v791 = vpop.f32.mrf.mxu0
      %v792 = vadd.f32 0.0, %v791
      %v793 = vpop.f32.mrf.mxu0
      %v794 = vadd.f32 0.0, %v793
      %795 = vmatmul.bf16.gmra.mxu0 %v767
      %v796 = vpop.f32.mrf.mxu0
      %v797 = vadd.f32 0.0, %v796
      %v798 = vpop.f32.mrf.mxu0
      %v799 = vadd.f32 0.0, %v798
      %800 = vdwg.mxu0
      %v801 = vadd.f32 %v735, %v782
      %v802 = vadd.f32 %v736, %v784
      %v803 = vadd.f32 %v737, %v787
      %v804 = vadd.f32 %v738, %v789
      %v805 = vadd.f32 %v739, %v792
      %v806 = vadd.f32 %v740, %v794
      %v807 = vadd.f32 %v741, %v797
      %v808 = vadd.f32 %v742, %v799
      %v809 = vpack.c.bf16 %v801, %v801
      %v810 = vpack.c.bf16 %v802, %v802
      %v811 = vpack.c.bf16 %v803, %v803
      %v812 = vpack.c.bf16 %v804, %v804
      %v813 = vpack.c.bf16 %v805, %v805
      %v814 = vpack.c.bf16 %v806, %v806
      %v815 = vpack.c.bf16 %v807, %v807
      %v816 = vpack.c.bf16 %v808, %v808
      %817 = vst [vmem:[%s219] sm:$0xf] %v809
      %818 = vst [vmem:[%s219 + $0x4] sm:$0xf] %v810
      %819 = vst [vmem:[%s219 + $0x8] sm:$0xf] %v811
      %820 = vst [vmem:[%s219 + $0xc] sm:$0xf] %v812
      %821 = vst [vmem:[%s219 + $0x10] sm:$0xf] %v813
      %822 = vst [vmem:[%s219 + $0x14] sm:$0xf] %v814
      %823 = vst [vmem:[%s219 + $0x18] sm:$0xf] %v815
      %824 = vst [vmem:[%s219 + $0x1c] sm:$0xf] %v816
      %v825 = vadd.f32 %v801, %v802
      %v826 = vadd.f32 %v825, %v803
      %v827 = vadd.f32 %v826, %v804
      %v828 = vadd.f32 %v827, %v805
      %v829 = vadd.f32 %v828, %v806
      %v830 = vadd.f32 %v829, %v807
      %v831 = vadd.f32 %v830, %v808
      %v832 = vrot.slane %v831, 4
      %v833 = vadd.f32 %v831, %v832
      %v834 = vrot.slane %v833, 2
      %v835 = vadd.f32 %v833, %v834
      %v836 = vrot.slane %v835, 1
      %v837 = vadd.f32 %v835, %v836
      %v838 = vmul.f32 %v801, %v801
      %v839 = vmul.f32 %v802, %v802
      %v840 = vmul.f32 %v803, %v803
      %v841 = vmul.f32 %v804, %v804
      %v842 = vmul.f32 %v805, %v805
      %v843 = vmul.f32 %v806, %v806
      %v844 = vmul.f32 %v807, %v807
      %v845 = vmul.f32 %v808, %v808
      %v846 = vadd.f32 %v838, %v839
      %v847 = vadd.f32 %v846, %v840
      %v848 = vadd.f32 %v847, %v841
      %v849 = vadd.f32 %v848, %v842
      %v850 = vadd.f32 %v849, %v843
      %v851 = vadd.f32 %v850, %v844
      %v852 = vadd.f32 %v851, %v845
      %v853 = vrot.slane %v852, 4
      %v854 = vadd.f32 %v852, %v853
      %v855 = vrot.slane %v854, 2
      %v856 = vadd.f32 %v854, %v855
      %v857 = vrot.slane %v856, 1
      %v858 = vadd.f32 %v856, %v857
      %vm859 = vcmask 1040384
      %v860 = vsel %vm859, %v837, %v858
      %vm861 = vcmask 1041408
      %v862 = vsel %vm861, %v860, 0.0
      %863 = vst [vmem:[%s226] sm:$0xff] %v862
      %p864 = scmp.lt.s32.totalorder %s20, 1
      %s865 = scalar_select %p864, %s20, 1
      %p866 = scmp.lt.s32.totalorder %s19, 0
      %s867 = scalar_select %p866, %s19, 0
      %s868 = smul.addr %s865, 8
      %s869 = sadd.s32 %s867, %s868
      %s870 = smul.addr %s869, 4
      %s871 = scalar_lea.vmem %s2, %s870
      %p872 = scmp.lt.s32.totalorder %s20, 1
      %s873 = scalar_select %p872, %s20, 1
      %p874 = scmp.lt.s32.totalorder %s19, 0
      %s875 = scalar_select %p874, %s19, 0
      %s876 = sadd.s32 %s875, %s873
      %s877 = smul.addr %s876, 8
      %s878 = scalar_lea.vmem %s3, %s877
      // Predicated region
      $region29: #{basic_block_forward.7} parent=27 // pred_check
        %p879 = pneg %p99
      $region30: #{basic_block_forward.7} parent=27 // pred_check_branch
        %881 = sbr.rel (%p879) target = $region32
      $region31: #{basic_block_forward.7} parent=27 // pred_region
        _
      $region32: #{basic_block_forward.7} parent=27 // pred_fallthru
        _
      // Predicated region
      $region33: #{basic_block_forward.7} parent=27 // pred_check
        %p882 = pneg %p127
      $region34: #{basic_block_forward.7} parent=27 // pred_check_branch
        %884 = sbr.rel (%p882) target = $region36
      $region35: #{basic_block_forward.7} parent=27 // pred_region
        _
      $region36: #{basic_block_forward.7} parent=27 // pred_fallthru
        _
    $region28: #{basic_block_forward.7} parent=5 // pred_fallthru
      _
    %p885 = scmp.le.s32.totalorder 2, %s10
    // Predicated region
    $region37: #{basic_block_forward.7} parent=5 // pred_check
      %p886 = pneg %p885
    $region38: #{basic_block_forward.7} parent=5 // pred_check_branch
      %888 = sbr.rel (%p886) target = $region40
    $region39: #{basic_block_forward.7} parent=5 // pred_region
      %s889 = ssub.s32 %s10, 2
      // Predicated region
      $region41: #{basic_block_forward.7} parent=39 // pred_check
        %p890 = pneg %p105
      $region42: #{basic_block_forward.7} parent=39 // pred_check_branch
        %892 = sbr.rel (%p890) target = $region44
      $region43: #{basic_block_forward.7} parent=39 // pred_region
        %p893 = scmp.lt.s32.totalorder %s22, 1
        %s894 = scalar_select %p893, %s22, 1
        %p895 = scmp.lt.s32.totalorder %s21, 0
        %s896 = scalar_select %p895, %s21, 0
        %s897 = smul.addr %s894, 8
        %s898 = sadd.s32 %s896, %s897
        %s899 = smul.addr %s898, 4
        %s900 = scalar_lea.vmem %s2, %s899
      $region44: #{basic_block_forward.7} parent=39 // pred_fallthru
        _
      // Predicated region
      $region45: #{basic_block_forward.7} parent=39 // pred_check
        %p901 = pneg %p133
      $region46: #{basic_block_forward.7} parent=39 // pred_check_branch
        %903 = sbr.rel (%p901) target = $region48
      $region47: #{basic_block_forward.7} parent=39 // pred_region
        %p904 = scmp.lt.s32.totalorder %s22, 1
        %s905 = scalar_select %p904, %s22, 1
        %p906 = scmp.lt.s32.totalorder %s21, 0
        %s907 = scalar_select %p906, %s21, 0
        %s908 = sadd.s32 %s907, %s905
        %s909 = smul.addr %s908, 8
        %s910 = scalar_lea.vmem %s3, %s909
      $region48: #{basic_block_forward.7} parent=39 // pred_fallthru
        _
    $region40: #{basic_block_forward.7} parent=5 // pred_fallthru
      _
  $region6: #{basic_block_forward.7} parent=0 // loop_footer
    %s14 = sadd.s32 1, %s10
  $region7: #{basic_block_forward.7} parent=0 // loop_footer_branch
    %9 = sbr.rel target = $region3
  $region8: #{basic_block_forward.7} parent=0 // loop_exit
    _

</llo_original>
